<compile_context>
chip_gen: v7x
topology: tpu7x:2x2x1
jax: 0.10.0
libtpu: 0.0.40
codegen_flags: <defaults>
</compile_context>

<pallas_src>
import functools

import jax
import jax.numpy as jnp
from jax import lax
from jax.experimental import pallas as pl
from jax.experimental.pallas import tpu as pltpu


# ---------------------------------------------------------------------------
# Fused kernel: one grid step per branch; all L layers unrolled in-body.
# ---------------------------------------------------------------------------
def fused_gin_kernel(b2p_ref,            # (B,) int32 scalar prefetch: branch -> param set
                     x_ref,              # (N, D) branch input block
                     aw1_ref, aw2_ref,   # (S*L, D, D) bf16 AdjLearner weights (resident)
                     mw1_ref, mw2_ref,   # (S*L, D, D) bf16 MLP weights (resident)
                     bias_ref,           # (S*L, 8, D) f32 packed biases / BN params
                     out_ref,            # (N, D) branch output (layer-mean)
                     *, e: float, num_layers: int):
    b = pl.program_id(0)
    s = b2p_ref[b]                       # parameter-set index for this branch

    X = x_ref[...].astype(jnp.float32)
    acc = jnp.zeros_like(X)

    # Layer loop fully unrolled at trace time (grid carries only the branch axis).
    for l in range(num_layers):
        idx = s * num_layers + l

        bias_blk = bias_ref[idx]         # (8, D) f32
        ab1 = bias_blk[0:1, :]
        ab2 = bias_blk[1:2, :]
        mb1 = bias_blk[2:3, :]
        gamma = bias_blk[3:4, :]
        beta = bias_blk[4:5, :]
        mb2 = bias_blk[5:6, :]

        # ---- AdjLearner_intra(X, X) -> (N, N) adjacency (f32 accumulation) ----
        h = jnp.dot(X.astype(jnp.bfloat16), aw1_ref[idx],
                    preferred_element_type=jnp.float32) + ab1
        h = jnp.maximum(h, 0.0)
        h = jnp.dot(h.astype(jnp.bfloat16), aw2_ref[idx],
                    preferred_element_type=jnp.float32) + ab2
        h = jnp.maximum(h, 0.0)
        # adj = h @ h.T without materializing a transpose; keep f32 so the
        # mean-threshold binarization is not perturbed.
        adj = lax.dot_general(h, h,
                              dimension_numbers=(((1,), (1,)), ((), ())),
                              preferred_element_type=jnp.float32)   # (N, N)

        # ---- adj_onehot: strict > of the scalar mean ----
        avg = jnp.mean(adj)
        adj_bin = (adj > avg).astype(jnp.bfloat16)   # exactly 0/1 -> lossless cast

        # ---- (adj_bin + e*I) @ X  ==  adj_bin @ X + e * X ----
        agg = jnp.dot(adj_bin, X.astype(jnp.bfloat16),
                      preferred_element_type=jnp.float32) \
            + jnp.float32(e) * X                                    # (N, D)

        # ---- MLP(2, 256, 256, 256): Linear -> BatchNorm1d -> ReLU -> Linear ----
        y = jnp.dot(agg.astype(jnp.bfloat16), mw1_ref[idx],
                    preferred_element_type=jnp.float32) + mb1
        mu = jnp.mean(y, axis=0, keepdims=True)
        var = jnp.mean((y - mu) * (y - mu), axis=0, keepdims=True)  # biased var
        y = (y - mu) * lax.rsqrt(var + 1e-5) * gamma + beta
        y = jnp.maximum(y, 0.0)
        X = jnp.dot(y.astype(jnp.bfloat16), mw2_ref[idx],
                    preferred_element_type=jnp.float32) + mb2

        acc = acc + X

    out_ref[...] = acc * jnp.float32(1.0 / num_layers)


def fused_gin_branches(branch2param, x_stack, aw1, aw2, mw1, mw2, bias,
                       *, e, num_layers):
    """x_stack: (B, N, D) f32; weights (S*L, D, D) bf16; bias (S*L, 8, D) f32."""
    B, N, D = x_stack.shape
    SL = aw1.shape[0]

    x_map = lambda b, b2p: (b, 0, 0)            # per-branch input/output block
    const_map = lambda b, b2p: (0, 0, 0)        # resident (full-array) blocks

    w_spec = lambda: pl.BlockSpec((SL, D, D), const_map)
    bias_spec = pl.BlockSpec((SL, 8, D), const_map)

    kernel = functools.partial(fused_gin_kernel, e=float(e), num_layers=num_layers)
    return pl.pallas_call(
        kernel,
        out_shape=jax.ShapeDtypeStruct((B, N, D), jnp.float32),
        grid_spec=pltpu.PrefetchScalarGridSpec(
            num_scalar_prefetch=1,
            grid=(B,),
            in_specs=[pl.BlockSpec((None, N, D), x_map),
                      w_spec(), w_spec(), w_spec(), w_spec(),
                      bias_spec],
            out_specs=pl.BlockSpec((None, N, D), x_map)),
        compiler_params=pltpu.CompilerParams(
            dimension_semantics=("parallel",),
            vmem_limit_bytes=32 * 1024 * 1024),
    )(branch2param, x_stack, aw1, aw2, mw1, mw2, bias)


# ---------------------------------------------------------------------------
# Parameters. Weights stored as (in, out) so the kernel computes x @ W + b
# (matching torch's x @ W_torch.T + b). Biases/BN params carry a singleton row.
# ---------------------------------------------------------------------------
def init_branch_params(key, L, D):
    ks = jax.random.split(key, 6)
    scale = 0.05
    aw1 = scale * jax.random.normal(ks[0], (L, D, D), jnp.float32)
    ab1 = jnp.zeros((L, 1, D), jnp.float32)
    aw2 = scale * jax.random.normal(ks[1], (L, D, D), jnp.float32)
    ab2 = jnp.zeros((L, 1, D), jnp.float32)
    mw1 = scale * jax.random.normal(ks[2], (L, D, D), jnp.float32)
    mb1 = 0.01 * jax.random.normal(ks[3], (L, 1, D), jnp.float32)
    gamma = jnp.ones((L, 1, D), jnp.float32)
    beta = jnp.zeros((L, 1, D), jnp.float32)
    mw2 = scale * jax.random.normal(ks[4], (L, D, D), jnp.float32)
    mb2 = 0.01 * jax.random.normal(ks[5], (L, 1, D), jnp.float32)
    return (aw1, ab1, aw2, ab2, mw1, mb1, gamma, beta, mw2, mb2)


def stack_param_sets(param_sets):
    """Stack [params_qv, params_t, params_v] into
       - 4 weight arrays (S*L, D, D) in bf16 (aw1, aw2, mw1, mw2)
       - 1 packed bias array (S*L, 8, D) in f32 with rows
         [ab1, ab2, mb1, gamma, beta, mb2, 0, 0]."""
    cols = list(zip(*param_sets))               # 10 tuples of S arrays each

    def stack_w(i):
        s = jnp.stack(cols[i], axis=0)          # (S, L, D, D)
        S, L, D, _ = s.shape
        return s.reshape(S * L, D, D).astype(jnp.bfloat16)

    aw1, aw2, mw1, mw2 = stack_w(0), stack_w(2), stack_w(4), stack_w(8)

    bias_rows = [jnp.stack(cols[i], axis=0) for i in (1, 3, 5, 6, 7, 9)]
    bias = jnp.concatenate(bias_rows, axis=2)   # (S, L, 6, D)
    S, L, _, D = bias.shape
    pad = jnp.zeros((S, L, 2, D), jnp.float32)
    bias = jnp.concatenate([bias, pad], axis=2).reshape(S * L, 8, D)
    return aw1, aw2, mw1, mw2, bias


def gin_net_forward(QV, Q, V, A, params_qv, params_t, params_v, *, e=1.0):
    # Branch order: 0=QV, 1=Q, 2=V, 3=A.  Param sets: 0=qv, 1=t, 2=v.
    # The A branch reuses the "t" weights, exactly as in the PyTorch model.
    branch2param = jnp.array([0, 1, 2, 1], dtype=jnp.int32)
    x_stack = jnp.stack([QV, Q, V, A], axis=0)
    L = params_qv[0].shape[0]
    aw1, aw2, mw1, mw2, bias = stack_param_sets([params_qv, params_t, params_v])

    G = fused_gin_branches(branch2param, x_stack, aw1, aw2, mw1, mw2, bias,
                           e=e, num_layers=L)                    # (4, N, D)

    # Three tiny MSE reductions over 8 KiB each: plain JAX (a second pallas_call
    # is pure launch overhead at this size).
    A_ = G[3]
    loss_graph = jnp.mean((G[0] - A_) ** 2)
    loss_graph_Q = jnp.mean((G[1] - A_) ** 2)
    loss_graph_V = jnp.mean((G[2] - A_) ** 2)
    return loss_graph, loss_graph_Q, loss_graph_V


if __name__ == "__main__":
    # 8 graph nodes, hidden_size=256 (MLP(2,256,256,256) is hard-coded), 3 GIN layers.
    N, D, L = 8, 256, 3
    key = jax.random.PRNGKey(0)
    ks = jax.random.split(key, 7)
    QV = jax.random.normal(ks[0], (N, D), jnp.float32)
    Q = jax.random.normal(ks[1], (N, D), jnp.float32)
    V = jax.random.normal(ks[2], (N, D), jnp.float32)
    A = jax.random.normal(ks[3], (N, D), jnp.float32)

    params_qv = init_branch_params(ks[4], L, D)
    params_t = init_branch_params(ks[5], L, D)
    params_v = init_branch_params(ks[6], L, D)

    losses = gin_net_forward(QV, Q, V, A, params_qv, params_t, params_v, e=1.0)
    losses = jax.block_until_ready(losses)
    print("KERNEL_OK")
</pallas_src>

<mosaic_0001>
module attributes {stable_mosaic.version = 11 : i64} {
  func.func @fused_gin_kernel(%arg0: i32, %arg1: memref<4xi32, #tpu.memory_space<smem>>, %arg2: memref<1x8x256xf32, #tpu.memory_space<vmem>>, %arg3: memref<9x256x256xbf16, #tpu.memory_space<vmem>>, %arg4: memref<9x256x256xbf16, #tpu.memory_space<vmem>>, %arg5: memref<9x256x256xbf16, #tpu.memory_space<vmem>>, %arg6: memref<9x256x256xbf16, #tpu.memory_space<vmem>>, %arg7: memref<9x8x256xf32, #tpu.memory_space<vmem>>, %arg8: memref<1x8x256xf32, #tpu.memory_space<vmem>>) attributes {dimension_semantics = [#tpu.dimension_semantics<parallel>], iteration_bounds = array<i64: 4>, scalar_prefetch = 1 : i64, scratch_operands = 0 : i64, tpu.core_type = #tpu.core_type<tc>, window_params = [{transform_indices = @transform_0, window_bounds = array<i64: 1, 8, 256>}, {pipeline_mode = #tpu.pipeline_mode<synchronous>, transform_indices = @transform_1, window_bounds = array<i64: 9, 256, 256>}, {pipeline_mode = #tpu.pipeline_mode<synchronous>, transform_indices = @transform_2, window_bounds = array<i64: 9, 256, 256>}, {pipeline_mode = #tpu.pipeline_mode<synchronous>, transform_indices = @transform_3, window_bounds = array<i64: 9, 256, 256>}, {pipeline_mode = #tpu.pipeline_mode<synchronous>, transform_indices = @transform_4, window_bounds = array<i64: 9, 256, 256>}, {pipeline_mode = #tpu.pipeline_mode<synchronous>, transform_indices = @transform_5, window_bounds = array<i64: 9, 8, 256>}, {transform_indices = @transform_6, window_bounds = array<i64: 1, 8, 256>}]} {
    %0 = arith.index_cast %arg0 : i32 to index
    %1 = memref.load %arg1[%0] : memref<4xi32, #tpu.memory_space<smem>>
    %c0 = arith.constant 0 : index
    %c0_0 = arith.constant 0 : index
    %c0_1 = arith.constant 0 : index
    %2 = vector.load %arg2[%c0, %c0_0, %c0_1] : memref<1x8x256xf32, #tpu.memory_space<vmem>>, vector<1x8x256xf32>
    %3 = vector.shape_cast %2 : vector<1x8x256xf32> to vector<8x256xf32>
    %cst = arith.constant 0.000000e+00 : f32
    %4 = vector.broadcast %cst : f32 to vector<8x256xf32>
    %c3_i32 = arith.constant 3 : i32
    %5 = arith.muli %1, %c3_i32 : i32
    %c0_i32 = arith.constant 0 : i32
    %6 = arith.addi %5, %c0_i32 : i32
    %7 = arith.index_cast %6 : i32 to index
    %c0_2 = arith.constant 0 : index
    %c0_3 = arith.constant 0 : index
    %8 = vector.load %arg7[%7, %c0_2, %c0_3] : memref<9x8x256xf32, #tpu.memory_space<vmem>>, vector<1x8x256xf32>
    %9 = vector.shape_cast %8 : vector<1x8x256xf32> to vector<8x256xf32>
    %10 = vector.extract_strided_slice %9 {offsets = [0, 0], sizes = [1, 256], strides = [1, 1]} : vector<8x256xf32> to vector<1x256xf32>
    %11 = vector.extract_strided_slice %9 {offsets = [1, 0], sizes = [1, 256], strides = [1, 1]} : vector<8x256xf32> to vector<1x256xf32>
    %12 = vector.extract_strided_slice %9 {offsets = [2, 0], sizes = [1, 256], strides = [1, 1]} : vector<8x256xf32> to vector<1x256xf32>
    %13 = vector.extract_strided_slice %9 {offsets = [3, 0], sizes = [1, 256], strides = [1, 1]} : vector<8x256xf32> to vector<1x256xf32>
    %14 = vector.extract_strided_slice %9 {offsets = [4, 0], sizes = [1, 256], strides = [1, 1]} : vector<8x256xf32> to vector<1x256xf32>
    %15 = vector.extract_strided_slice %9 {offsets = [5, 0], sizes = [1, 256], strides = [1, 1]} : vector<8x256xf32> to vector<1x256xf32>
    %16 = arith.truncf %3 : vector<8x256xf32> to vector<8x256xbf16>
    %17 = arith.index_cast %6 : i32 to index
    %c0_4 = arith.constant 0 : index
    %c0_5 = arith.constant 0 : index
    %18 = vector.load %arg3[%17, %c0_4, %c0_5] : memref<9x256x256xbf16, #tpu.memory_space<vmem>>, vector<1x256x256xbf16>
    %19 = vector.shape_cast %18 : vector<1x256x256xbf16> to vector<256x256xbf16>
    %cst_6 = arith.constant dense<0.000000e+00> : vector<8x256xf32>
    %20 = tpu.matmul %16, %19, %cst_6 {dimension_numbers = #tpu.dot_dimension_numbers<[1], [0], [0], [1], [0, 0, 1, 1], [], []>} : vector<8x256xbf16>, vector<256x256xbf16>, vector<8x256xf32> -> vector<8x256xf32>
    %21 = vector.broadcast %10 : vector<1x256xf32> to vector<8x256xf32>
    %22 = arith.addf %20, %21 : vector<8x256xf32>
    %cst_7 = arith.constant 0.000000e+00 : f32
    %23 = vector.broadcast %cst_7 : f32 to vector<8x256xf32>
    %24 = arith.maximumf %22, %23 : vector<8x256xf32>
    %25 = arith.truncf %24 : vector<8x256xf32> to vector<8x256xbf16>
    %26 = arith.index_cast %6 : i32 to index
    %c0_8 = arith.constant 0 : index
    %c0_9 = arith.constant 0 : index
    %27 = vector.load %arg4[%26, %c0_8, %c0_9] : memref<9x256x256xbf16, #tpu.memory_space<vmem>>, vector<1x256x256xbf16>
    %28 = vector.shape_cast %27 : vector<1x256x256xbf16> to vector<256x256xbf16>
    %cst_10 = arith.constant dense<0.000000e+00> : vector<8x256xf32>
    %29 = tpu.matmul %25, %28, %cst_10 {dimension_numbers = #tpu.dot_dimension_numbers<[1], [0], [0], [1], [0, 0, 1, 1], [], []>} : vector<8x256xbf16>, vector<256x256xbf16>, vector<8x256xf32> -> vector<8x256xf32>
    %30 = vector.broadcast %11 : vector<1x256xf32> to vector<8x256xf32>
    %31 = arith.addf %29, %30 : vector<8x256xf32>
    %cst_11 = arith.constant 0.000000e+00 : f32
    %32 = vector.broadcast %cst_11 : f32 to vector<8x256xf32>
    %33 = arith.maximumf %31, %32 : vector<8x256xf32>
    %cst_12 = arith.constant dense<0.000000e+00> : vector<8x8xf32>
    %34 = tpu.matmul %33, %33, %cst_12 {dimension_numbers = #tpu.dot_dimension_numbers<[1], [1], [0], [0], [0, 0, 1, 0], [], []>} : vector<8x256xf32>, vector<8x256xf32>, vector<8x8xf32> -> vector<8x8xf32>
    %35 = vector.shape_cast %34 : vector<8x8xf32> to vector<1x8x8xf32>
    %cst_13 = arith.constant dense<0.000000e+00> : vector<1xf32>
    %36 = vector.multi_reduction <add>, %35, %cst_13 [1, 2] : vector<1x8x8xf32> to vector<1xf32>
    %37 = vector.shape_cast %36 : vector<1xf32> to vector<1x1x1xf32>
    %38 = vector.extract %37[0, 0, 0] : f32 from vector<1x1x1xf32>
    %cst_14 = arith.constant 6.400000e+01 : f32
    %39 = arith.divf %38, %cst_14 : f32
    %40 = vector.broadcast %39 : f32 to vector<8x8xf32>
    %41 = arith.cmpf ogt, %34, %40 : vector<8x8xf32>
    %42 = arith.extui %41 : vector<8x8xi1> to vector<8x8xi32>
    %43 = arith.sitofp %42 : vector<8x8xi32> to vector<8x8xf32>
    %44 = arith.truncf %43 : vector<8x8xf32> to vector<8x8xbf16>
    %45 = arith.truncf %3 : vector<8x256xf32> to vector<8x256xbf16>
    %cst_15 = arith.constant dense<0.000000e+00> : vector<8x256xf32>
    %46 = tpu.matmul %44, %45, %cst_15 {dimension_numbers = #tpu.dot_dimension_numbers<[1], [0], [0], [1], [0, 0, 1, 1], [], []>} : vector<8x8xbf16>, vector<8x256xbf16>, vector<8x256xf32> -> vector<8x256xf32>
    %cst_16 = arith.constant 1.000000e+00 : f32
    %47 = vector.broadcast %cst_16 : f32 to vector<8x256xf32>
    %48 = arith.mulf %47, %3 : vector<8x256xf32>
    %49 = arith.addf %46, %48 : vector<8x256xf32>
    %50 = arith.truncf %49 : vector<8x256xf32> to vector<8x256xbf16>
    %51 = arith.index_cast %6 : i32 to index
    %c0_17 = arith.constant 0 : index
    %c0_18 = arith.constant 0 : index
    %52 = vector.load %arg5[%51, %c0_17, %c0_18] : memref<9x256x256xbf16, #tpu.memory_space<vmem>>, vector<1x256x256xbf16>
    %53 = vector.shape_cast %52 : vector<1x256x256xbf16> to vector<256x256xbf16>
    %cst_19 = arith.constant dense<0.000000e+00> : vector<8x256xf32>
    %54 = tpu.matmul %50, %53, %cst_19 {dimension_numbers = #tpu.dot_dimension_numbers<[1], [0], [0], [1], [0, 0, 1, 1], [], []>} : vector<8x256xbf16>, vector<256x256xbf16>, vector<8x256xf32> -> vector<8x256xf32>
    %55 = vector.broadcast %12 : vector<1x256xf32> to vector<8x256xf32>
    %56 = arith.addf %54, %55 : vector<8x256xf32>
    %cst_20 = arith.constant dense<0.000000e+00> : vector<256xf32>
    %57 = vector.multi_reduction <add>, %56, %cst_20 [0] : vector<8x256xf32> to vector<256xf32>
    %58 = vector.shape_cast %57 : vector<256xf32> to vector<1x256xf32>
    %cst_21 = arith.constant 8.000000e+00 : f32
    %59 = vector.broadcast %cst_21 : f32 to vector<1x256xf32>
    %60 = arith.divf %58, %59 : vector<1x256xf32>
    %61 = vector.broadcast %60 : vector<1x256xf32> to vector<8x256xf32>
    %62 = arith.subf %56, %61 : vector<8x256xf32>
    %63 = vector.broadcast %60 : vector<1x256xf32> to vector<8x256xf32>
    %64 = arith.subf %56, %63 : vector<8x256xf32>
    %65 = arith.mulf %62, %64 : vector<8x256xf32>
    %cst_22 = arith.constant dense<0.000000e+00> : vector<256xf32>
    %66 = vector.multi_reduction <add>, %65, %cst_22 [0] : vector<8x256xf32> to vector<256xf32>
    %67 = vector.shape_cast %66 : vector<256xf32> to vector<1x256xf32>
    %cst_23 = arith.constant 8.000000e+00 : f32
    %68 = vector.broadcast %cst_23 : f32 to vector<1x256xf32>
    %69 = arith.divf %67, %68 : vector<1x256xf32>
    %70 = vector.broadcast %60 : vector<1x256xf32> to vector<8x256xf32>
    %71 = arith.subf %56, %70 : vector<8x256xf32>
    %cst_24 = arith.constant 9.99999974E-6 : f32
    %72 = vector.broadcast %cst_24 : f32 to vector<1x256xf32>
    %73 = arith.addf %69, %72 : vector<1x256xf32>
    %74 = math.rsqrt %73 : vector<1x256xf32>
    %75 = vector.broadcast %74 : vector<1x256xf32> to vector<8x256xf32>
    %76 = arith.mulf %71, %75 : vector<8x256xf32>
    %77 = vector.broadcast %13 : vector<1x256xf32> to vector<8x256xf32>
    %78 = arith.mulf %76, %77 : vector<8x256xf32>
    %79 = vector.broadcast %14 : vector<1x256xf32> to vector<8x256xf32>
    %80 = arith.addf %78, %79 : vector<8x256xf32>
    %cst_25 = arith.constant 0.000000e+00 : f32
    %81 = vector.broadcast %cst_25 : f32 to vector<8x256xf32>
    %82 = arith.maximumf %80, %81 : vector<8x256xf32>
    %83 = arith.truncf %82 : vector<8x256xf32> to vector<8x256xbf16>
    %84 = arith.index_cast %6 : i32 to index
    %c0_26 = arith.constant 0 : index
    %c0_27 = arith.constant 0 : index
    %85 = vector.load %arg6[%84, %c0_26, %c0_27] : memref<9x256x256xbf16, #tpu.memory_space<vmem>>, vector<1x256x256xbf16>
    %86 = vector.shape_cast %85 : vector<1x256x256xbf16> to vector<256x256xbf16>
    %cst_28 = arith.constant dense<0.000000e+00> : vector<8x256xf32>
    %87 = tpu.matmul %83, %86, %cst_28 {dimension_numbers = #tpu.dot_dimension_numbers<[1], [0], [0], [1], [0, 0, 1, 1], [], []>} : vector<8x256xbf16>, vector<256x256xbf16>, vector<8x256xf32> -> vector<8x256xf32>
    %88 = vector.broadcast %15 : vector<1x256xf32> to vector<8x256xf32>
    %89 = arith.addf %87, %88 : vector<8x256xf32>
    %90 = arith.addf %4, %89 : vector<8x256xf32>
    %c3_i32_29 = arith.constant 3 : i32
    %91 = arith.muli %1, %c3_i32_29 : i32
    %c1_i32 = arith.constant 1 : i32
    %92 = arith.addi %91, %c1_i32 : i32
    %93 = arith.index_cast %92 : i32 to index
    %c0_30 = arith.constant 0 : index
    %c0_31 = arith.constant 0 : index
    %94 = vector.load %arg7[%93, %c0_30, %c0_31] : memref<9x8x256xf32, #tpu.memory_space<vmem>>, vector<1x8x256xf32>
    %95 = vector.shape_cast %94 : vector<1x8x256xf32> to vector<8x256xf32>
    %96 = vector.extract_strided_slice %95 {offsets = [0, 0], sizes = [1, 256], strides = [1, 1]} : vector<8x256xf32> to vector<1x256xf32>
    %97 = vector.extract_strided_slice %95 {offsets = [1, 0], sizes = [1, 256], strides = [1, 1]} : vector<8x256xf32> to vector<1x256xf32>
    %98 = vector.extract_strided_slice %95 {offsets = [2, 0], sizes = [1, 256], strides = [1, 1]} : vector<8x256xf32> to vector<1x256xf32>
    %99 = vector.extract_strided_slice %95 {offsets = [3, 0], sizes = [1, 256], strides = [1, 1]} : vector<8x256xf32> to vector<1x256xf32>
    %100 = vector.extract_strided_slice %95 {offsets = [4, 0], sizes = [1, 256], strides = [1, 1]} : vector<8x256xf32> to vector<1x256xf32>
    %101 = vector.extract_strided_slice %95 {offsets = [5, 0], sizes = [1, 256], strides = [1, 1]} : vector<8x256xf32> to vector<1x256xf32>
    %102 = arith.truncf %89 : vector<8x256xf32> to vector<8x256xbf16>
    %103 = arith.index_cast %92 : i32 to index
    %c0_32 = arith.constant 0 : index
    %c0_33 = arith.constant 0 : index
    %104 = vector.load %arg3[%103, %c0_32, %c0_33] : memref<9x256x256xbf16, #tpu.memory_space<vmem>>, vector<1x256x256xbf16>
    %105 = vector.shape_cast %104 : vector<1x256x256xbf16> to vector<256x256xbf16>
    %cst_34 = arith.constant dense<0.000000e+00> : vector<8x256xf32>
    %106 = tpu.matmul %102, %105, %cst_34 {dimension_numbers = #tpu.dot_dimension_numbers<[1], [0], [0], [1], [0, 0, 1, 1], [], []>} : vector<8x256xbf16>, vector<256x256xbf16>, vector<8x256xf32> -> vector<8x256xf32>
    %107 = vector.broadcast %96 : vector<1x256xf32> to vector<8x256xf32>
    %108 = arith.addf %106, %107 : vector<8x256xf32>
    %cst_35 = arith.constant 0.000000e+00 : f32
    %109 = vector.broadcast %cst_35 : f32 to vector<8x256xf32>
    %110 = arith.maximumf %108, %109 : vector<8x256xf32>
    %111 = arith.truncf %110 : vector<8x256xf32> to vector<8x256xbf16>
    %112 = arith.index_cast %92 : i32 to index
    %c0_36 = arith.constant 0 : index
    %c0_37 = arith.constant 0 : index
    %113 = vector.load %arg4[%112, %c0_36, %c0_37] : memref<9x256x256xbf16, #tpu.memory_space<vmem>>, vector<1x256x256xbf16>
    %114 = vector.shape_cast %113 : vector<1x256x256xbf16> to vector<256x256xbf16>
    %cst_38 = arith.constant dense<0.000000e+00> : vector<8x256xf32>
    %115 = tpu.matmul %111, %114, %cst_38 {dimension_numbers = #tpu.dot_dimension_numbers<[1], [0], [0], [1], [0, 0, 1, 1], [], []>} : vector<8x256xbf16>, vector<256x256xbf16>, vector<8x256xf32> -> vector<8x256xf32>
    %116 = vector.broadcast %97 : vector<1x256xf32> to vector<8x256xf32>
    %117 = arith.addf %115, %116 : vector<8x256xf32>
    %cst_39 = arith.constant 0.000000e+00 : f32
    %118 = vector.broadcast %cst_39 : f32 to vector<8x256xf32>
    %119 = arith.maximumf %117, %118 : vector<8x256xf32>
    %cst_40 = arith.constant dense<0.000000e+00> : vector<8x8xf32>
    %120 = tpu.matmul %119, %119, %cst_40 {dimension_numbers = #tpu.dot_dimension_numbers<[1], [1], [0], [0], [0, 0, 1, 0], [], []>} : vector<8x256xf32>, vector<8x256xf32>, vector<8x8xf32> -> vector<8x8xf32>
    %121 = vector.shape_cast %120 : vector<8x8xf32> to vector<1x8x8xf32>
    %cst_41 = arith.constant dense<0.000000e+00> : vector<1xf32>
    %122 = vector.multi_reduction <add>, %121, %cst_41 [1, 2] : vector<1x8x8xf32> to vector<1xf32>
    %123 = vector.shape_cast %122 : vector<1xf32> to vector<1x1x1xf32>
    %124 = vector.extract %123[0, 0, 0] : f32 from vector<1x1x1xf32>
    %cst_42 = arith.constant 6.400000e+01 : f32
    %125 = arith.divf %124, %cst_42 : f32
    %126 = vector.broadcast %125 : f32 to vector<8x8xf32>
    %127 = arith.cmpf ogt, %120, %126 : vector<8x8xf32>
    %128 = arith.extui %127 : vector<8x8xi1> to vector<8x8xi32>
    %129 = arith.sitofp %128 : vector<8x8xi32> to vector<8x8xf32>
    %130 = arith.truncf %129 : vector<8x8xf32> to vector<8x8xbf16>
    %131 = arith.truncf %89 : vector<8x256xf32> to vector<8x256xbf16>
    %cst_43 = arith.constant dense<0.000000e+00> : vector<8x256xf32>
    %132 = tpu.matmul %130, %131, %cst_43 {dimension_numbers = #tpu.dot_dimension_numbers<[1], [0], [0], [1], [0, 0, 1, 1], [], []>} : vector<8x8xbf16>, vector<8x256xbf16>, vector<8x256xf32> -> vector<8x256xf32>
    %cst_44 = arith.constant 1.000000e+00 : f32
    %133 = vector.broadcast %cst_44 : f32 to vector<8x256xf32>
    %134 = arith.mulf %133, %89 : vector<8x256xf32>
    %135 = arith.addf %132, %134 : vector<8x256xf32>
    %136 = arith.truncf %135 : vector<8x256xf32> to vector<8x256xbf16>
    %137 = arith.index_cast %92 : i32 to index
    %c0_45 = arith.constant 0 : index
    %c0_46 = arith.constant 0 : index
    %138 = vector.load %arg5[%137, %c0_45, %c0_46] : memref<9x256x256xbf16, #tpu.memory_space<vmem>>, vector<1x256x256xbf16>
    %139 = vector.shape_cast %138 : vector<1x256x256xbf16> to vector<256x256xbf16>
    %cst_47 = arith.constant dense<0.000000e+00> : vector<8x256xf32>
    %140 = tpu.matmul %136, %139, %cst_47 {dimension_numbers = #tpu.dot_dimension_numbers<[1], [0], [0], [1], [0, 0, 1, 1], [], []>} : vector<8x256xbf16>, vector<256x256xbf16>, vector<8x256xf32> -> vector<8x256xf32>
    %141 = vector.broadcast %98 : vector<1x256xf32> to vector<8x256xf32>
    %142 = arith.addf %140, %141 : vector<8x256xf32>
    %cst_48 = arith.constant dense<0.000000e+00> : vector<256xf32>
    %143 = vector.multi_reduction <add>, %142, %cst_48 [0] : vector<8x256xf32> to vector<256xf32>
    %144 = vector.shape_cast %143 : vector<256xf32> to vector<1x256xf32>
    %cst_49 = arith.constant 8.000000e+00 : f32
    %145 = vector.broadcast %cst_49 : f32 to vector<1x256xf32>
    %146 = arith.divf %144, %145 : vector<1x256xf32>
    %147 = vector.broadcast %146 : vector<1x256xf32> to vector<8x256xf32>
    %148 = arith.subf %142, %147 : vector<8x256xf32>
    %149 = vector.broadcast %146 : vector<1x256xf32> to vector<8x256xf32>
    %150 = arith.subf %142, %149 : vector<8x256xf32>
    %151 = arith.mulf %148, %150 : vector<8x256xf32>
    %cst_50 = arith.constant dense<0.000000e+00> : vector<256xf32>
    %152 = vector.multi_reduction <add>, %151, %cst_50 [0] : vector<8x256xf32> to vector<256xf32>
    %153 = vector.shape_cast %152 : vector<256xf32> to vector<1x256xf32>
    %cst_51 = arith.constant 8.000000e+00 : f32
    %154 = vector.broadcast %cst_51 : f32 to vector<1x256xf32>
    %155 = arith.divf %153, %154 : vector<1x256xf32>
    %156 = vector.broadcast %146 : vector<1x256xf32> to vector<8x256xf32>
    %157 = arith.subf %142, %156 : vector<8x256xf32>
    %cst_52 = arith.constant 9.99999974E-6 : f32
    %158 = vector.broadcast %cst_52 : f32 to vector<1x256xf32>
    %159 = arith.addf %155, %158 : vector<1x256xf32>
    %160 = math.rsqrt %159 : vector<1x256xf32>
    %161 = vector.broadcast %160 : vector<1x256xf32> to vector<8x256xf32>
    %162 = arith.mulf %157, %161 : vector<8x256xf32>
    %163 = vector.broadcast %99 : vector<1x256xf32> to vector<8x256xf32>
    %164 = arith.mulf %162, %163 : vector<8x256xf32>
    %165 = vector.broadcast %100 : vector<1x256xf32> to vector<8x256xf32>
    %166 = arith.addf %164, %165 : vector<8x256xf32>
    %cst_53 = arith.constant 0.000000e+00 : f32
    %167 = vector.broadcast %cst_53 : f32 to vector<8x256xf32>
    %168 = arith.maximumf %166, %167 : vector<8x256xf32>
    %169 = arith.truncf %168 : vector<8x256xf32> to vector<8x256xbf16>
    %170 = arith.index_cast %92 : i32 to index
    %c0_54 = arith.constant 0 : index
    %c0_55 = arith.constant 0 : index
    %171 = vector.load %arg6[%170, %c0_54, %c0_55] : memref<9x256x256xbf16, #tpu.memory_space<vmem>>, vector<1x256x256xbf16>
    %172 = vector.shape_cast %171 : vector<1x256x256xbf16> to vector<256x256xbf16>
    %cst_56 = arith.constant dense<0.000000e+00> : vector<8x256xf32>
    %173 = tpu.matmul %169, %172, %cst_56 {dimension_numbers = #tpu.dot_dimension_numbers<[1], [0], [0], [1], [0, 0, 1, 1], [], []>} : vector<8x256xbf16>, vector<256x256xbf16>, vector<8x256xf32> -> vector<8x256xf32>
    %174 = vector.broadcast %101 : vector<1x256xf32> to vector<8x256xf32>
    %175 = arith.addf %173, %174 : vector<8x256xf32>
    %176 = arith.addf %90, %175 : vector<8x256xf32>
    %c3_i32_57 = arith.constant 3 : i32
    %177 = arith.muli %1, %c3_i32_57 : i32
    %c2_i32 = arith.constant 2 : i32
    %178 = arith.addi %177, %c2_i32 : i32
    %179 = arith.index_cast %178 : i32 to index
    %c0_58 = arith.constant 0 : index
    %c0_59 = arith.constant 0 : index
    %180 = vector.load %arg7[%179, %c0_58, %c0_59] : memref<9x8x256xf32, #tpu.memory_space<vmem>>, vector<1x8x256xf32>
    %181 = vector.shape_cast %180 : vector<1x8x256xf32> to vector<8x256xf32>
    %182 = vector.extract_strided_slice %181 {offsets = [0, 0], sizes = [1, 256], strides = [1, 1]} : vector<8x256xf32> to vector<1x256xf32>
    %183 = vector.extract_strided_slice %181 {offsets = [1, 0], sizes = [1, 256], strides = [1, 1]} : vector<8x256xf32> to vector<1x256xf32>
    %184 = vector.extract_strided_slice %181 {offsets = [2, 0], sizes = [1, 256], strides = [1, 1]} : vector<8x256xf32> to vector<1x256xf32>
    %185 = vector.extract_strided_slice %181 {offsets = [3, 0], sizes = [1, 256], strides = [1, 1]} : vector<8x256xf32> to vector<1x256xf32>
    %186 = vector.extract_strided_slice %181 {offsets = [4, 0], sizes = [1, 256], strides = [1, 1]} : vector<8x256xf32> to vector<1x256xf32>
    %187 = vector.extract_strided_slice %181 {offsets = [5, 0], sizes = [1, 256], strides = [1, 1]} : vector<8x256xf32> to vector<1x256xf32>
    %188 = arith.truncf %175 : vector<8x256xf32> to vector<8x256xbf16>
    %189 = arith.index_cast %178 : i32 to index
    %c0_60 = arith.constant 0 : index
    %c0_61 = arith.constant 0 : index
    %190 = vector.load %arg3[%189, %c0_60, %c0_61] : memref<9x256x256xbf16, #tpu.memory_space<vmem>>, vector<1x256x256xbf16>
    %191 = vector.shape_cast %190 : vector<1x256x256xbf16> to vector<256x256xbf16>
    %cst_62 = arith.constant dense<0.000000e+00> : vector<8x256xf32>
    %192 = tpu.matmul %188, %191, %cst_62 {dimension_numbers = #tpu.dot_dimension_numbers<[1], [0], [0], [1], [0, 0, 1, 1], [], []>} : vector<8x256xbf16>, vector<256x256xbf16>, vector<8x256xf32> -> vector<8x256xf32>
    %193 = vector.broadcast %182 : vector<1x256xf32> to vector<8x256xf32>
    %194 = arith.addf %192, %193 : vector<8x256xf32>
    %cst_63 = arith.constant 0.000000e+00 : f32
    %195 = vector.broadcast %cst_63 : f32 to vector<8x256xf32>
    %196 = arith.maximumf %194, %195 : vector<8x256xf32>
    %197 = arith.truncf %196 : vector<8x256xf32> to vector<8x256xbf16>
    %198 = arith.index_cast %178 : i32 to index
    %c0_64 = arith.constant 0 : index
    %c0_65 = arith.constant 0 : index
    %199 = vector.load %arg4[%198, %c0_64, %c0_65] : memref<9x256x256xbf16, #tpu.memory_space<vmem>>, vector<1x256x256xbf16>
    %200 = vector.shape_cast %199 : vector<1x256x256xbf16> to vector<256x256xbf16>
    %cst_66 = arith.constant dense<0.000000e+00> : vector<8x256xf32>
    %201 = tpu.matmul %197, %200, %cst_66 {dimension_numbers = #tpu.dot_dimension_numbers<[1], [0], [0], [1], [0, 0, 1, 1], [], []>} : vector<8x256xbf16>, vector<256x256xbf16>, vector<8x256xf32> -> vector<8x256xf32>
    %202 = vector.broadcast %183 : vector<1x256xf32> to vector<8x256xf32>
    %203 = arith.addf %201, %202 : vector<8x256xf32>
    %cst_67 = arith.constant 0.000000e+00 : f32
    %204 = vector.broadcast %cst_67 : f32 to vector<8x256xf32>
    %205 = arith.maximumf %203, %204 : vector<8x256xf32>
    %cst_68 = arith.constant dense<0.000000e+00> : vector<8x8xf32>
    %206 = tpu.matmul %205, %205, %cst_68 {dimension_numbers = #tpu.dot_dimension_numbers<[1], [1], [0], [0], [0, 0, 1, 0], [], []>} : vector<8x256xf32>, vector<8x256xf32>, vector<8x8xf32> -> vector<8x8xf32>
    %207 = vector.shape_cast %206 : vector<8x8xf32> to vector<1x8x8xf32>
    %cst_69 = arith.constant dense<0.000000e+00> : vector<1xf32>
    %208 = vector.multi_reduction <add>, %207, %cst_69 [1, 2] : vector<1x8x8xf32> to vector<1xf32>
    %209 = vector.shape_cast %208 : vector<1xf32> to vector<1x1x1xf32>
    %210 = vector.extract %209[0, 0, 0] : f32 from vector<1x1x1xf32>
    %cst_70 = arith.constant 6.400000e+01 : f32
    %211 = arith.divf %210, %cst_70 : f32
    %212 = vector.broadcast %211 : f32 to vector<8x8xf32>
    %213 = arith.cmpf ogt, %206, %212 : vector<8x8xf32>
    %214 = arith.extui %213 : vector<8x8xi1> to vector<8x8xi32>
    %215 = arith.sitofp %214 : vector<8x8xi32> to vector<8x8xf32>
    %216 = arith.truncf %215 : vector<8x8xf32> to vector<8x8xbf16>
    %217 = arith.truncf %175 : vector<8x256xf32> to vector<8x256xbf16>
    %cst_71 = arith.constant dense<0.000000e+00> : vector<8x256xf32>
    %218 = tpu.matmul %216, %217, %cst_71 {dimension_numbers = #tpu.dot_dimension_numbers<[1], [0], [0], [1], [0, 0, 1, 1], [], []>} : vector<8x8xbf16>, vector<8x256xbf16>, vector<8x256xf32> -> vector<8x256xf32>
    %cst_72 = arith.constant 1.000000e+00 : f32
    %219 = vector.broadcast %cst_72 : f32 to vector<8x256xf32>
    %220 = arith.mulf %219, %175 : vector<8x256xf32>
    %221 = arith.addf %218, %220 : vector<8x256xf32>
    %222 = arith.truncf %221 : vector<8x256xf32> to vector<8x256xbf16>
    %223 = arith.index_cast %178 : i32 to index
    %c0_73 = arith.constant 0 : index
    %c0_74 = arith.constant 0 : index
    %224 = vector.load %arg5[%223, %c0_73, %c0_74] : memref<9x256x256xbf16, #tpu.memory_space<vmem>>, vector<1x256x256xbf16>
    %225 = vector.shape_cast %224 : vector<1x256x256xbf16> to vector<256x256xbf16>
    %cst_75 = arith.constant dense<0.000000e+00> : vector<8x256xf32>
    %226 = tpu.matmul %222, %225, %cst_75 {dimension_numbers = #tpu.dot_dimension_numbers<[1], [0], [0], [1], [0, 0, 1, 1], [], []>} : vector<8x256xbf16>, vector<256x256xbf16>, vector<8x256xf32> -> vector<8x256xf32>
    %227 = vector.broadcast %184 : vector<1x256xf32> to vector<8x256xf32>
    %228 = arith.addf %226, %227 : vector<8x256xf32>
    %cst_76 = arith.constant dense<0.000000e+00> : vector<256xf32>
    %229 = vector.multi_reduction <add>, %228, %cst_76 [0] : vector<8x256xf32> to vector<256xf32>
    %230 = vector.shape_cast %229 : vector<256xf32> to vector<1x256xf32>
    %cst_77 = arith.constant 8.000000e+00 : f32
    %231 = vector.broadcast %cst_77 : f32 to vector<1x256xf32>
    %232 = arith.divf %230, %231 : vector<1x256xf32>
    %233 = vector.broadcast %232 : vector<1x256xf32> to vector<8x256xf32>
    %234 = arith.subf %228, %233 : vector<8x256xf32>
    %235 = vector.broadcast %232 : vector<1x256xf32> to vector<8x256xf32>
    %236 = arith.subf %228, %235 : vector<8x256xf32>
    %237 = arith.mulf %234, %236 : vector<8x256xf32>
    %cst_78 = arith.constant dense<0.000000e+00> : vector<256xf32>
    %238 = vector.multi_reduction <add>, %237, %cst_78 [0] : vector<8x256xf32> to vector<256xf32>
    %239 = vector.shape_cast %238 : vector<256xf32> to vector<1x256xf32>
    %cst_79 = arith.constant 8.000000e+00 : f32
    %240 = vector.broadcast %cst_79 : f32 to vector<1x256xf32>
    %241 = arith.divf %239, %240 : vector<1x256xf32>
    %242 = vector.broadcast %232 : vector<1x256xf32> to vector<8x256xf32>
    %243 = arith.subf %228, %242 : vector<8x256xf32>
    %cst_80 = arith.constant 9.99999974E-6 : f32
    %244 = vector.broadcast %cst_80 : f32 to vector<1x256xf32>
    %245 = arith.addf %241, %244 : vector<1x256xf32>
    %246 = math.rsqrt %245 : vector<1x256xf32>
    %247 = vector.broadcast %246 : vector<1x256xf32> to vector<8x256xf32>
    %248 = arith.mulf %243, %247 : vector<8x256xf32>
    %249 = vector.broadcast %185 : vector<1x256xf32> to vector<8x256xf32>
    %250 = arith.mulf %248, %249 : vector<8x256xf32>
    %251 = vector.broadcast %186 : vector<1x256xf32> to vector<8x256xf32>
    %252 = arith.addf %250, %251 : vector<8x256xf32>
    %cst_81 = arith.constant 0.000000e+00 : f32
    %253 = vector.broadcast %cst_81 : f32 to vector<8x256xf32>
    %254 = arith.maximumf %252, %253 : vector<8x256xf32>
    %255 = arith.truncf %254 : vector<8x256xf32> to vector<8x256xbf16>
    %256 = arith.index_cast %178 : i32 to index
    %c0_82 = arith.constant 0 : index
    %c0_83 = arith.constant 0 : index
    %257 = vector.load %arg6[%256, %c0_82, %c0_83] : memref<9x256x256xbf16, #tpu.memory_space<vmem>>, vector<1x256x256xbf16>
    %258 = vector.shape_cast %257 : vector<1x256x256xbf16> to vector<256x256xbf16>
    %cst_84 = arith.constant dense<0.000000e+00> : vector<8x256xf32>
    %259 = tpu.matmul %255, %258, %cst_84 {dimension_numbers = #tpu.dot_dimension_numbers<[1], [0], [0], [1], [0, 0, 1, 1], [], []>} : vector<8x256xbf16>, vector<256x256xbf16>, vector<8x256xf32> -> vector<8x256xf32>
    %260 = vector.broadcast %187 : vector<1x256xf32> to vector<8x256xf32>
    %261 = arith.addf %259, %260 : vector<8x256xf32>
    %262 = arith.addf %176, %261 : vector<8x256xf32>
    %cst_85 = arith.constant 0.333333343 : f32
    %263 = vector.broadcast %cst_85 : f32 to vector<8x256xf32>
    %264 = arith.mulf %262, %263 : vector<8x256xf32>
    %c0_86 = arith.constant 0 : index
    %c0_87 = arith.constant 0 : index
    %c0_88 = arith.constant 0 : index
    %265 = vector.load %arg8[%c0_86, %c0_87, %c0_88] : memref<1x8x256xf32, #tpu.memory_space<vmem>>, vector<1x8x256xf32>
    %266 = vector.shape_cast %265 : vector<1x8x256xf32> to vector<8x256xf32>
    %267 = vector.shape_cast %264 : vector<8x256xf32> to vector<1x8x256xf32>
    tpu.vector_store %arg8[%c0_86, %c0_87, %c0_88], %267 {strides = array<i32>} : memref<1x8x256xf32, #tpu.memory_space<vmem>>, vector<1x8x256xf32>,
    return
  }
  func.func @transform_0(%arg0: i32, %arg1: memref<4xi32, #tpu.memory_space<smem>>) -> (i32, i32, i32) {
    %c0_i32 = arith.constant 0 : i32
    %c0_i32_0 = arith.constant 0 : i32
    %c0_i32_1 = arith.constant 0 : i32
    return %arg0, %c0_i32, %c0_i32_0 : i32, i32, i32
  }
  func.func @transform_1(%arg0: i32, %arg1: memref<4xi32, #tpu.memory_space<smem>>) -> (i32, i32, i32) {
    %c0_i32 = arith.constant 0 : i32
    %c0_i32_0 = arith.constant 0 : i32
    %c0_i32_1 = arith.constant 0 : i32
    %c0_i32_2 = arith.constant 0 : i32
    return %c0_i32, %c0_i32_0, %c0_i32_1 : i32, i32, i32
  }
  func.func @transform_2(%arg0: i32, %arg1: memref<4xi32, #tpu.memory_space<smem>>) -> (i32, i32, i32) {
    %c0_i32 = arith.constant 0 : i32
    %c0_i32_0 = arith.constant 0 : i32
    %c0_i32_1 = arith.constant 0 : i32
    %c0_i32_2 = arith.constant 0 : i32
    return %c0_i32, %c0_i32_0, %c0_i32_1 : i32, i32, i32
  }
  func.func @transform_3(%arg0: i32, %arg1: memref<4xi32, #tpu.memory_space<smem>>) -> (i32, i32, i32) {
    %c0_i32 = arith.constant 0 : i32
    %c0_i32_0 = arith.constant 0 : i32
    %c0_i32_1 = arith.constant 0 : i32
    %c0_i32_2 = arith.constant 0 : i32
    return %c0_i32, %c0_i32_0, %c0_i32_1 : i32, i32, i32
  }
  func.func @transform_4(%arg0: i32, %arg1: memref<4xi32, #tpu.memory_space<smem>>) -> (i32, i32, i32) {
    %c0_i32 = arith.constant 0 : i32
    %c0_i32_0 = arith.constant 0 : i32
    %c0_i32_1 = arith.constant 0 : i32
    %c0_i32_2 = arith.constant 0 : i32
    return %c0_i32, %c0_i32_0, %c0_i32_1 : i32, i32, i32
  }
  func.func @transform_5(%arg0: i32, %arg1: memref<4xi32, #tpu.memory_space<smem>>) -> (i32, i32, i32) {
    %c0_i32 = arith.constant 0 : i32
    %c0_i32_0 = arith.constant 0 : i32
    %c0_i32_1 = arith.constant 0 : i32
    %c0_i32_2 = arith.constant 0 : i32
    return %c0_i32, %c0_i32_0, %c0_i32_1 : i32, i32, i32
  }
  func.func @transform_6(%arg0: i32, %arg1: memref<4xi32, #tpu.memory_space<smem>>) -> (i32, i32, i32) {
    %c0_i32 = arith.constant 0 : i32
    %c0_i32_0 = arith.constant 0 : i32
    %c0_i32_1 = arith.constant 0 : i32
    return %arg0, %c0_i32, %c0_i32_0 : i32, i32, i32
  }
}

</mosaic_0001>

<llo_original>
// kernel: tpu_custom_call.1
$region0: #{tpu_custom_call.1}
  #allocation0 [shape = 'u32[]', space=smem, size = 0x4, offset = 0x4, fixed_abs, tag = 'smem constant byte address 0x4 - core index']
  #allocation1 [shape = 'u32[144,128]{1,0:T(1,128)}', space=vmem, size = 0x12000, scoped, tag = 'internal scratch']
  #allocation2 [shape = 's32[1]{0}', space=sflag, size = 0x4, scoped, tag = 'scoped memory for tpu_custom_call.1']
  #allocation3 [shape = 'u8[512]{0}', space=smem, size = 0x200, scoped, tag = 'prefetched SMEM operand 0']
  %s0 = inlined_call_operand.hbm [shape: s32[4], index: 0, kind: input, shape index: {}]
  %s1 = inlined_call_operand.hbm [shape: f32[4,8,256], index: 1, kind: input, shape index: {}]
  %s2 = inlined_call_operand.hbm [shape: bf16[9,256,256], index: 2, kind: input, shape index: {}]
  %s3 = inlined_call_operand.hbm [shape: bf16[9,256,256], index: 3, kind: input, shape index: {}]
  %s4 = inlined_call_operand.hbm [shape: bf16[9,256,256], index: 4, kind: input, shape index: {}]
  %s5 = inlined_call_operand.hbm [shape: bf16[9,256,256], index: 5, kind: input, shape index: {}]
  %s6 = inlined_call_operand.hbm [shape: f32[9,8,256], index: 6, kind: input, shape index: {}]
  %s7 = inlined_call_operand.hbm [shape: f32[4,8,256], index: 7, kind: output, shape index: {}]
  %s8 = sld [smem:[#allocation0]]
  $region81: #{tpu_custom_call.1} parent=0
    _
  %s10 = ssub.s32 1, %s8
  %s11 = scalar_select 0, %s10, %s8
  %13 = dma.hbm_to_smem %s0, 16, [#allocation3], [#allocation2]
  %14 = dma.done [#allocation2], 16
  %15 = sfence
  $region1: #{tpu_custom_call.1} parent=0
    #allocation4 [shape = 'u8[16384]{0}', space=vmem, size = 0x4000, scoped, tag = 'input window, operand 1']
    #allocation5 [shape = 's32[2]{0}', space=sflag, size = 0x8, scoped, tag = 'scoped memory for tpu_custom_call.1']
    #allocation6 [shape = 's32[2]{0}', space=sflag, size = 0x8, scoped, tag = 'scoped memory for tpu_custom_call.1']
    #allocation7 [shape = 'u8[1179648]{0}', space=vmem, size = 0x120000, scoped, tag = 'input window, operand 2, single buffered']
    #allocation8 [shape = 's32[1]{0}', space=sflag, size = 0x4, scoped, tag = 'scoped memory for tpu_custom_call.1']
    #allocation9 [shape = 'u8[1179648]{0}', space=vmem, size = 0x120000, scoped, tag = 'input window, operand 3, single buffered']
    #allocation10 [shape = 'u8[1179648]{0}', space=vmem, size = 0x120000, scoped, tag = 'input window, operand 4, single buffered']
    #allocation11 [shape = 's32[1]{0}', space=sflag, size = 0x4, scoped, tag = 'scoped memory for tpu_custom_call.1']
    #allocation12 [shape = 'u8[1179648]{0}', space=vmem, size = 0x120000, scoped, tag = 'input window, operand 5, single buffered']
    #allocation13 [shape = 'u8[73728]{0}', space=vmem, size = 0x12000, scoped, tag = 'input window, operand 6, single buffered']
    #allocation14 [shape = 's32[1]{0}', space=sflag, size = 0x4, scoped, tag = 'scoped memory for tpu_custom_call.1']
    #allocation15 [shape = 'u8[16384]{0}', space=vmem, size = 0x4000, scoped, tag = 'output window, operand 0']
    %16 = vsyncpa [#allocation5], 0
    %s17 = scalar_lea.sflag [#allocation5], 1
    %18 = vsyncpa %s17, 0
    %19 = vsyncpa [#allocation8], 0
    %20 = vsyncpa [#allocation11], 0
    %21 = vsyncpa [#allocation14], 0
    %22 = vsyncpa [#allocation6], 0
    %s23 = scalar_lea.sflag [#allocation6], 1
    %24 = vsyncpa %s23, 0
    loop: start=0, step=1, limit=6
    $region2: #{tpu_custom_call.1} parent=1 // loop_pre_header
      _
    $region3: #{tpu_custom_call.1} parent=1 // loop_header
      %s26 = sphi 0, %s30
      %p27 = scmp.ge.s32.totalorder %s26, 6
      %s36 = sphi 0, %s38
      %s39 = sphi 0, %s36
      %s40 = sphi 0, %s39
      %s56 = sphi 0, %s40
      %s60 = sphi 0, %s60
      %s62 = sphi 0, %s60
      %s63 = sphi 0, %s62
      %s77 = sphi 0, %s63
      %s81 = sphi 0, %s81
      %s83 = sphi 0, %s81
      %s84 = sphi 0, %s83
      %s98 = sphi 0, %s84
      %s102 = sphi 0, %s102
      %s104 = sphi 0, %s102
      %s105 = sphi 0, %s104
      %s119 = sphi 0, %s105
      %s123 = sphi 0, %s123
      %s125 = sphi 0, %s123
      %s126 = sphi 0, %s125
      %s140 = sphi 0, %s126
      %s144 = sphi 0, %s144
      %s146 = sphi 0, %s144
      %s147 = sphi 0, %s146
      %s161 = sphi 0, %s147
      %s167 = sphi 0, %s169
      %s170 = sphi 0, %s167
      %s171 = sphi 0, %s170
      %s187 = sphi 0, %s171
    $region4: #{tpu_custom_call.1} parent=1 // loop_header_branch
      %29 = sbr.rel (%p27) target = $region8
    $region5: #{tpu_custom_call.1} parent=1 // loop_body
      %s31 = ssub.s32 %s26, 1
      %s32 = ssub.s32 %s26, 2
      %s33 = sadd.s32 %s26, 1
      %s34 = ssub.s32 %s26, %s33
      %p35 = scmp.eq.s32.totalorder %s34, 0
      %s37 = sadd.s32 %s36, 1
      %s38 = scalar_select %p35, %s36, %s37
      %p41 = pneg %p35
      %p42 = scmp.eq.s32.totalorder %s26, 3
      %p43 = por %p41, %p42
      %p44 = scmp.ne.s32.totalorder %s36, %s39
      %p45 = scmp.eq.s32.totalorder %s26, 0
      %p46 = por %p44, %p45
      %p47 = scmp.ne.s32.totalorder %s36, %s39
      %p48 = scmp.eq.s32.totalorder %s31, 3
      %p49 = por %p47, %p48
      %p50 = scmp.ne.s32.totalorder %s39, %s40
      %p51 = scmp.eq.s32.totalorder %s31, 0
      %p52 = por %p50, %p51
      %p53 = scmp.ne.s32.totalorder %s39, %s40
      %p54 = scmp.eq.s32.totalorder %s32, 3
      %p55 = por %p53, %p54
      %p57 = scmp.ne.s32.totalorder %s40, %s56
      %p58 = scmp.eq.s32.totalorder %s32, 0
      %p59 = por %p57, %p58
      %s61 = sadd.s32 %s60, 1
      %p64 = scmp.eq.s32.totalorder %s26, 3
      %p65 = scmp.ne.s32.totalorder %s60, %s62
      %p66 = scmp.eq.s32.totalorder %s26, 0
      %p67 = por %p65, %p66
      %p68 = scmp.ne.s32.totalorder %s60, %s62
      %p69 = scmp.eq.s32.totalorder %s31, 3
      %p70 = por %p68, %p69
      %p71 = scmp.ne.s32.totalorder %s62, %s63
      %p72 = scmp.eq.s32.totalorder %s31, 0
      %p73 = por %p71, %p72
      %p74 = scmp.ne.s32.totalorder %s62, %s63
      %p75 = scmp.eq.s32.totalorder %s32, 3
      %p76 = por %p74, %p75
      %p78 = scmp.ne.s32.totalorder %s63, %s77
      %p79 = scmp.eq.s32.totalorder %s32, 0
      %p80 = por %p78, %p79
      %s82 = sadd.s32 %s81, 1
      %p85 = scmp.eq.s32.totalorder %s26, 3
      %p86 = scmp.ne.s32.totalorder %s81, %s83
      %p87 = scmp.eq.s32.totalorder %s26, 0
      %p88 = por %p86, %p87
      %p89 = scmp.ne.s32.totalorder %s81, %s83
      %p90 = scmp.eq.s32.totalorder %s31, 3
      %p91 = por %p89, %p90
      %p92 = scmp.ne.s32.totalorder %s83, %s84
      %p93 = scmp.eq.s32.totalorder %s31, 0
      %p94 = por %p92, %p93
      %p95 = scmp.ne.s32.totalorder %s83, %s84
      %p96 = scmp.eq.s32.totalorder %s32, 3
      %p97 = por %p95, %p96
      %p99 = scmp.ne.s32.totalorder %s84, %s98
      %p100 = scmp.eq.s32.totalorder %s32, 0
      %p101 = por %p99, %p100
      %s103 = sadd.s32 %s102, 1
      %p106 = scmp.eq.s32.totalorder %s26, 3
      %p107 = scmp.ne.s32.totalorder %s102, %s104
      %p108 = scmp.eq.s32.totalorder %s26, 0
      %p109 = por %p107, %p108
      %p110 = scmp.ne.s32.totalorder %s102, %s104
      %p111 = scmp.eq.s32.totalorder %s31, 3
      %p112 = por %p110, %p111
      %p113 = scmp.ne.s32.totalorder %s104, %s105
      %p114 = scmp.eq.s32.totalorder %s31, 0
      %p115 = por %p113, %p114
      %p116 = scmp.ne.s32.totalorder %s104, %s105
      %p117 = scmp.eq.s32.totalorder %s32, 3
      %p118 = por %p116, %p117
      %p120 = scmp.ne.s32.totalorder %s105, %s119
      %p121 = scmp.eq.s32.totalorder %s32, 0
      %p122 = por %p120, %p121
      %s124 = sadd.s32 %s123, 1
      %p127 = scmp.eq.s32.totalorder %s26, 3
      %p128 = scmp.ne.s32.totalorder %s123, %s125
      %p129 = scmp.eq.s32.totalorder %s26, 0
      %p130 = por %p128, %p129
      %p131 = scmp.ne.s32.totalorder %s123, %s125
      %p132 = scmp.eq.s32.totalorder %s31, 3
      %p133 = por %p131, %p132
      %p134 = scmp.ne.s32.totalorder %s125, %s126
      %p135 = scmp.eq.s32.totalorder %s31, 0
      %p136 = por %p134, %p135
      %p137 = scmp.ne.s32.totalorder %s125, %s126
      %p138 = scmp.eq.s32.totalorder %s32, 3
      %p139 = por %p137, %p138
      %p141 = scmp.ne.s32.totalorder %s126, %s140
      %p142 = scmp.eq.s32.totalorder %s32, 0
      %p143 = por %p141, %p142
      %s145 = sadd.s32 %s144, 1
      %p148 = scmp.eq.s32.totalorder %s26, 3
      %p149 = scmp.ne.s32.totalorder %s144, %s146
      %p150 = scmp.eq.s32.totalorder %s26, 0
      %p151 = por %p149, %p150
      %p152 = scmp.ne.s32.totalorder %s144, %s146
      %p153 = scmp.eq.s32.totalorder %s31, 3
      %p154 = por %p152, %p153
      %p155 = scmp.ne.s32.totalorder %s146, %s147
      %p156 = scmp.eq.s32.totalorder %s31, 0
      %p157 = por %p155, %p156
      %p158 = scmp.ne.s32.totalorder %s146, %s147
      %p159 = scmp.eq.s32.totalorder %s32, 3
      %p160 = por %p158, %p159
      %p162 = scmp.ne.s32.totalorder %s147, %s161
      %p163 = scmp.eq.s32.totalorder %s32, 0
      %p164 = por %p162, %p163
      %s165 = ssub.s32 %s26, %s33
      %p166 = scmp.eq.s32.totalorder %s165, 0
      %s168 = sadd.s32 %s167, 1
      %s169 = scalar_select %p166, %s167, %s168
      %p172 = pneg %p166
      %p173 = scmp.eq.s32.totalorder %s26, 3
      %p174 = por %p172, %p173
      %p175 = scmp.ne.s32.totalorder %s167, %s170
      %p176 = scmp.eq.s32.totalorder %s26, 0
      %p177 = por %p175, %p176
      %p178 = scmp.ne.s32.totalorder %s167, %s170
      %p179 = scmp.eq.s32.totalorder %s31, 3
      %p180 = por %p178, %p179
      %p181 = scmp.ne.s32.totalorder %s170, %s171
      %p182 = scmp.eq.s32.totalorder %s31, 0
      %p183 = por %p181, %p182
      %p184 = scmp.ne.s32.totalorder %s170, %s171
      %p185 = scmp.eq.s32.totalorder %s32, 3
      %p186 = por %p184, %p185
      %p188 = scmp.ne.s32.totalorder %s171, %s187
      %p189 = scmp.eq.s32.totalorder %s32, 0
      %p190 = por %p188, %p189
      %p191 = scmp.le.s32.totalorder 1, %s26
      %p192 = scmp.lt.s32.totalorder %s26, 5
      %p193 = pnand %p191, %p192
      %p194 = pneg %p193
      // Predicated region
      $region9: #{tpu_custom_call.1} parent=5 // pred_check
        _
      $region10: #{tpu_custom_call.1} parent=5 // pred_check_branch
        %196 = sbr.rel (%p193) target = $region12
      $region11: #{tpu_custom_call.1} parent=5 // pred_region
        %s197 = ssub.s32 %s26, 1
        // Predicated region
        $region13: #{tpu_custom_call.1} parent=11 // pred_check
          %p198 = pneg %p73
        $region14: #{tpu_custom_call.1} parent=11 // pred_check_branch
          %200 = sbr.rel (%p198) target = $region16
        $region15: #{tpu_custom_call.1} parent=11 // pred_region
          %s202 = ssub.s32 36864, 36864
          %203 = vsyncadd [#allocation8], %s202
          %s204 = sshll.u32 [#allocation7], 4
          %s205 = int_to_ptr.vmem [resolvable:$true] %s204
          %210 = dma.hbm_to_vmem [thread:$0]  %s2, 36864, %s205, [#allocation8], 128, 128, 8
        $region16: #{tpu_custom_call.1} parent=11 // pred_fallthru
          _
        // Predicated region
        $region17: #{tpu_custom_call.1} parent=11 // pred_check
          %p211 = pneg %p94
        $region18: #{tpu_custom_call.1} parent=11 // pred_check_branch
          %213 = sbr.rel (%p211) target = $region20
        $region19: #{tpu_custom_call.1} parent=11 // pred_region
          %s215 = ssub.s32 36864, 36864
          %216 = vsyncadd [#allocation8], %s215
          %s217 = sshll.u32 [#allocation9], 4
          %s218 = int_to_ptr.vmem [resolvable:$true] %s217
          %223 = dma.hbm_to_vmem [thread:$0]  %s3, 36864, %s218, [#allocation8], 128, 128, 8
        $region20: #{tpu_custom_call.1} parent=11 // pred_fallthru
          _
        // Predicated region
        $region21: #{tpu_custom_call.1} parent=11 // pred_check
          %p224 = pneg %p115
        $region22: #{tpu_custom_call.1} parent=11 // pred_check_branch
          %226 = sbr.rel (%p224) target = $region24
        $region23: #{tpu_custom_call.1} parent=11 // pred_region
          %s228 = ssub.s32 36864, 36864
          %229 = vsyncadd [#allocation11], %s228
          %s230 = sshll.u32 [#allocation10], 4
          %s231 = int_to_ptr.vmem [resolvable:$true] %s230
          %236 = dma.hbm_to_vmem [thread:$0]  %s4, 36864, %s231, [#allocation11], 128, 128, 8
        $region24: #{tpu_custom_call.1} parent=11 // pred_fallthru
          _
        // Predicated region
        $region25: #{tpu_custom_call.1} parent=11 // pred_check
          %p237 = pneg %p136
        $region26: #{tpu_custom_call.1} parent=11 // pred_check_branch
          %239 = sbr.rel (%p237) target = $region28
        $region27: #{tpu_custom_call.1} parent=11 // pred_region
          %s241 = ssub.s32 36864, 36864
          %242 = vsyncadd [#allocation11], %s241
          %s243 = sshll.u32 [#allocation12], 4
          %s244 = int_to_ptr.vmem [resolvable:$true] %s243
          %249 = dma.hbm_to_vmem [thread:$0]  %s5, 36864, %s244, [#allocation11], 128, 128, 8
        $region28: #{tpu_custom_call.1} parent=11 // pred_fallthru
          _
        // Predicated region
        $region29: #{tpu_custom_call.1} parent=11 // pred_check
          %p250 = pneg %p157
        $region30: #{tpu_custom_call.1} parent=11 // pred_check_branch
          %252 = sbr.rel (%p250) target = $region32
        $region31: #{tpu_custom_call.1} parent=11 // pred_region
          %s254 = ssub.s32 2304, 2304
          %255 = vsyncadd [#allocation14], %s254
          %s256 = sshll.u32 [#allocation13], 4
          %s257 = int_to_ptr.vmem [resolvable:$true] %s256
          %262 = dma.hbm_to_vmem [thread:$0]  %s6, 2304, %s257, [#allocation14], 256, 256, 16
        $region32: #{tpu_custom_call.1} parent=11 // pred_fallthru
          _
      $region12: #{tpu_custom_call.1} parent=5 // pred_fallthru
        _
      %p263 = scmp.lt.s32.totalorder %s26, 4
      // Predicated region
      $region33: #{tpu_custom_call.1} parent=5 // pred_check
        %p264 = pneg %p263
      $region34: #{tpu_custom_call.1} parent=5 // pred_check_branch
        %266 = sbr.rel (%p264) target = $region36
      $region35: #{tpu_custom_call.1} parent=5 // pred_region
        // Predicated region
        $region37: #{tpu_custom_call.1} parent=35 // pred_check
          %p267 = pneg %p46
        $region38: #{tpu_custom_call.1} parent=35 // pred_check_branch
          %269 = sbr.rel (%p267) target = $region40
        $region39: #{tpu_custom_call.1} parent=35 // pred_region
          %s270 = sand.u32 %s36, 1
          %s271 = scalar_lea.sflag [#allocation5], %s270
          %s272 = sand.u32 %s36, 1
          %s273 = smul.addr %s272, 16
          %s274 = scalar_lea.vmem [#allocation4], %s273
          %s276 = ssub.s32 256, 256
          %277 = vsyncadd %s271, %s276
          %s278 = smul.addr %s26, 2
          %s279 = smul.addr %s278, 128
          %s280 = scalar_lea.hbm %s1, %s279
          %s282 = sshll.u32 %s274, 4
          %s283 = int_to_ptr.vmem [resolvable:$true] %s282
          %285 = dma.hbm_to_vmem [thread:$0]  %s280, 256, %s283, %s271
        $region40: #{tpu_custom_call.1} parent=35 // pred_fallthru
          _
      $region36: #{tpu_custom_call.1} parent=5 // pred_fallthru
        _
      %p286 = scmp.le.s32.totalorder 1, %s26
      %p287 = scmp.lt.s32.totalorder %s26, 5
      %p288 = pnand %p286, %p287
      %p289 = pneg %p288
      // Predicated region
      $region41: #{tpu_custom_call.1} parent=5 // pred_check
        _
      $region42: #{tpu_custom_call.1} parent=5 // pred_check_branch
        %291 = sbr.rel (%p288) target = $region44
      $region43: #{tpu_custom_call.1} parent=5 // pred_region
        %s292 = ssub.s32 %s26, 1
        %s293 = sand.u32 %s39, 1
        %s294 = scalar_lea.sflag [#allocation5], %s293
        %s295 = sand.u32 %s39, 1
        %s296 = smul.addr %s295, 16
        %s297 = scalar_lea.vmem [#allocation4], %s296
        // Predicated region
        $region45: #{tpu_custom_call.1} parent=43 // pred_check
          %p298 = pneg %p52
        $region46: #{tpu_custom_call.1} parent=43 // pred_check_branch
          %300 = sbr.rel (%p298) target = $region48
        $region47: #{tpu_custom_call.1} parent=43 // pred_region
          %301 = dma.done %s294, 256
        $region48: #{tpu_custom_call.1} parent=43 // pred_fallthru
          _
        // Predicated region
        $region49: #{tpu_custom_call.1} parent=43 // pred_check
          %p302 = pneg %p73
        $region50: #{tpu_custom_call.1} parent=43 // pred_check_branch
          %304 = sbr.rel (%p302) target = $region52
        $region51: #{tpu_custom_call.1} parent=43 // pred_region
          %305 = dma.done [#allocation8], 36864
        $region52: #{tpu_custom_call.1} parent=43 // pred_fallthru
          _
        // Predicated region
        $region53: #{tpu_custom_call.1} parent=43 // pred_check
          %p306 = pneg %p94
        $region54: #{tpu_custom_call.1} parent=43 // pred_check_branch
          %308 = sbr.rel (%p306) target = $region56
        $region55: #{tpu_custom_call.1} parent=43 // pred_region
          %309 = dma.done [#allocation8], 36864
        $region56: #{tpu_custom_call.1} parent=43 // pred_fallthru
          _
        // Predicated region
        $region57: #{tpu_custom_call.1} parent=43 // pred_check
          %p310 = pneg %p115
        $region58: #{tpu_custom_call.1} parent=43 // pred_check_branch
          %312 = sbr.rel (%p310) target = $region60
        $region59: #{tpu_custom_call.1} parent=43 // pred_region
          %313 = dma.done [#allocation11], 36864
        $region60: #{tpu_custom_call.1} parent=43 // pred_fallthru
          _
        // Predicated region
        $region61: #{tpu_custom_call.1} parent=43 // pred_check
          %p314 = pneg %p136
        $region62: #{tpu_custom_call.1} parent=43 // pred_check_branch
          %316 = sbr.rel (%p314) target = $region64
        $region63: #{tpu_custom_call.1} parent=43 // pred_region
          %317 = dma.done [#allocation11], 36864
        $region64: #{tpu_custom_call.1} parent=43 // pred_fallthru
          _
        // Predicated region
        $region65: #{tpu_custom_call.1} parent=43 // pred_check
          %p318 = pneg %p157
        $region66: #{tpu_custom_call.1} parent=43 // pred_check_branch
          %320 = sbr.rel (%p318) target = $region68
        $region67: #{tpu_custom_call.1} parent=43 // pred_region
          %321 = dma.done [#allocation14], 2304
        $region68: #{tpu_custom_call.1} parent=43 // pred_fallthru
          _
        %s322 = sand.u32 %s39, 1
        %s323 = scalar_lea.sflag [#allocation5], %s322
        %s324 = sand.u32 %s39, 1
        %s325 = smul.addr %s324, 16
        %s326 = scalar_lea.vmem [#allocation4], %s325
        %p327 = pneg %p52
        %p328 = pneg %p49
        %p329 = pneg %p73
        %p330 = pneg %p70
        %p331 = pneg %p94
        %p332 = pneg %p91
        %p333 = pneg %p115
        %p334 = pneg %p112
        %p335 = pneg %p136
        %p336 = pneg %p133
        %p337 = pneg %p157
        %p338 = pneg %p154
        %p339 = pneg %p183
        %p340 = pneg %p180
        %s341 = sand.u32 %s170, 1
        %s342 = scalar_lea.sflag [#allocation6], %s341
        %s343 = sand.u32 %s170, 1
        %s344 = smul.addr %s343, 16
        %s345 = scalar_lea.vmem [#allocation15], %s344
        %s347 = sld [smem:[#allocation3 + %s31]]
        %v348 = vld [vmem:[%s297] sm:$0xff]
        %v349 = vld [vmem:[%s297 + $0x8] sm:$0xff]
        %s350 = smul.u32 %s347, 3
        %s351 = smul.u32 %s350, 2
        %s352 = smul.addr %s351, 8
        %s353 = scalar_lea.vmem [#allocation13], %s352
        %v354 = vld [vmem:[%s353] sm:$0xff]
        %v355 = vld [vmem:[%s353 + $0x8] sm:$0xff]
        %v356 = vpack.c.bf16 %v348, %v348
        %v357 = vpack.c.bf16 %v349, %v349
        %s358 = smul.u32 %s350, 64
        %s359 = smul.addr %s358, 4
        %s360 = scalar_lea.vmem [#allocation7], %s359
        %v361 = vld [vmem:[%s360] sm:$0xff]
        %v362 = vld [vmem:[%s360 + $0x8] sm:$0xff]
        %v363 = vld [vmem:[%s360 + $0x10] sm:$0xff]
        %v364 = vld [vmem:[%s360 + $0x18] sm:$0xff]
        %v365 = vld [vmem:[%s360 + $0x20] sm:$0xff]
        %v366 = vld [vmem:[%s360 + $0x28] sm:$0xff]
        %v367 = vld [vmem:[%s360 + $0x30] sm:$0xff]
        %v368 = vld [vmem:[%s360 + $0x38] sm:$0xff]
        %v369 = vld [vmem:[%s360 + $0x40] sm:$0xff]
        %v370 = vld [vmem:[%s360 + $0x48] sm:$0xff]
        %v371 = vld [vmem:[%s360 + $0x50] sm:$0xff]
        %v372 = vld [vmem:[%s360 + $0x58] sm:$0xff]
        %v373 = vld [vmem:[%s360 + $0x60] sm:$0xff]
        %v374 = vld [vmem:[%s360 + $0x68] sm:$0xff]
        %v375 = vld [vmem:[%s360 + $0x70] sm:$0xff]
        %v376 = vld [vmem:[%s360 + $0x78] sm:$0xff]
        %v377 = vld [vmem:[%s360 + $0x80] sm:$0xff]
        %v378 = vld [vmem:[%s360 + $0x88] sm:$0xff]
        %v379 = vld [vmem:[%s360 + $0x90] sm:$0xff]
        %v380 = vld [vmem:[%s360 + $0x98] sm:$0xff]
        %v381 = vld [vmem:[%s360 + $0xa0] sm:$0xff]
        %v382 = vld [vmem:[%s360 + $0xa8] sm:$0xff]
        %v383 = vld [vmem:[%s360 + $0xb0] sm:$0xff]
        %v384 = vld [vmem:[%s360 + $0xb8] sm:$0xff]
        %v385 = vld [vmem:[%s360 + $0xc0] sm:$0xff]
        %v386 = vld [vmem:[%s360 + $0xc8] sm:$0xff]
        %v387 = vld [vmem:[%s360 + $0xd0] sm:$0xff]
        %v388 = vld [vmem:[%s360 + $0xd8] sm:$0xff]
        %v389 = vld [vmem:[%s360 + $0xe0] sm:$0xff]
        %v390 = vld [vmem:[%s360 + $0xe8] sm:$0xff]
        %v391 = vld [vmem:[%s360 + $0xf0] sm:$0xff]
        %v392 = vld [vmem:[%s360 + $0xf8] sm:$0xff]
        %v393 = vlaneseq
        %v394 = vshrl.u32 %v393, 7
        %v395 = vsub.s32 0, %v394
        %v396 = vrot.slane %v354, %v395
        %v397 = vlaneseq
        %v398 = vshrl.u32 %v397, 7
        %v399 = vsub.s32 0, %v398
        %v400 = vrot.slane %v355, %v399
        %v433 = vunpack.c.l.b16 %v361
        %v434 = vunpack.c.h.b16 %v361
        %v435 = vunpack.c.l.b16 %v362
        %v436 = vunpack.c.h.b16 %v362
        %v437 = vunpack.c.l.b16 %v363
        %v438 = vunpack.c.h.b16 %v363
        %v439 = vunpack.c.l.b16 %v364
        %v440 = vunpack.c.h.b16 %v364
        %v441 = vunpack.c.l.b16 %v365
        %v442 = vunpack.c.h.b16 %v365
        %v443 = vunpack.c.l.b16 %v366
        %v444 = vunpack.c.h.b16 %v366
        %v445 = vunpack.c.l.b16 %v367
        %v446 = vunpack.c.h.b16 %v367
        %v447 = vunpack.c.l.b16 %v368
        %v448 = vunpack.c.h.b16 %v368
        %v449 = vunpack.c.l.b16 %v369
        %v450 = vunpack.c.h.b16 %v369
        %v451 = vunpack.c.l.b16 %v370
        %v452 = vunpack.c.h.b16 %v370
        %v453 = vunpack.c.l.b16 %v371
        %v454 = vunpack.c.h.b16 %v371
        %v455 = vunpack.c.l.b16 %v372
        %v456 = vunpack.c.h.b16 %v372
        %v457 = vunpack.c.l.b16 %v373
        %v458 = vunpack.c.h.b16 %v373
        %v459 = vunpack.c.l.b16 %v374
        %v460 = vunpack.c.h.b16 %v374
        %v461 = vunpack.c.l.b16 %v375
        %v462 = vunpack.c.h.b16 %v375
        %v463 = vunpack.c.l.b16 %v376
        %v464 = vunpack.c.h.b16 %v376
        %v465 = vunpack.c.l.b16 %v377
        %v466 = vunpack.c.h.b16 %v377
        %v467 = vunpack.c.l.b16 %v378
        %v468 = vunpack.c.h.b16 %v378
        %v469 = vunpack.c.l.b16 %v379
        %v470 = vunpack.c.h.b16 %v379
        %v471 = vunpack.c.l.b16 %v380
        %v472 = vunpack.c.h.b16 %v380
        %v473 = vunpack.c.l.b16 %v381
        %v474 = vunpack.c.h.b16 %v381
        %v475 = vunpack.c.l.b16 %v382
        %v476 = vunpack.c.h.b16 %v382
        %v477 = vunpack.c.l.b16 %v383
        %v478 = vunpack.c.h.b16 %v383
        %v479 = vunpack.c.l.b16 %v384
        %v480 = vunpack.c.h.b16 %v384
        %v481 = vunpack.c.l.b16 %v385
        %v482 = vunpack.c.h.b16 %v385
        %v483 = vunpack.c.l.b16 %v386
        %v484 = vunpack.c.h.b16 %v386
        %v485 = vunpack.c.l.b16 %v387
        %v486 = vunpack.c.h.b16 %v387
        %v487 = vunpack.c.l.b16 %v388
        %v488 = vunpack.c.h.b16 %v388
        %v489 = vunpack.c.l.b16 %v389
        %v490 = vunpack.c.h.b16 %v389
        %v491 = vunpack.c.l.b16 %v390
        %v492 = vunpack.c.h.b16 %v390
        %v493 = vunpack.c.l.b16 %v391
        %v494 = vunpack.c.h.b16 %v391
        %v495 = vunpack.c.l.b16 %v392
        %v496 = vunpack.c.h.b16 %v392
        %v497 = vpack.c.b16 %v435, %v433
        %v498 = vpack.c.b16 %v436, %v434
        %v499 = vpack.c.b16 %v439, %v437
        %v500 = vpack.c.b16 %v440, %v438
        %v501 = vpack.c.b16 %v443, %v441
        %v502 = vpack.c.b16 %v444, %v442
        %v503 = vpack.c.b16 %v447, %v445
        %v504 = vpack.c.b16 %v448, %v446
        %v505 = vpack.c.b16 %v451, %v449
        %v506 = vpack.c.b16 %v452, %v450
        %v507 = vpack.c.b16 %v455, %v453
        %v508 = vpack.c.b16 %v456, %v454
        %v509 = vpack.c.b16 %v459, %v457
        %v510 = vpack.c.b16 %v460, %v458
        %v511 = vpack.c.b16 %v463, %v461
        %v512 = vpack.c.b16 %v464, %v462
        %v513 = vpack.c.b16 %v467, %v465
        %v514 = vpack.c.b16 %v468, %v466
        %v515 = vpack.c.b16 %v471, %v469
        %v516 = vpack.c.b16 %v472, %v470
        %v517 = vpack.c.b16 %v475, %v473
        %v518 = vpack.c.b16 %v476, %v474
        %v519 = vpack.c.b16 %v479, %v477
        %v520 = vpack.c.b16 %v480, %v478
        %v521 = vpack.c.b16 %v483, %v481
        %v522 = vpack.c.b16 %v484, %v482
        %v523 = vpack.c.b16 %v487, %v485
        %v524 = vpack.c.b16 %v488, %v486
        %v525 = vpack.c.b16 %v491, %v489
        %v526 = vpack.c.b16 %v492, %v490
        %v527 = vpack.c.b16 %v495, %v493
        %v528 = vpack.c.b16 %v496, %v494
        %561 = vmatprep.subr.bf16.mxu0 %v498
        %562 = vmatpush1.bf16.msra.mxu0 %v497
        %563 = vmatprep.subr.bf16.mxu0 %v500
        %564 = vmatpush1.bf16.msra.mxu0 %v499
        %565 = vmatprep.subr.bf16.mxu0 %v502
        %566 = vmatpush1.bf16.msra.mxu0 %v501
        %567 = vmatprep.subr.bf16.mxu0 %v504
        %568 = vmatpush1.bf16.msra.mxu0 %v503
        %569 = vmatprep.subr.bf16.mxu0 %v506
        %570 = vmatpush1.bf16.msra.mxu0 %v505
        %571 = vmatprep.subr.bf16.mxu0 %v508
        %572 = vmatpush1.bf16.msra.mxu0 %v507
        %573 = vmatprep.subr.bf16.mxu0 %v510
        %574 = vmatpush1.bf16.msra.mxu0 %v509
        %575 = vmatprep.subr.bf16.mxu0 %v512
        %576 = vmatpush1.bf16.msra.mxu0 %v511
        %577 = vmatprep.subr.bf16.mxu0 %v514
        %578 = vmatpush1.bf16.msra.mxu0 %v513
        %579 = vmatprep.subr.bf16.mxu0 %v516
        %580 = vmatpush1.bf16.msra.mxu0 %v515
        %581 = vmatprep.subr.bf16.mxu0 %v518
        %582 = vmatpush1.bf16.msra.mxu0 %v517
        %583 = vmatprep.subr.bf16.mxu0 %v520
        %584 = vmatpush1.bf16.msra.mxu0 %v519
        %585 = vmatprep.subr.bf16.mxu0 %v522
        %586 = vmatpush1.bf16.msra.mxu0 %v521
        %587 = vmatprep.subr.bf16.mxu0 %v524
        %588 = vmatpush1.bf16.msra.mxu0 %v523
        %589 = vmatprep.subr.bf16.mxu0 %v526
        %590 = vmatpush1.bf16.msra.mxu0 %v525
        %591 = vmatprep.subr.bf16.mxu0 %v528
        %592 = vmatpush1.bf16.msra.mxu0 %v527
        %593 = vmatprep.mubr.bf16.mxu0 %v357
        %594 = vmatmul.mubr.bf16.gmra.mrb[0].mxu0 %v356
        %v595 = vpop.f32.mrb[0].mxu0
        %v596 = vadd.f32 %v396, %v595
        %v597 = vpop.f32.mrb[0].mxu0
        %v598 = vadd.f32 %v400, %v597
        %v599 = vpop.f32.mrb[0].mxu0
        %v600 = vpop.f32.mrb[0].mxu0
        %601 = vdwg.mxu0
        %v602 = vmax.f32 %v596, 0.0
        %v603 = vmax.f32 %v598, 0.0
        %v604 = vpack.c.bf16 %v602, %v602
        %v605 = vpack.c.bf16 %v603, %v603
        %s606 = smul.addr %s358, 4
        %s607 = scalar_lea.vmem [#allocation9], %s606
        %v608 = vld [vmem:[%s607] sm:$0xff]
        %v609 = vld [vmem:[%s607 + $0x8] sm:$0xff]
        %v610 = vld [vmem:[%s607 + $0x10] sm:$0xff]
        %v611 = vld [vmem:[%s607 + $0x18] sm:$0xff]
        %v612 = vld [vmem:[%s607 + $0x20] sm:$0xff]
        %v613 = vld [vmem:[%s607 + $0x28] sm:$0xff]
        %v614 = vld [vmem:[%s607 + $0x30] sm:$0xff]
        %v615 = vld [vmem:[%s607 + $0x38] sm:$0xff]
        %v616 = vld [vmem:[%s607 + $0x40] sm:$0xff]
        %v617 = vld [vmem:[%s607 + $0x48] sm:$0xff]
        %v618 = vld [vmem:[%s607 + $0x50] sm:$0xff]
        %v619 = vld [vmem:[%s607 + $0x58] sm:$0xff]
        %v620 = vld [vmem:[%s607 + $0x60] sm:$0xff]
        %v621 = vld [vmem:[%s607 + $0x68] sm:$0xff]
        %v622 = vld [vmem:[%s607 + $0x70] sm:$0xff]
        %v623 = vld [vmem:[%s607 + $0x78] sm:$0xff]
        %v624 = vld [vmem:[%s607 + $0x80] sm:$0xff]
        %v625 = vld [vmem:[%s607 + $0x88] sm:$0xff]
        %v626 = vld [vmem:[%s607 + $0x90] sm:$0xff]
        %v627 = vld [vmem:[%s607 + $0x98] sm:$0xff]
        %v628 = vld [vmem:[%s607 + $0xa0] sm:$0xff]
        %v629 = vld [vmem:[%s607 + $0xa8] sm:$0xff]
        %v630 = vld [vmem:[%s607 + $0xb0] sm:$0xff]
        %v631 = vld [vmem:[%s607 + $0xb8] sm:$0xff]
        %v632 = vld [vmem:[%s607 + $0xc0] sm:$0xff]
        %v633 = vld [vmem:[%s607 + $0xc8] sm:$0xff]
        %v634 = vld [vmem:[%s607 + $0xd0] sm:$0xff]
        %v635 = vld [vmem:[%s607 + $0xd8] sm:$0xff]
        %v636 = vld [vmem:[%s607 + $0xe0] sm:$0xff]
        %v637 = vld [vmem:[%s607 + $0xe8] sm:$0xff]
        %v638 = vld [vmem:[%s607 + $0xf0] sm:$0xff]
        %v639 = vld [vmem:[%s607 + $0xf8] sm:$0xff]
        %v640 = vlaneseq
        %v641 = vshrl.u32 %v640, 7
        %v642 = vsub.s32 1, %v641
        %v643 = vrot.slane %v354, %v642
        %v644 = vlaneseq
        %v645 = vshrl.u32 %v644, 7
        %v646 = vsub.s32 1, %v645
        %v647 = vrot.slane %v355, %v646
        %v680 = vunpack.c.l.b16 %v608
        %v681 = vunpack.c.h.b16 %v608
        %v682 = vunpack.c.l.b16 %v609
        %v683 = vunpack.c.h.b16 %v609
        %v684 = vunpack.c.l.b16 %v610
        %v685 = vunpack.c.h.b16 %v610
        %v686 = vunpack.c.l.b16 %v611
        %v687 = vunpack.c.h.b16 %v611
        %v688 = vunpack.c.l.b16 %v612
        %v689 = vunpack.c.h.b16 %v612
        %v690 = vunpack.c.l.b16 %v613
        %v691 = vunpack.c.h.b16 %v613
        %v692 = vunpack.c.l.b16 %v614
        %v693 = vunpack.c.h.b16 %v614
        %v694 = vunpack.c.l.b16 %v615
        %v695 = vunpack.c.h.b16 %v615
        %v696 = vunpack.c.l.b16 %v616
        %v697 = vunpack.c.h.b16 %v616
        %v698 = vunpack.c.l.b16 %v617
        %v699 = vunpack.c.h.b16 %v617
        %v700 = vunpack.c.l.b16 %v618
        %v701 = vunpack.c.h.b16 %v618
        %v702 = vunpack.c.l.b16 %v619
        %v703 = vunpack.c.h.b16 %v619
        %v704 = vunpack.c.l.b16 %v620
        %v705 = vunpack.c.h.b16 %v620
        %v706 = vunpack.c.l.b16 %v621
        %v707 = vunpack.c.h.b16 %v621
        %v708 = vunpack.c.l.b16 %v622
        %v709 = vunpack.c.h.b16 %v622
        %v710 = vunpack.c.l.b16 %v623
        %v711 = vunpack.c.h.b16 %v623
        %v712 = vunpack.c.l.b16 %v624
        %v713 = vunpack.c.h.b16 %v624
        %v714 = vunpack.c.l.b16 %v625
        %v715 = vunpack.c.h.b16 %v625
        %v716 = vunpack.c.l.b16 %v626
        %v717 = vunpack.c.h.b16 %v626
        %v718 = vunpack.c.l.b16 %v627
        %v719 = vunpack.c.h.b16 %v627
        %v720 = vunpack.c.l.b16 %v628
        %v721 = vunpack.c.h.b16 %v628
        %v722 = vunpack.c.l.b16 %v629
        %v723 = vunpack.c.h.b16 %v629
        %v724 = vunpack.c.l.b16 %v630
        %v725 = vunpack.c.h.b16 %v630
        %v726 = vunpack.c.l.b16 %v631
        %v727 = vunpack.c.h.b16 %v631
        %v728 = vunpack.c.l.b16 %v632
        %v729 = vunpack.c.h.b16 %v632
        %v730 = vunpack.c.l.b16 %v633
        %v731 = vunpack.c.h.b16 %v633
        %v732 = vunpack.c.l.b16 %v634
        %v733 = vunpack.c.h.b16 %v634
        %v734 = vunpack.c.l.b16 %v635
        %v735 = vunpack.c.h.b16 %v635
        %v736 = vunpack.c.l.b16 %v636
        %v737 = vunpack.c.h.b16 %v636
        %v738 = vunpack.c.l.b16 %v637
        %v739 = vunpack.c.h.b16 %v637
        %v740 = vunpack.c.l.b16 %v638
        %v741 = vunpack.c.h.b16 %v638
        %v742 = vunpack.c.l.b16 %v639
        %v743 = vunpack.c.h.b16 %v639
        %v744 = vpack.c.b16 %v682, %v680
        %v745 = vpack.c.b16 %v683, %v681
        %v746 = vpack.c.b16 %v686, %v684
        %v747 = vpack.c.b16 %v687, %v685
        %v748 = vpack.c.b16 %v690, %v688
        %v749 = vpack.c.b16 %v691, %v689
        %v750 = vpack.c.b16 %v694, %v692
        %v751 = vpack.c.b16 %v695, %v693
        %v752 = vpack.c.b16 %v698, %v696
        %v753 = vpack.c.b16 %v699, %v697
        %v754 = vpack.c.b16 %v702, %v700
        %v755 = vpack.c.b16 %v703, %v701
        %v756 = vpack.c.b16 %v706, %v704
        %v757 = vpack.c.b16 %v707, %v705
        %v758 = vpack.c.b16 %v710, %v708
        %v759 = vpack.c.b16 %v711, %v709
        %v760 = vpack.c.b16 %v714, %v712
        %v761 = vpack.c.b16 %v715, %v713
        %v762 = vpack.c.b16 %v718, %v716
        %v763 = vpack.c.b16 %v719, %v717
        %v764 = vpack.c.b16 %v722, %v720
        %v765 = vpack.c.b16 %v723, %v721
        %v766 = vpack.c.b16 %v726, %v724
        %v767 = vpack.c.b16 %v727, %v725
        %v768 = vpack.c.b16 %v730, %v728
        %v769 = vpack.c.b16 %v731, %v729
        %v770 = vpack.c.b16 %v734, %v732
        %v771 = vpack.c.b16 %v735, %v733
        %v772 = vpack.c.b16 %v738, %v736
        %v773 = vpack.c.b16 %v739, %v737
        %v774 = vpack.c.b16 %v742, %v740
        %v775 = vpack.c.b16 %v743, %v741
        %808 = vmatprep.subr.bf16.mxu0 %v745
        %809 = vmatpush1.bf16.msra.mxu0 %v744
        %810 = vmatprep.subr.bf16.mxu0 %v747
        %811 = vmatpush1.bf16.msra.mxu0 %v746
        %812 = vmatprep.subr.bf16.mxu0 %v749
        %813 = vmatpush1.bf16.msra.mxu0 %v748
        %814 = vmatprep.subr.bf16.mxu0 %v751
        %815 = vmatpush1.bf16.msra.mxu0 %v750
        %816 = vmatprep.subr.bf16.mxu0 %v753
        %817 = vmatpush1.bf16.msra.mxu0 %v752
        %818 = vmatprep.subr.bf16.mxu0 %v755
        %819 = vmatpush1.bf16.msra.mxu0 %v754
        %820 = vmatprep.subr.bf16.mxu0 %v757
        %821 = vmatpush1.bf16.msra.mxu0 %v756
        %822 = vmatprep.subr.bf16.mxu0 %v759
        %823 = vmatpush1.bf16.msra.mxu0 %v758
        %824 = vmatprep.subr.bf16.mxu0 %v761
        %825 = vmatpush1.bf16.msra.mxu0 %v760
        %826 = vmatprep.subr.bf16.mxu0 %v763
        %827 = vmatpush1.bf16.msra.mxu0 %v762
        %828 = vmatprep.subr.bf16.mxu0 %v765
        %829 = vmatpush1.bf16.msra.mxu0 %v764
        %830 = vmatprep.subr.bf16.mxu0 %v767
        %831 = vmatpush1.bf16.msra.mxu0 %v766
        %832 = vmatprep.subr.bf16.mxu0 %v769
        %833 = vmatpush1.bf16.msra.mxu0 %v768
        %834 = vmatprep.subr.bf16.mxu0 %v771
        %835 = vmatpush1.bf16.msra.mxu0 %v770
        %836 = vmatprep.subr.bf16.mxu0 %v773
        %837 = vmatpush1.bf16.msra.mxu0 %v772
        %838 = vmatprep.subr.bf16.mxu0 %v775
        %839 = vmatpush1.bf16.msra.mxu0 %v774
        %840 = vmatprep.mubr.bf16.mxu0 %v605
        %841 = vmatmul.mubr.bf16.gmra.mrb[0].mxu0 %v604
        %v842 = vpop.f32.mrb[0].mxu0
        %v843 = vadd.f32 %v643, %v842
        %v844 = vpop.f32.mrb[0].mxu0
        %v845 = vadd.f32 %v647, %v844
        %v846 = vpop.f32.mrb[0].mxu0
        %v847 = vpop.f32.mrb[0].mxu0
        %848 = vdwg.mxu0
        %v849 = vmax.f32 %v843, 0.0
        %v850 = vmax.f32 %v845, 0.0
        %851 = vmatprep.subr.mxu0 %v850
        %852 = vmatpush1.xpose.msra.mxu0 %v849
        %853 = vmatprep.subr.mxu0 0.0
        %854 = vmatpush1.xpose.msra.mxu0 0.0
        %855 = vmatprep.subr.mxu0 0.0
        %856 = vmatpush1.xpose.msra.mxu0 0.0
        %857 = vmatprep.subr.mxu0 0.0
        %858 = vmatpush1.xpose.msra.mxu0 0.0
        %859 = vmatprep.subr.mxu0 0.0
        %860 = vmatpush1.xpose.msra.mxu0 0.0
        %861 = vmatprep.subr.mxu0 0.0
        %862 = vmatpush1.xpose.msra.mxu0 0.0
        %863 = vmatprep.subr.mxu0 0.0
        %864 = vmatpush1.xpose.msra.mxu0 0.0
        %865 = vmatprep.subr.mxu0 0.0
        %866 = vmatpush1.xpose.msra.mxu0 0.0
        %867 = vmatprep.subr.mxu0 0.0
        %868 = vmatpush1.xpose.msra.mxu0 0.0
        %869 = vmatprep.subr.mxu0 0.0
        %870 = vmatpush1.xpose.msra.mxu0 0.0
        %871 = vmatprep.subr.mxu0 0.0
        %872 = vmatpush1.xpose.msra.mxu0 0.0
        %873 = vmatprep.subr.mxu0 0.0
        %874 = vmatpush1.xpose.msra.mxu0 0.0
        %875 = vmatprep.subr.mxu0 0.0
        %876 = vmatpush1.xpose.msra.mxu0 0.0
        %877 = vmatprep.subr.mxu0 0.0
        %878 = vmatpush1.xpose.msra.mxu0 0.0
        %879 = vmatprep.subr.mxu0 0.0
        %880 = vmatpush1.xpose.msra.mxu0 0.0
        %881 = vmatprep.subr.mxu0 0.0
        %882 = vmatpush1.xpose.msra.mxu0 0.0
        %883 = vmatprep.subr.mxu0 0.0
        %884 = vmatpush1.xpose.msra.mxu0 0.0
        %885 = vmatprep.subr.mxu0 0.0
        %886 = vmatpush1.xpose.msra.mxu0 0.0
        %887 = vmatprep.subr.mxu0 0.0
        %888 = vmatpush1.xpose.msra.mxu0 0.0
        %889 = vmatprep.subr.mxu0 0.0
        %890 = vmatpush1.xpose.msra.mxu0 0.0
        %891 = vmatprep.subr.mxu0 0.0
        %892 = vmatpush1.xpose.msra.mxu0 0.0
        %893 = vmatprep.subr.mxu0 0.0
        %894 = vmatpush1.xpose.msra.mxu0 0.0
        %895 = vmatprep.subr.mxu0 0.0
        %896 = vmatpush1.xpose.msra.mxu0 0.0
        %897 = vmatprep.subr.mxu0 0.0
        %898 = vmatpush1.xpose.msra.mxu0 0.0
        %899 = vmatprep.subr.mxu0 0.0
        %900 = vmatpush1.xpose.msra.mxu0 0.0
        %901 = vmatprep.subr.mxu0 0.0
        %902 = vmatpush1.xpose.msra.mxu0 0.0
        %903 = vmatprep.subr.mxu0 0.0
        %904 = vmatpush1.xpose.msra.mxu0 0.0
        %905 = vmatprep.subr.mxu0 0.0
        %906 = vmatpush1.xpose.msra.mxu0 0.0
        %907 = vmatprep.subr.mxu0 0.0
        %908 = vmatpush1.xpose.msra.mxu0 0.0
        %909 = vmatprep.subr.mxu0 0.0
        %910 = vmatpush1.xpose.msra.mxu0 0.0
        %911 = vmatprep.subr.mxu0 0.0
        %912 = vmatpush1.xpose.msra.mxu0 0.0
        %913 = vmatprep.subr.mxu0 0.0
        %914 = vmatpush1.xpose.msra.mxu0 0.0
        %915 = vmatprep.mubr.f32.mxu0 %v850
        %916 = vmatmul.mubr.f32.gmra.mrb[0].mxu0 %v849
        %v917 = vpop.f32.mrb[0].mxu0
        %v918 = vadd.f32 0.0, %v917
        %v919 = vpop.f32.mrb[0].mxu0
        %920 = vdwg.mxu0
        %vm921 = vcmask 64512
        %v922 = vsel %vm921, %v918, 0.0
        %923 = vadd.xlane.f32.xlu0 %v922
        %v924 = vpop.xlane.xlu0 %923
        %v925 = vrot.slane %v924, 4
        %v926 = vadd.f32 %v924, %v925
        %v927 = vrot.slane %v926, 2
        %v928 = vadd.f32 %v926, %v927
        %v929 = vrot.slane %v928, 1
        %v930 = vadd.f32 %v928, %v929
        %s931 = vtos %v930
        %v932 = vrcp.pop 64.0
        %s933 = vtos %v932
        %s934 = smul.f32 %s931, %s933
        %v935 = vstv %s934
        %vm936 = vcmp.gt.f32.partialorder %v918, %v935
        %v937 = vsel %vm936, 1, 0
        %v938 = vcvt.s32.f32 %v937
        %v939 = vpack.c.bf16 %v938, %v938
        %v941 = vsel %vm921, %v939, 0
        %vm943 = vcmask 1043456
        %v945 = vsel %vm943, %v356, 0
        %v948 = vsel %vm943, %v357, 0
        %950 = vmatprep.subr.bf16.mxu0 %v948
        %951 = vmatpush1.bf16.msra.mxu0 %v945
        %952 = vmatprep.subr.bf16.mxu0 0
        %953 = vmatpush1.bf16.msra.mxu0 0
        %954 = vmatprep.subr.bf16.mxu0 0
        %955 = vmatpush1.bf16.msra.mxu0 0
        %956 = vmatprep.subr.bf16.mxu0 0
        %957 = vmatpush1.bf16.msra.mxu0 0
        %958 = vmatprep.subr.bf16.mxu0 0
        %959 = vmatpush1.bf16.msra.mxu0 0
        %960 = vmatprep.subr.bf16.mxu0 0
        %961 = vmatpush1.bf16.msra.mxu0 0
        %962 = vmatprep.subr.bf16.mxu0 0
        %963 = vmatpush1.bf16.msra.mxu0 0
        %964 = vmatprep.subr.bf16.mxu0 0
        %965 = vmatpush1.bf16.msra.mxu0 0
        %966 = vmatprep.subr.bf16.mxu0 0
        %967 = vmatpush1.bf16.msra.mxu0 0
        %968 = vmatprep.subr.bf16.mxu0 0
        %969 = vmatpush1.bf16.msra.mxu0 0
        %970 = vmatprep.subr.bf16.mxu0 0
        %971 = vmatpush1.bf16.msra.mxu0 0
        %972 = vmatprep.subr.bf16.mxu0 0
        %973 = vmatpush1.bf16.msra.mxu0 0
        %974 = vmatprep.subr.bf16.mxu0 0
        %975 = vmatpush1.bf16.msra.mxu0 0
        %976 = vmatprep.subr.bf16.mxu0 0
        %977 = vmatpush1.bf16.msra.mxu0 0
        %978 = vmatprep.subr.bf16.mxu0 0
        %979 = vmatpush1.bf16.msra.mxu0 0
        %980 = vmatprep.subr.bf16.mxu0 0
        %981 = vmatpush1.bf16.msra.mxu0 0
        %982 = vmatprep.mubr.bf16.mxu0 0
        %983 = vmatmul.mubr.bf16.gmra.mrb[0].mxu0 %v941
        %v984 = vpop.f32.mrb[0].mxu0
        %v985 = vadd.f32 %v348, %v984
        %v986 = vpop.f32.mrb[0].mxu0
        %v987 = vadd.f32 %v349, %v986
        %v988 = vpop.f32.mrb[0].mxu0
        %v989 = vpop.f32.mrb[0].mxu0
        %990 = vdwg.mxu0
        %v991 = vpack.c.bf16 %v985, %v985
        %v992 = vpack.c.bf16 %v987, %v987
        %s993 = smul.addr %s358, 4
        %s994 = scalar_lea.vmem [#allocation10], %s993
        %v995 = vld [vmem:[%s994] sm:$0xff]
        %v996 = vld [vmem:[%s994 + $0x8] sm:$0xff]
        %v997 = vld [vmem:[%s994 + $0x10] sm:$0xff]
        %v998 = vld [vmem:[%s994 + $0x18] sm:$0xff]
        %v999 = vld [vmem:[%s994 + $0x20] sm:$0xff]
        %v1000 = vld [vmem:[%s994 + $0x28] sm:$0xff]
        %v1001 = vld [vmem:[%s994 + $0x30] sm:$0xff]
        %v1002 = vld [vmem:[%s994 + $0x38] sm:$0xff]
        %v1003 = vld [vmem:[%s994 + $0x40] sm:$0xff]
        %v1004 = vld [vmem:[%s994 + $0x48] sm:$0xff]
        %v1005 = vld [vmem:[%s994 + $0x50] sm:$0xff]
        %v1006 = vld [vmem:[%s994 + $0x58] sm:$0xff]
        %v1007 = vld [vmem:[%s994 + $0x60] sm:$0xff]
        %v1008 = vld [vmem:[%s994 + $0x68] sm:$0xff]
        %v1009 = vld [vmem:[%s994 + $0x70] sm:$0xff]
        %v1010 = vld [vmem:[%s994 + $0x78] sm:$0xff]
        %v1011 = vld [vmem:[%s994 + $0x80] sm:$0xff]
        %v1012 = vld [vmem:[%s994 + $0x88] sm:$0xff]
        %v1013 = vld [vmem:[%s994 + $0x90] sm:$0xff]
        %v1014 = vld [vmem:[%s994 + $0x98] sm:$0xff]
        %v1015 = vld [vmem:[%s994 + $0xa0] sm:$0xff]
        %v1016 = vld [vmem:[%s994 + $0xa8] sm:$0xff]
        %v1017 = vld [vmem:[%s994 + $0xb0] sm:$0xff]
        %v1018 = vld [vmem:[%s994 + $0xb8] sm:$0xff]
        %v1019 = vld [vmem:[%s994 + $0xc0] sm:$0xff]
        %v1020 = vld [vmem:[%s994 + $0xc8] sm:$0xff]
        %v1021 = vld [vmem:[%s994 + $0xd0] sm:$0xff]
        %v1022 = vld [vmem:[%s994 + $0xd8] sm:$0xff]
        %v1023 = vld [vmem:[%s994 + $0xe0] sm:$0xff]
        %v1024 = vld [vmem:[%s994 + $0xe8] sm:$0xff]
        %v1025 = vld [vmem:[%s994 + $0xf0] sm:$0xff]
        %v1026 = vld [vmem:[%s994 + $0xf8] sm:$0xff]
        %v1027 = vlaneseq
        %v1028 = vshrl.u32 %v1027, 7
        %v1029 = vsub.s32 2, %v1028
        %v1030 = vrot.slane %v354, %v1029
        %v1031 = vlaneseq
        %v1032 = vshrl.u32 %v1031, 7
        %v1033 = vsub.s32 2, %v1032
        %v1034 = vrot.slane %v355, %v1033
        %v1067 = vunpack.c.l.b16 %v995
        %v1068 = vunpack.c.h.b16 %v995
        %v1069 = vunpack.c.l.b16 %v996
        %v1070 = vunpack.c.h.b16 %v996
        %v1071 = vunpack.c.l.b16 %v997
        %v1072 = vunpack.c.h.b16 %v997
        %v1073 = vunpack.c.l.b16 %v998
        %v1074 = vunpack.c.h.b16 %v998
        %v1075 = vunpack.c.l.b16 %v999
        %v1076 = vunpack.c.h.b16 %v999
        %v1077 = vunpack.c.l.b16 %v1000
        %v1078 = vunpack.c.h.b16 %v1000
        %v1079 = vunpack.c.l.b16 %v1001
        %v1080 = vunpack.c.h.b16 %v1001
        %v1081 = vunpack.c.l.b16 %v1002
        %v1082 = vunpack.c.h.b16 %v1002
        %v1083 = vunpack.c.l.b16 %v1003
        %v1084 = vunpack.c.h.b16 %v1003
        %v1085 = vunpack.c.l.b16 %v1004
        %v1086 = vunpack.c.h.b16 %v1004
        %v1087 = vunpack.c.l.b16 %v1005
        %v1088 = vunpack.c.h.b16 %v1005
        %v1089 = vunpack.c.l.b16 %v1006
        %v1090 = vunpack.c.h.b16 %v1006
        %v1091 = vunpack.c.l.b16 %v1007
        %v1092 = vunpack.c.h.b16 %v1007
        %v1093 = vunpack.c.l.b16 %v1008
        %v1094 = vunpack.c.h.b16 %v1008
        %v1095 = vunpack.c.l.b16 %v1009
        %v1096 = vunpack.c.h.b16 %v1009
        %v1097 = vunpack.c.l.b16 %v1010
        %v1098 = vunpack.c.h.b16 %v1010
        %v1099 = vunpack.c.l.b16 %v1011
        %v1100 = vunpack.c.h.b16 %v1011
        %v1101 = vunpack.c.l.b16 %v1012
        %v1102 = vunpack.c.h.b16 %v1012
        %v1103 = vunpack.c.l.b16 %v1013
        %v1104 = vunpack.c.h.b16 %v1013
        %v1105 = vunpack.c.l.b16 %v1014
        %v1106 = vunpack.c.h.b16 %v1014
        %v1107 = vunpack.c.l.b16 %v1015
        %v1108 = vunpack.c.h.b16 %v1015
        %v1109 = vunpack.c.l.b16 %v1016
        %v1110 = vunpack.c.h.b16 %v1016
        %v1111 = vunpack.c.l.b16 %v1017
        %v1112 = vunpack.c.h.b16 %v1017
        %v1113 = vunpack.c.l.b16 %v1018
        %v1114 = vunpack.c.h.b16 %v1018
        %v1115 = vunpack.c.l.b16 %v1019
        %v1116 = vunpack.c.h.b16 %v1019
        %v1117 = vunpack.c.l.b16 %v1020
        %v1118 = vunpack.c.h.b16 %v1020
        %v1119 = vunpack.c.l.b16 %v1021
        %v1120 = vunpack.c.h.b16 %v1021
        %v1121 = vunpack.c.l.b16 %v1022
        %v1122 = vunpack.c.h.b16 %v1022
        %v1123 = vunpack.c.l.b16 %v1023
        %v1124 = vunpack.c.h.b16 %v1023
        %v1125 = vunpack.c.l.b16 %v1024
        %v1126 = vunpack.c.h.b16 %v1024
        %v1127 = vunpack.c.l.b16 %v1025
        %v1128 = vunpack.c.h.b16 %v1025
        %v1129 = vunpack.c.l.b16 %v1026
        %v1130 = vunpack.c.h.b16 %v1026
        %v1131 = vpack.c.b16 %v1069, %v1067
        %v1132 = vpack.c.b16 %v1070, %v1068
        %v1133 = vpack.c.b16 %v1073, %v1071
        %v1134 = vpack.c.b16 %v1074, %v1072
        %v1135 = vpack.c.b16 %v1077, %v1075
        %v1136 = vpack.c.b16 %v1078, %v1076
        %v1137 = vpack.c.b16 %v1081, %v1079
        %v1138 = vpack.c.b16 %v1082, %v1080
        %v1139 = vpack.c.b16 %v1085, %v1083
        %v1140 = vpack.c.b16 %v1086, %v1084
        %v1141 = vpack.c.b16 %v1089, %v1087
        %v1142 = vpack.c.b16 %v1090, %v1088
        %v1143 = vpack.c.b16 %v1093, %v1091
        %v1144 = vpack.c.b16 %v1094, %v1092
        %v1145 = vpack.c.b16 %v1097, %v1095
        %v1146 = vpack.c.b16 %v1098, %v1096
        %v1147 = vpack.c.b16 %v1101, %v1099
        %v1148 = vpack.c.b16 %v1102, %v1100
        %v1149 = vpack.c.b16 %v1105, %v1103
        %v1150 = vpack.c.b16 %v1106, %v1104
        %v1151 = vpack.c.b16 %v1109, %v1107
        %v1152 = vpack.c.b16 %v1110, %v1108
        %v1153 = vpack.c.b16 %v1113, %v1111
        %v1154 = vpack.c.b16 %v1114, %v1112
        %v1155 = vpack.c.b16 %v1117, %v1115
        %v1156 = vpack.c.b16 %v1118, %v1116
        %v1157 = vpack.c.b16 %v1121, %v1119
        %v1158 = vpack.c.b16 %v1122, %v1120
        %v1159 = vpack.c.b16 %v1125, %v1123
        %v1160 = vpack.c.b16 %v1126, %v1124
        %v1161 = vpack.c.b16 %v1129, %v1127
        %v1162 = vpack.c.b16 %v1130, %v1128
        %1195 = vmatprep.subr.bf16.mxu0 %v1132
        %1196 = vmatpush1.bf16.msra.mxu0 %v1131
        %1197 = vmatprep.subr.bf16.mxu0 %v1134
        %1198 = vmatpush1.bf16.msra.mxu0 %v1133
        %1199 = vmatprep.subr.bf16.mxu0 %v1136
        %1200 = vmatpush1.bf16.msra.mxu0 %v1135
        %1201 = vmatprep.subr.bf16.mxu0 %v1138
        %1202 = vmatpush1.bf16.msra.mxu0 %v1137
        %1203 = vmatprep.subr.bf16.mxu0 %v1140
        %1204 = vmatpush1.bf16.msra.mxu0 %v1139
        %1205 = vmatprep.subr.bf16.mxu0 %v1142
        %1206 = vmatpush1.bf16.msra.mxu0 %v1141
        %1207 = vmatprep.subr.bf16.mxu0 %v1144
        %1208 = vmatpush1.bf16.msra.mxu0 %v1143
        %1209 = vmatprep.subr.bf16.mxu0 %v1146
        %1210 = vmatpush1.bf16.msra.mxu0 %v1145
        %1211 = vmatprep.subr.bf16.mxu0 %v1148
        %1212 = vmatpush1.bf16.msra.mxu0 %v1147
        %1213 = vmatprep.subr.bf16.mxu0 %v1150
        %1214 = vmatpush1.bf16.msra.mxu0 %v1149
        %1215 = vmatprep.subr.bf16.mxu0 %v1152
        %1216 = vmatpush1.bf16.msra.mxu0 %v1151
        %1217 = vmatprep.subr.bf16.mxu0 %v1154
        %1218 = vmatpush1.bf16.msra.mxu0 %v1153
        %1219 = vmatprep.subr.bf16.mxu0 %v1156
        %1220 = vmatpush1.bf16.msra.mxu0 %v1155
        %1221 = vmatprep.subr.bf16.mxu0 %v1158
        %1222 = vmatpush1.bf16.msra.mxu0 %v1157
        %1223 = vmatprep.subr.bf16.mxu0 %v1160
        %1224 = vmatpush1.bf16.msra.mxu0 %v1159
        %1225 = vmatprep.subr.bf16.mxu0 %v1162
        %1226 = vmatpush1.bf16.msra.mxu0 %v1161
        %1227 = vmatprep.mubr.bf16.mxu0 %v992
        %1228 = vmatmul.mubr.bf16.gmra.mrb[0].mxu0 %v991
        %v1229 = vpop.f32.mrb[0].mxu0
        %v1230 = vadd.f32 %v1030, %v1229
        %v1231 = vpop.f32.mrb[0].mxu0
        %v1232 = vadd.f32 %v1034, %v1231
        %v1233 = vpop.f32.mrb[0].mxu0
        %v1234 = vpop.f32.mrb[0].mxu0
        %1235 = vdwg.mxu0
        %v1236 = vrot.slane %v1230, 4
        %v1237 = vadd.f32 %v1230, %v1236
        %v1238 = vrot.slane %v1237, 2
        %v1239 = vadd.f32 %v1237, %v1238
        %v1240 = vrot.slane %v1239, 1
        %v1241 = vadd.f32 %v1239, %v1240
        %v1242 = vrot.slane %v1232, 4
        %v1243 = vadd.f32 %v1232, %v1242
        %v1244 = vrot.slane %v1243, 2
        %v1245 = vadd.f32 %v1243, %v1244
        %v1246 = vrot.slane %v1245, 1
        %v1247 = vadd.f32 %v1245, %v1246
        %v1248 = vrcp.pop 8.0
        %v1249 = vmul.f32 %v1241, %v1248
        %v1250 = vmul.f32 %v1247, %v1248
        %v1251 = vsub.f32 %v1230, %v1249
        %v1252 = vsub.f32 %v1232, %v1250
        %v1253 = vmul.f32 %v1251, %v1251
        %v1254 = vmul.f32 %v1252, %v1252
        %v1255 = vrot.slane %v1253, 4
        %v1256 = vadd.f32 %v1253, %v1255
        %v1257 = vrot.slane %v1256, 2
        %v1258 = vadd.f32 %v1256, %v1257
        %v1259 = vrot.slane %v1258, 1
        %v1260 = vadd.f32 %v1258, %v1259
        %v1261 = vrot.slane %v1254, 4
        %v1262 = vadd.f32 %v1254, %v1261
        %v1263 = vrot.slane %v1262, 2
        %v1264 = vadd.f32 %v1262, %v1263
        %v1265 = vrot.slane %v1264, 1
        %v1266 = vadd.f32 %v1264, %v1265
        %v1267 = vmul.f32 %v1260, %v1248
        %v1268 = vmul.f32 %v1266, %v1248
        %v1269 = vadd.f32 %v1267, 1e-05
        %v1270 = vadd.f32 %v1268, 1e-05
        %v1271 = vrsqrt.pop %v1269
        %v1272 = vrsqrt.pop %v1270
        %v1273 = vmul.f32 %v1251, %v1271
        %v1274 = vmul.f32 %v1252, %v1272
        %v1275 = vlaneseq
        %v1276 = vshrl.u32 %v1275, 7
        %v1277 = vsub.s32 3, %v1276
        %v1278 = vrot.slane %v354, %v1277
        %v1279 = vlaneseq
        %v1280 = vshrl.u32 %v1279, 7
        %v1281 = vsub.s32 3, %v1280
        %v1282 = vrot.slane %v355, %v1281
        %v1283 = vmul.f32 %v1273, %v1278
        %v1284 = vmul.f32 %v1274, %v1282
        %v1285 = vlaneseq
        %v1286 = vshrl.u32 %v1285, 7
        %v1287 = vsub.s32 4, %v1286
        %v1288 = vrot.slane %v354, %v1287
        %v1289 = vlaneseq
        %v1290 = vshrl.u32 %v1289, 7
        %v1291 = vsub.s32 4, %v1290
        %v1292 = vrot.slane %v355, %v1291
        %v1293 = vadd.f32 %v1283, %v1288
        %v1294 = vadd.f32 %v1284, %v1292
        %v1295 = vmax.f32 %v1293, 0.0
        %v1296 = vmax.f32 %v1294, 0.0
        %v1297 = vpack.c.bf16 %v1295, %v1295
        %v1298 = vpack.c.bf16 %v1296, %v1296
        %s1299 = smul.addr %s358, 4
        %s1300 = scalar_lea.vmem [#allocation12], %s1299
        %v1301 = vld [vmem:[%s1300] sm:$0xff]
        %v1302 = vld [vmem:[%s1300 + $0x8] sm:$0xff]
        %v1303 = vld [vmem:[%s1300 + $0x10] sm:$0xff]
        %v1304 = vld [vmem:[%s1300 + $0x18] sm:$0xff]
        %v1305 = vld [vmem:[%s1300 + $0x20] sm:$0xff]
        %v1306 = vld [vmem:[%s1300 + $0x28] sm:$0xff]
        %v1307 = vld [vmem:[%s1300 + $0x30] sm:$0xff]
        %v1308 = vld [vmem:[%s1300 + $0x38] sm:$0xff]
        %v1309 = vld [vmem:[%s1300 + $0x40] sm:$0xff]
        %v1310 = vld [vmem:[%s1300 + $0x48] sm:$0xff]
        %v1311 = vld [vmem:[%s1300 + $0x50] sm:$0xff]
        %v1312 = vld [vmem:[%s1300 + $0x58] sm:$0xff]
        %v1313 = vld [vmem:[%s1300 + $0x60] sm:$0xff]
        %v1314 = vld [vmem:[%s1300 + $0x68] sm:$0xff]
        %v1315 = vld [vmem:[%s1300 + $0x70] sm:$0xff]
        %v1316 = vld [vmem:[%s1300 + $0x78] sm:$0xff]
        %v1317 = vld [vmem:[%s1300 + $0x80] sm:$0xff]
        %v1318 = vld [vmem:[%s1300 + $0x88] sm:$0xff]
        %v1319 = vld [vmem:[%s1300 + $0x90] sm:$0xff]
        %v1320 = vld [vmem:[%s1300 + $0x98] sm:$0xff]
        %v1321 = vld [vmem:[%s1300 + $0xa0] sm:$0xff]
        %v1322 = vld [vmem:[%s1300 + $0xa8] sm:$0xff]
        %v1323 = vld [vmem:[%s1300 + $0xb0] sm:$0xff]
        %v1324 = vld [vmem:[%s1300 + $0xb8] sm:$0xff]
        %v1325 = vld [vmem:[%s1300 + $0xc0] sm:$0xff]
        %v1326 = vld [vmem:[%s1300 + $0xc8] sm:$0xff]
        %v1327 = vld [vmem:[%s1300 + $0xd0] sm:$0xff]
        %v1328 = vld [vmem:[%s1300 + $0xd8] sm:$0xff]
        %v1329 = vld [vmem:[%s1300 + $0xe0] sm:$0xff]
        %v1330 = vld [vmem:[%s1300 + $0xe8] sm:$0xff]
        %v1331 = vld [vmem:[%s1300 + $0xf0] sm:$0xff]
        %v1332 = vld [vmem:[%s1300 + $0xf8] sm:$0xff]
        %v1333 = vlaneseq
        %v1334 = vshrl.u32 %v1333, 7
        %v1335 = vsub.s32 5, %v1334
        %v1336 = vrot.slane %v354, %v1335
        %v1337 = vlaneseq
        %v1338 = vshrl.u32 %v1337, 7
        %v1339 = vsub.s32 5, %v1338
        %v1340 = vrot.slane %v355, %v1339
        %v1373 = vunpack.c.l.b16 %v1301
        %v1374 = vunpack.c.h.b16 %v1301
        %v1375 = vunpack.c.l.b16 %v1302
        %v1376 = vunpack.c.h.b16 %v1302
        %v1377 = vunpack.c.l.b16 %v1303
        %v1378 = vunpack.c.h.b16 %v1303
        %v1379 = vunpack.c.l.b16 %v1304
        %v1380 = vunpack.c.h.b16 %v1304
        %v1381 = vunpack.c.l.b16 %v1305
        %v1382 = vunpack.c.h.b16 %v1305
        %v1383 = vunpack.c.l.b16 %v1306
        %v1384 = vunpack.c.h.b16 %v1306
        %v1385 = vunpack.c.l.b16 %v1307
        %v1386 = vunpack.c.h.b16 %v1307
        %v1387 = vunpack.c.l.b16 %v1308
        %v1388 = vunpack.c.h.b16 %v1308
        %v1389 = vunpack.c.l.b16 %v1309
        %v1390 = vunpack.c.h.b16 %v1309
        %v1391 = vunpack.c.l.b16 %v1310
        %v1392 = vunpack.c.h.b16 %v1310
        %v1393 = vunpack.c.l.b16 %v1311
        %v1394 = vunpack.c.h.b16 %v1311
        %v1395 = vunpack.c.l.b16 %v1312
        %v1396 = vunpack.c.h.b16 %v1312
        %v1397 = vunpack.c.l.b16 %v1313
        %v1398 = vunpack.c.h.b16 %v1313
        %v1399 = vunpack.c.l.b16 %v1314
        %v1400 = vunpack.c.h.b16 %v1314
        %v1401 = vunpack.c.l.b16 %v1315
        %v1402 = vunpack.c.h.b16 %v1315
        %v1403 = vunpack.c.l.b16 %v1316
        %v1404 = vunpack.c.h.b16 %v1316
        %v1405 = vunpack.c.l.b16 %v1317
        %v1406 = vunpack.c.h.b16 %v1317
        %v1407 = vunpack.c.l.b16 %v1318
        %v1408 = vunpack.c.h.b16 %v1318
        %v1409 = vunpack.c.l.b16 %v1319
        %v1410 = vunpack.c.h.b16 %v1319
        %v1411 = vunpack.c.l.b16 %v1320
        %v1412 = vunpack.c.h.b16 %v1320
        %v1413 = vunpack.c.l.b16 %v1321
        %v1414 = vunpack.c.h.b16 %v1321
        %v1415 = vunpack.c.l.b16 %v1322
        %v1416 = vunpack.c.h.b16 %v1322
        %v1417 = vunpack.c.l.b16 %v1323
        %v1418 = vunpack.c.h.b16 %v1323
        %v1419 = vunpack.c.l.b16 %v1324
        %v1420 = vunpack.c.h.b16 %v1324
        %v1421 = vunpack.c.l.b16 %v1325
        %v1422 = vunpack.c.h.b16 %v1325
        %v1423 = vunpack.c.l.b16 %v1326
        %v1424 = vunpack.c.h.b16 %v1326
        %v1425 = vunpack.c.l.b16 %v1327
        %v1426 = vunpack.c.h.b16 %v1327
        %v1427 = vunpack.c.l.b16 %v1328
        %v1428 = vunpack.c.h.b16 %v1328
        %v1429 = vunpack.c.l.b16 %v1329
        %v1430 = vunpack.c.h.b16 %v1329
        %v1431 = vunpack.c.l.b16 %v1330
        %v1432 = vunpack.c.h.b16 %v1330
        %v1433 = vunpack.c.l.b16 %v1331
        %v1434 = vunpack.c.h.b16 %v1331
        %v1435 = vunpack.c.l.b16 %v1332
        %v1436 = vunpack.c.h.b16 %v1332
        %v1437 = vpack.c.b16 %v1375, %v1373
        %v1438 = vpack.c.b16 %v1376, %v1374
        %v1439 = vpack.c.b16 %v1379, %v1377
        %v1440 = vpack.c.b16 %v1380, %v1378
        %v1441 = vpack.c.b16 %v1383, %v1381
        %v1442 = vpack.c.b16 %v1384, %v1382
        %v1443 = vpack.c.b16 %v1387, %v1385
        %v1444 = vpack.c.b16 %v1388, %v1386
        %v1445 = vpack.c.b16 %v1391, %v1389
        %v1446 = vpack.c.b16 %v1392, %v1390
        %v1447 = vpack.c.b16 %v1395, %v1393
        %v1448 = vpack.c.b16 %v1396, %v1394
        %v1449 = vpack.c.b16 %v1399, %v1397
        %v1450 = vpack.c.b16 %v1400, %v1398
        %v1451 = vpack.c.b16 %v1403, %v1401
        %v1452 = vpack.c.b16 %v1404, %v1402
        %v1453 = vpack.c.b16 %v1407, %v1405
        %v1454 = vpack.c.b16 %v1408, %v1406
        %v1455 = vpack.c.b16 %v1411, %v1409
        %v1456 = vpack.c.b16 %v1412, %v1410
        %v1457 = vpack.c.b16 %v1415, %v1413
        %v1458 = vpack.c.b16 %v1416, %v1414
        %v1459 = vpack.c.b16 %v1419, %v1417
        %v1460 = vpack.c.b16 %v1420, %v1418
        %v1461 = vpack.c.b16 %v1423, %v1421
        %v1462 = vpack.c.b16 %v1424, %v1422
        %v1463 = vpack.c.b16 %v1427, %v1425
        %v1464 = vpack.c.b16 %v1428, %v1426
        %v1465 = vpack.c.b16 %v1431, %v1429
        %v1466 = vpack.c.b16 %v1432, %v1430
        %v1467 = vpack.c.b16 %v1435, %v1433
        %v1468 = vpack.c.b16 %v1436, %v1434
        %1501 = vmatprep.subr.bf16.mxu0 %v1438
        %1502 = vmatpush1.bf16.msra.mxu0 %v1437
        %1503 = vmatprep.subr.bf16.mxu0 %v1440
        %1504 = vmatpush1.bf16.msra.mxu0 %v1439
        %1505 = vmatprep.subr.bf16.mxu0 %v1442
        %1506 = vmatpush1.bf16.msra.mxu0 %v1441
        %1507 = vmatprep.subr.bf16.mxu0 %v1444
        %1508 = vmatpush1.bf16.msra.mxu0 %v1443
        %1509 = vmatprep.subr.bf16.mxu0 %v1446
        %1510 = vmatpush1.bf16.msra.mxu0 %v1445
        %1511 = vmatprep.subr.bf16.mxu0 %v1448
        %1512 = vmatpush1.bf16.msra.mxu0 %v1447
        %1513 = vmatprep.subr.bf16.mxu0 %v1450
        %1514 = vmatpush1.bf16.msra.mxu0 %v1449
        %1515 = vmatprep.subr.bf16.mxu0 %v1452
        %1516 = vmatpush1.bf16.msra.mxu0 %v1451
        %1517 = vmatprep.subr.bf16.mxu0 %v1454
        %1518 = vmatpush1.bf16.msra.mxu0 %v1453
        %1519 = vmatprep.subr.bf16.mxu0 %v1456
        %1520 = vmatpush1.bf16.msra.mxu0 %v1455
        %1521 = vmatprep.subr.bf16.mxu0 %v1458
        %1522 = vmatpush1.bf16.msra.mxu0 %v1457
        %1523 = vmatprep.subr.bf16.mxu0 %v1460
        %1524 = vmatpush1.bf16.msra.mxu0 %v1459
        %1525 = vmatprep.subr.bf16.mxu0 %v1462
        %1526 = vmatpush1.bf16.msra.mxu0 %v1461
        %1527 = vmatprep.subr.bf16.mxu0 %v1464
        %1528 = vmatpush1.bf16.msra.mxu0 %v1463
        %1529 = vmatprep.subr.bf16.mxu0 %v1466
        %1530 = vmatpush1.bf16.msra.mxu0 %v1465
        %1531 = vmatprep.subr.bf16.mxu0 %v1468
        %1532 = vmatpush1.bf16.msra.mxu0 %v1467
        %1533 = vmatprep.mubr.bf16.mxu0 %v1298
        %1534 = vmatmul.mubr.bf16.gmra.mrb[0].mxu0 %v1297
        %v1535 = vpop.f32.mrb[0].mxu0
        %v1536 = vadd.f32 %v1336, %v1535
        %v1537 = vpop.f32.mrb[0].mxu0
        %v1538 = vadd.f32 %v1340, %v1537
        %v1539 = vpop.f32.mrb[0].mxu0
        %v1540 = vpop.f32.mrb[0].mxu0
        %1541 = vdwg.mxu0
        %v1542 = vadd.f32 %v1536, 0.0
        %v1543 = vadd.f32 %v1538, 0.0
        %s1544 = sadd.s32 %s350, 1
        %s1545 = smul.u32 %s1544, 2
        %s1546 = smul.addr %s1545, 8
        %s1547 = scalar_lea.vmem [#allocation13], %s1546
        %v1548 = vld [vmem:[%s1547] sm:$0xff]
        %v1549 = vld [vmem:[%s1547 + $0x8] sm:$0xff]
        %v1550 = vpack.c.bf16 %v1536, %v1536
        %v1551 = vpack.c.bf16 %v1538, %v1538
        %s1552 = smul.u32 %s1544, 64
        %s1553 = smul.addr %s1552, 4
        %s1554 = scalar_lea.vmem [#allocation7], %s1553
        %v1555 = vld [vmem:[%s1554] sm:$0xff]
        %v1556 = vld [vmem:[%s1554 + $0x8] sm:$0xff]
        %v1557 = vld [vmem:[%s1554 + $0x10] sm:$0xff]
        %v1558 = vld [vmem:[%s1554 + $0x18] sm:$0xff]
        %v1559 = vld [vmem:[%s1554 + $0x20] sm:$0xff]
        %v1560 = vld [vmem:[%s1554 + $0x28] sm:$0xff]
        %v1561 = vld [vmem:[%s1554 + $0x30] sm:$0xff]
        %v1562 = vld [vmem:[%s1554 + $0x38] sm:$0xff]
        %v1563 = vld [vmem:[%s1554 + $0x40] sm:$0xff]
        %v1564 = vld [vmem:[%s1554 + $0x48] sm:$0xff]
        %v1565 = vld [vmem:[%s1554 + $0x50] sm:$0xff]
        %v1566 = vld [vmem:[%s1554 + $0x58] sm:$0xff]
        %v1567 = vld [vmem:[%s1554 + $0x60] sm:$0xff]
        %v1568 = vld [vmem:[%s1554 + $0x68] sm:$0xff]
        %v1569 = vld [vmem:[%s1554 + $0x70] sm:$0xff]
        %v1570 = vld [vmem:[%s1554 + $0x78] sm:$0xff]
        %v1571 = vld [vmem:[%s1554 + $0x80] sm:$0xff]
        %v1572 = vld [vmem:[%s1554 + $0x88] sm:$0xff]
        %v1573 = vld [vmem:[%s1554 + $0x90] sm:$0xff]
        %v1574 = vld [vmem:[%s1554 + $0x98] sm:$0xff]
        %v1575 = vld [vmem:[%s1554 + $0xa0] sm:$0xff]
        %v1576 = vld [vmem:[%s1554 + $0xa8] sm:$0xff]
        %v1577 = vld [vmem:[%s1554 + $0xb0] sm:$0xff]
        %v1578 = vld [vmem:[%s1554 + $0xb8] sm:$0xff]
        %v1579 = vld [vmem:[%s1554 + $0xc0] sm:$0xff]
        %v1580 = vld [vmem:[%s1554 + $0xc8] sm:$0xff]
        %v1581 = vld [vmem:[%s1554 + $0xd0] sm:$0xff]
        %v1582 = vld [vmem:[%s1554 + $0xd8] sm:$0xff]
        %v1583 = vld [vmem:[%s1554 + $0xe0] sm:$0xff]
        %v1584 = vld [vmem:[%s1554 + $0xe8] sm:$0xff]
        %v1585 = vld [vmem:[%s1554 + $0xf0] sm:$0xff]
        %v1586 = vld [vmem:[%s1554 + $0xf8] sm:$0xff]
        %v1587 = vlaneseq
        %v1588 = vshrl.u32 %v1587, 7
        %v1589 = vsub.s32 0, %v1588
        %v1590 = vrot.slane %v1548, %v1589
        %v1591 = vlaneseq
        %v1592 = vshrl.u32 %v1591, 7
        %v1593 = vsub.s32 0, %v1592
        %v1594 = vrot.slane %v1549, %v1593
        %v1627 = vunpack.c.l.b16 %v1555
        %v1628 = vunpack.c.h.b16 %v1555
        %v1629 = vunpack.c.l.b16 %v1556
        %v1630 = vunpack.c.h.b16 %v1556
        %v1631 = vunpack.c.l.b16 %v1557
        %v1632 = vunpack.c.h.b16 %v1557
        %v1633 = vunpack.c.l.b16 %v1558
        %v1634 = vunpack.c.h.b16 %v1558
        %v1635 = vunpack.c.l.b16 %v1559
        %v1636 = vunpack.c.h.b16 %v1559
        %v1637 = vunpack.c.l.b16 %v1560
        %v1638 = vunpack.c.h.b16 %v1560
        %v1639 = vunpack.c.l.b16 %v1561
        %v1640 = vunpack.c.h.b16 %v1561
        %v1641 = vunpack.c.l.b16 %v1562
        %v1642 = vunpack.c.h.b16 %v1562
        %v1643 = vunpack.c.l.b16 %v1563
        %v1644 = vunpack.c.h.b16 %v1563
        %v1645 = vunpack.c.l.b16 %v1564
        %v1646 = vunpack.c.h.b16 %v1564
        %v1647 = vunpack.c.l.b16 %v1565
        %v1648 = vunpack.c.h.b16 %v1565
        %v1649 = vunpack.c.l.b16 %v1566
        %v1650 = vunpack.c.h.b16 %v1566
        %v1651 = vunpack.c.l.b16 %v1567
        %v1652 = vunpack.c.h.b16 %v1567
        %v1653 = vunpack.c.l.b16 %v1568
        %v1654 = vunpack.c.h.b16 %v1568
        %v1655 = vunpack.c.l.b16 %v1569
        %v1656 = vunpack.c.h.b16 %v1569
        %v1657 = vunpack.c.l.b16 %v1570
        %v1658 = vunpack.c.h.b16 %v1570
        %v1659 = vunpack.c.l.b16 %v1571
        %v1660 = vunpack.c.h.b16 %v1571
        %v1661 = vunpack.c.l.b16 %v1572
        %v1662 = vunpack.c.h.b16 %v1572
        %v1663 = vunpack.c.l.b16 %v1573
        %v1664 = vunpack.c.h.b16 %v1573
        %v1665 = vunpack.c.l.b16 %v1574
        %v1666 = vunpack.c.h.b16 %v1574
        %v1667 = vunpack.c.l.b16 %v1575
        %v1668 = vunpack.c.h.b16 %v1575
        %v1669 = vunpack.c.l.b16 %v1576
        %v1670 = vunpack.c.h.b16 %v1576
        %v1671 = vunpack.c.l.b16 %v1577
        %v1672 = vunpack.c.h.b16 %v1577
        %v1673 = vunpack.c.l.b16 %v1578
        %v1674 = vunpack.c.h.b16 %v1578
        %v1675 = vunpack.c.l.b16 %v1579
        %v1676 = vunpack.c.h.b16 %v1579
        %v1677 = vunpack.c.l.b16 %v1580
        %v1678 = vunpack.c.h.b16 %v1580
        %v1679 = vunpack.c.l.b16 %v1581
        %v1680 = vunpack.c.h.b16 %v1581
        %v1681 = vunpack.c.l.b16 %v1582
        %v1682 = vunpack.c.h.b16 %v1582
        %v1683 = vunpack.c.l.b16 %v1583
        %v1684 = vunpack.c.h.b16 %v1583
        %v1685 = vunpack.c.l.b16 %v1584
        %v1686 = vunpack.c.h.b16 %v1584
        %v1687 = vunpack.c.l.b16 %v1585
        %v1688 = vunpack.c.h.b16 %v1585
        %v1689 = vunpack.c.l.b16 %v1586
        %v1690 = vunpack.c.h.b16 %v1586
        %v1691 = vpack.c.b16 %v1629, %v1627
        %v1692 = vpack.c.b16 %v1630, %v1628
        %v1693 = vpack.c.b16 %v1633, %v1631
        %v1694 = vpack.c.b16 %v1634, %v1632
        %v1695 = vpack.c.b16 %v1637, %v1635
        %v1696 = vpack.c.b16 %v1638, %v1636
        %v1697 = vpack.c.b16 %v1641, %v1639
        %v1698 = vpack.c.b16 %v1642, %v1640
        %v1699 = vpack.c.b16 %v1645, %v1643
        %v1700 = vpack.c.b16 %v1646, %v1644
        %v1701 = vpack.c.b16 %v1649, %v1647
        %v1702 = vpack.c.b16 %v1650, %v1648
        %v1703 = vpack.c.b16 %v1653, %v1651
        %v1704 = vpack.c.b16 %v1654, %v1652
        %v1705 = vpack.c.b16 %v1657, %v1655
        %v1706 = vpack.c.b16 %v1658, %v1656
        %v1707 = vpack.c.b16 %v1661, %v1659
        %v1708 = vpack.c.b16 %v1662, %v1660
        %v1709 = vpack.c.b16 %v1665, %v1663
        %v1710 = vpack.c.b16 %v1666, %v1664
        %v1711 = vpack.c.b16 %v1669, %v1667
        %v1712 = vpack.c.b16 %v1670, %v1668
        %v1713 = vpack.c.b16 %v1673, %v1671
        %v1714 = vpack.c.b16 %v1674, %v1672
        %v1715 = vpack.c.b16 %v1677, %v1675
        %v1716 = vpack.c.b16 %v1678, %v1676
        %v1717 = vpack.c.b16 %v1681, %v1679
        %v1718 = vpack.c.b16 %v1682, %v1680
        %v1719 = vpack.c.b16 %v1685, %v1683
        %v1720 = vpack.c.b16 %v1686, %v1684
        %v1721 = vpack.c.b16 %v1689, %v1687
        %v1722 = vpack.c.b16 %v1690, %v1688
        %1755 = vmatprep.subr.bf16.mxu0 %v1692
        %1756 = vmatpush1.bf16.msra.mxu0 %v1691
        %1757 = vmatprep.subr.bf16.mxu0 %v1694
        %1758 = vmatpush1.bf16.msra.mxu0 %v1693
        %1759 = vmatprep.subr.bf16.mxu0 %v1696
        %1760 = vmatpush1.bf16.msra.mxu0 %v1695
        %1761 = vmatprep.subr.bf16.mxu0 %v1698
        %1762 = vmatpush1.bf16.msra.mxu0 %v1697
        %1763 = vmatprep.subr.bf16.mxu0 %v1700
        %1764 = vmatpush1.bf16.msra.mxu0 %v1699
        %1765 = vmatprep.subr.bf16.mxu0 %v1702
        %1766 = vmatpush1.bf16.msra.mxu0 %v1701
        %1767 = vmatprep.subr.bf16.mxu0 %v1704
        %1768 = vmatpush1.bf16.msra.mxu0 %v1703
        %1769 = vmatprep.subr.bf16.mxu0 %v1706
        %1770 = vmatpush1.bf16.msra.mxu0 %v1705
        %1771 = vmatprep.subr.bf16.mxu0 %v1708
        %1772 = vmatpush1.bf16.msra.mxu0 %v1707
        %1773 = vmatprep.subr.bf16.mxu0 %v1710
        %1774 = vmatpush1.bf16.msra.mxu0 %v1709
        %1775 = vmatprep.subr.bf16.mxu0 %v1712
        %1776 = vmatpush1.bf16.msra.mxu0 %v1711
        %1777 = vmatprep.subr.bf16.mxu0 %v1714
        %1778 = vmatpush1.bf16.msra.mxu0 %v1713
        %1779 = vmatprep.subr.bf16.mxu0 %v1716
        %1780 = vmatpush1.bf16.msra.mxu0 %v1715
        %1781 = vmatprep.subr.bf16.mxu0 %v1718
        %1782 = vmatpush1.bf16.msra.mxu0 %v1717
        %1783 = vmatprep.subr.bf16.mxu0 %v1720
        %1784 = vmatpush1.bf16.msra.mxu0 %v1719
        %1785 = vmatprep.subr.bf16.mxu0 %v1722
        %1786 = vmatpush1.bf16.msra.mxu0 %v1721
        %1787 = vmatprep.mubr.bf16.mxu0 %v1551
        %1788 = vmatmul.mubr.bf16.gmra.mrb[0].mxu0 %v1550
        %v1789 = vpop.f32.mrb[0].mxu0
        %v1790 = vadd.f32 %v1590, %v1789
        %v1791 = vpop.f32.mrb[0].mxu0
        %v1792 = vadd.f32 %v1594, %v1791
        %v1793 = vpop.f32.mrb[0].mxu0
        %v1794 = vpop.f32.mrb[0].mxu0
        %1795 = vdwg.mxu0
        %v1796 = vmax.f32 %v1790, 0.0
        %v1797 = vmax.f32 %v1792, 0.0
        %v1798 = vpack.c.bf16 %v1796, %v1796
        %v1799 = vpack.c.bf16 %v1797, %v1797
        %s1800 = smul.addr %s1552, 4
        %s1801 = scalar_lea.vmem [#allocation9], %s1800
        %v1802 = vld [vmem:[%s1801] sm:$0xff]
        %v1803 = vld [vmem:[%s1801 + $0x8] sm:$0xff]
        %v1804 = vld [vmem:[%s1801 + $0x10] sm:$0xff]
        %v1805 = vld [vmem:[%s1801 + $0x18] sm:$0xff]
        %v1806 = vld [vmem:[%s1801 + $0x20] sm:$0xff]
        %v1807 = vld [vmem:[%s1801 + $0x28] sm:$0xff]
        %v1808 = vld [vmem:[%s1801 + $0x30] sm:$0xff]
        %v1809 = vld [vmem:[%s1801 + $0x38] sm:$0xff]
        %v1810 = vld [vmem:[%s1801 + $0x40] sm:$0xff]
        %v1811 = vld [vmem:[%s1801 + $0x48] sm:$0xff]
        %v1812 = vld [vmem:[%s1801 + $0x50] sm:$0xff]
        %v1813 = vld [vmem:[%s1801 + $0x58] sm:$0xff]
        %v1814 = vld [vmem:[%s1801 + $0x60] sm:$0xff]
        %v1815 = vld [vmem:[%s1801 + $0x68] sm:$0xff]
        %v1816 = vld [vmem:[%s1801 + $0x70] sm:$0xff]
        %v1817 = vld [vmem:[%s1801 + $0x78] sm:$0xff]
        %v1818 = vld [vmem:[%s1801 + $0x80] sm:$0xff]
        %v1819 = vld [vmem:[%s1801 + $0x88] sm:$0xff]
        %v1820 = vld [vmem:[%s1801 + $0x90] sm:$0xff]
        %v1821 = vld [vmem:[%s1801 + $0x98] sm:$0xff]
        %v1822 = vld [vmem:[%s1801 + $0xa0] sm:$0xff]
        %v1823 = vld [vmem:[%s1801 + $0xa8] sm:$0xff]
        %v1824 = vld [vmem:[%s1801 + $0xb0] sm:$0xff]
        %v1825 = vld [vmem:[%s1801 + $0xb8] sm:$0xff]
        %v1826 = vld [vmem:[%s1801 + $0xc0] sm:$0xff]
        %v1827 = vld [vmem:[%s1801 + $0xc8] sm:$0xff]
        %v1828 = vld [vmem:[%s1801 + $0xd0] sm:$0xff]
        %v1829 = vld [vmem:[%s1801 + $0xd8] sm:$0xff]
        %v1830 = vld [vmem:[%s1801 + $0xe0] sm:$0xff]
        %v1831 = vld [vmem:[%s1801 + $0xe8] sm:$0xff]
        %v1832 = vld [vmem:[%s1801 + $0xf0] sm:$0xff]
        %v1833 = vld [vmem:[%s1801 + $0xf8] sm:$0xff]
        %v1834 = vlaneseq
        %v1835 = vshrl.u32 %v1834, 7
        %v1836 = vsub.s32 1, %v1835
        %v1837 = vrot.slane %v1548, %v1836
        %v1838 = vlaneseq
        %v1839 = vshrl.u32 %v1838, 7
        %v1840 = vsub.s32 1, %v1839
        %v1841 = vrot.slane %v1549, %v1840
        %v1874 = vunpack.c.l.b16 %v1802
        %v1875 = vunpack.c.h.b16 %v1802
        %v1876 = vunpack.c.l.b16 %v1803
        %v1877 = vunpack.c.h.b16 %v1803
        %v1878 = vunpack.c.l.b16 %v1804
        %v1879 = vunpack.c.h.b16 %v1804
        %v1880 = vunpack.c.l.b16 %v1805
        %v1881 = vunpack.c.h.b16 %v1805
        %v1882 = vunpack.c.l.b16 %v1806
        %v1883 = vunpack.c.h.b16 %v1806
        %v1884 = vunpack.c.l.b16 %v1807
        %v1885 = vunpack.c.h.b16 %v1807
        %v1886 = vunpack.c.l.b16 %v1808
        %v1887 = vunpack.c.h.b16 %v1808
        %v1888 = vunpack.c.l.b16 %v1809
        %v1889 = vunpack.c.h.b16 %v1809
        %v1890 = vunpack.c.l.b16 %v1810
        %v1891 = vunpack.c.h.b16 %v1810
        %v1892 = vunpack.c.l.b16 %v1811
        %v1893 = vunpack.c.h.b16 %v1811
        %v1894 = vunpack.c.l.b16 %v1812
        %v1895 = vunpack.c.h.b16 %v1812
        %v1896 = vunpack.c.l.b16 %v1813
        %v1897 = vunpack.c.h.b16 %v1813
        %v1898 = vunpack.c.l.b16 %v1814
        %v1899 = vunpack.c.h.b16 %v1814
        %v1900 = vunpack.c.l.b16 %v1815
        %v1901 = vunpack.c.h.b16 %v1815
        %v1902 = vunpack.c.l.b16 %v1816
        %v1903 = vunpack.c.h.b16 %v1816
        %v1904 = vunpack.c.l.b16 %v1817
        %v1905 = vunpack.c.h.b16 %v1817
        %v1906 = vunpack.c.l.b16 %v1818
        %v1907 = vunpack.c.h.b16 %v1818
        %v1908 = vunpack.c.l.b16 %v1819
        %v1909 = vunpack.c.h.b16 %v1819
        %v1910 = vunpack.c.l.b16 %v1820
        %v1911 = vunpack.c.h.b16 %v1820
        %v1912 = vunpack.c.l.b16 %v1821
        %v1913 = vunpack.c.h.b16 %v1821
        %v1914 = vunpack.c.l.b16 %v1822
        %v1915 = vunpack.c.h.b16 %v1822
        %v1916 = vunpack.c.l.b16 %v1823
        %v1917 = vunpack.c.h.b16 %v1823
        %v1918 = vunpack.c.l.b16 %v1824
        %v1919 = vunpack.c.h.b16 %v1824
        %v1920 = vunpack.c.l.b16 %v1825
        %v1921 = vunpack.c.h.b16 %v1825
        %v1922 = vunpack.c.l.b16 %v1826
        %v1923 = vunpack.c.h.b16 %v1826
        %v1924 = vunpack.c.l.b16 %v1827
        %v1925 = vunpack.c.h.b16 %v1827
        %v1926 = vunpack.c.l.b16 %v1828
        %v1927 = vunpack.c.h.b16 %v1828
        %v1928 = vunpack.c.l.b16 %v1829
        %v1929 = vunpack.c.h.b16 %v1829
        %v1930 = vunpack.c.l.b16 %v1830
        %v1931 = vunpack.c.h.b16 %v1830
        %v1932 = vunpack.c.l.b16 %v1831
        %v1933 = vunpack.c.h.b16 %v1831
        %v1934 = vunpack.c.l.b16 %v1832
        %v1935 = vunpack.c.h.b16 %v1832
        %v1936 = vunpack.c.l.b16 %v1833
        %v1937 = vunpack.c.h.b16 %v1833
        %v1938 = vpack.c.b16 %v1876, %v1874
        %v1939 = vpack.c.b16 %v1877, %v1875
        %v1940 = vpack.c.b16 %v1880, %v1878
        %v1941 = vpack.c.b16 %v1881, %v1879
        %v1942 = vpack.c.b16 %v1884, %v1882
        %v1943 = vpack.c.b16 %v1885, %v1883
        %v1944 = vpack.c.b16 %v1888, %v1886
        %v1945 = vpack.c.b16 %v1889, %v1887
        %v1946 = vpack.c.b16 %v1892, %v1890
        %v1947 = vpack.c.b16 %v1893, %v1891
        %v1948 = vpack.c.b16 %v1896, %v1894
        %v1949 = vpack.c.b16 %v1897, %v1895
        %v1950 = vpack.c.b16 %v1900, %v1898
        %v1951 = vpack.c.b16 %v1901, %v1899
        %v1952 = vpack.c.b16 %v1904, %v1902
        %v1953 = vpack.c.b16 %v1905, %v1903
        %v1954 = vpack.c.b16 %v1908, %v1906
        %v1955 = vpack.c.b16 %v1909, %v1907
        %v1956 = vpack.c.b16 %v1912, %v1910
        %v1957 = vpack.c.b16 %v1913, %v1911
        %v1958 = vpack.c.b16 %v1916, %v1914
        %v1959 = vpack.c.b16 %v1917, %v1915
        %v1960 = vpack.c.b16 %v1920, %v1918
        %v1961 = vpack.c.b16 %v1921, %v1919
        %v1962 = vpack.c.b16 %v1924, %v1922
        %v1963 = vpack.c.b16 %v1925, %v1923
        %v1964 = vpack.c.b16 %v1928, %v1926
        %v1965 = vpack.c.b16 %v1929, %v1927
        %v1966 = vpack.c.b16 %v1932, %v1930
        %v1967 = vpack.c.b16 %v1933, %v1931
        %v1968 = vpack.c.b16 %v1936, %v1934
        %v1969 = vpack.c.b16 %v1937, %v1935
        %2002 = vmatprep.subr.bf16.mxu0 %v1939
        %2003 = vmatpush1.bf16.msra.mxu0 %v1938
        %2004 = vmatprep.subr.bf16.mxu0 %v1941
        %2005 = vmatpush1.bf16.msra.mxu0 %v1940
        %2006 = vmatprep.subr.bf16.mxu0 %v1943
        %2007 = vmatpush1.bf16.msra.mxu0 %v1942
        %2008 = vmatprep.subr.bf16.mxu0 %v1945
        %2009 = vmatpush1.bf16.msra.mxu0 %v1944
        %2010 = vmatprep.subr.bf16.mxu0 %v1947
        %2011 = vmatpush1.bf16.msra.mxu0 %v1946
        %2012 = vmatprep.subr.bf16.mxu0 %v1949
        %2013 = vmatpush1.bf16.msra.mxu0 %v1948
        %2014 = vmatprep.subr.bf16.mxu0 %v1951
        %2015 = vmatpush1.bf16.msra.mxu0 %v1950
        %2016 = vmatprep.subr.bf16.mxu0 %v1953
        %2017 = vmatpush1.bf16.msra.mxu0 %v1952
        %2018 = vmatprep.subr.bf16.mxu0 %v1955
        %2019 = vmatpush1.bf16.msra.mxu0 %v1954
        %2020 = vmatprep.subr.bf16.mxu0 %v1957
        %2021 = vmatpush1.bf16.msra.mxu0 %v1956
        %2022 = vmatprep.subr.bf16.mxu0 %v1959
        %2023 = vmatpush1.bf16.msra.mxu0 %v1958
        %2024 = vmatprep.subr.bf16.mxu0 %v1961
        %2025 = vmatpush1.bf16.msra.mxu0 %v1960
        %2026 = vmatprep.subr.bf16.mxu0 %v1963
        %2027 = vmatpush1.bf16.msra.mxu0 %v1962
        %2028 = vmatprep.subr.bf16.mxu0 %v1965
        %2029 = vmatpush1.bf16.msra.mxu0 %v1964
        %2030 = vmatprep.subr.bf16.mxu0 %v1967
        %2031 = vmatpush1.bf16.msra.mxu0 %v1966
        %2032 = vmatprep.subr.bf16.mxu0 %v1969
        %2033 = vmatpush1.bf16.msra.mxu0 %v1968
        %2034 = vmatprep.mubr.bf16.mxu0 %v1799
        %2035 = vmatmul.mubr.bf16.gmra.mrb[0].mxu0 %v1798
        %v2036 = vpop.f32.mrb[0].mxu0
        %v2037 = vadd.f32 %v1837, %v2036
        %v2038 = vpop.f32.mrb[0].mxu0
        %v2039 = vadd.f32 %v1841, %v2038
        %v2040 = vpop.f32.mrb[0].mxu0
        %v2041 = vpop.f32.mrb[0].mxu0
        %2042 = vdwg.mxu0
        %v2043 = vmax.f32 %v2037, 0.0
        %v2044 = vmax.f32 %v2039, 0.0
        %2045 = vmatprep.subr.mxu0 %v2044
        %2046 = vmatpush1.xpose.msra.mxu0 %v2043
        %2047 = vmatprep.subr.mxu0 0.0
        %2048 = vmatpush1.xpose.msra.mxu0 0.0
        %2049 = vmatprep.subr.mxu0 0.0
        %2050 = vmatpush1.xpose.msra.mxu0 0.0
        %2051 = vmatprep.subr.mxu0 0.0
        %2052 = vmatpush1.xpose.msra.mxu0 0.0
        %2053 = vmatprep.subr.mxu0 0.0
        %2054 = vmatpush1.xpose.msra.mxu0 0.0
        %2055 = vmatprep.subr.mxu0 0.0
        %2056 = vmatpush1.xpose.msra.mxu0 0.0
        %2057 = vmatprep.subr.mxu0 0.0
        %2058 = vmatpush1.xpose.msra.mxu0 0.0
        %2059 = vmatprep.subr.mxu0 0.0
        %2060 = vmatpush1.xpose.msra.mxu0 0.0
        %2061 = vmatprep.subr.mxu0 0.0
        %2062 = vmatpush1.xpose.msra.mxu0 0.0
        %2063 = vmatprep.subr.mxu0 0.0
        %2064 = vmatpush1.xpose.msra.mxu0 0.0
        %2065 = vmatprep.subr.mxu0 0.0
        %2066 = vmatpush1.xpose.msra.mxu0 0.0
        %2067 = vmatprep.subr.mxu0 0.0
        %2068 = vmatpush1.xpose.msra.mxu0 0.0
        %2069 = vmatprep.subr.mxu0 0.0
        %2070 = vmatpush1.xpose.msra.mxu0 0.0
        %2071 = vmatprep.subr.mxu0 0.0
        %2072 = vmatpush1.xpose.msra.mxu0 0.0
        %2073 = vmatprep.subr.mxu0 0.0
        %2074 = vmatpush1.xpose.msra.mxu0 0.0
        %2075 = vmatprep.subr.mxu0 0.0
        %2076 = vmatpush1.xpose.msra.mxu0 0.0
        %2077 = vmatprep.subr.mxu0 0.0
        %2078 = vmatpush1.xpose.msra.mxu0 0.0
        %2079 = vmatprep.subr.mxu0 0.0
        %2080 = vmatpush1.xpose.msra.mxu0 0.0
        %2081 = vmatprep.subr.mxu0 0.0
        %2082 = vmatpush1.xpose.msra.mxu0 0.0
        %2083 = vmatprep.subr.mxu0 0.0
        %2084 = vmatpush1.xpose.msra.mxu0 0.0
        %2085 = vmatprep.subr.mxu0 0.0
        %2086 = vmatpush1.xpose.msra.mxu0 0.0
        %2087 = vmatprep.subr.mxu0 0.0
        %2088 = vmatpush1.xpose.msra.mxu0 0.0
        %2089 = vmatprep.subr.mxu0 0.0
        %2090 = vmatpush1.xpose.msra.mxu0 0.0
        %2091 = vmatprep.subr.mxu0 0.0
        %2092 = vmatpush1.xpose.msra.mxu0 0.0
        %2093 = vmatprep.subr.mxu0 0.0
        %2094 = vmatpush1.xpose.msra.mxu0 0.0
        %2095 = vmatprep.subr.mxu0 0.0
        %2096 = vmatpush1.xpose.msra.mxu0 0.0
        %2097 = vmatprep.subr.mxu0 0.0
        %2098 = vmatpush1.xpose.msra.mxu0 0.0
        %2099 = vmatprep.subr.mxu0 0.0
        %2100 = vmatpush1.xpose.msra.mxu0 0.0
        %2101 = vmatprep.subr.mxu0 0.0
        %2102 = vmatpush1.xpose.msra.mxu0 0.0
        %2103 = vmatprep.subr.mxu0 0.0
        %2104 = vmatpush1.xpose.msra.mxu0 0.0
        %2105 = vmatprep.subr.mxu0 0.0
        %2106 = vmatpush1.xpose.msra.mxu0 0.0
        %2107 = vmatprep.subr.mxu0 0.0
        %2108 = vmatpush1.xpose.msra.mxu0 0.0
        %2109 = vmatprep.mubr.f32.mxu0 %v2044
        %2110 = vmatmul.mubr.f32.gmra.mrb[0].mxu0 %v2043
        %v2111 = vpop.f32.mrb[0].mxu0
        %v2112 = vadd.f32 0.0, %v2111
        %v2113 = vpop.f32.mrb[0].mxu0
        %2114 = vdwg.mxu0
        %v2115 = vsel %vm921, %v2112, 0.0
        %2116 = vadd.xlane.f32.xlu0 %v2115
        %v2117 = vpop.xlane.xlu0 %2116
        %v2118 = vrot.slane %v2117, 4
        %v2119 = vadd.f32 %v2117, %v2118
        %v2120 = vrot.slane %v2119, 2
        %v2121 = vadd.f32 %v2119, %v2120
        %v2122 = vrot.slane %v2121, 1
        %v2123 = vadd.f32 %v2121, %v2122
        %s2124 = vtos %v2123
        %v2125 = vrcp.pop 64.0
        %s2126 = vtos %v2125
        %s2127 = smul.f32 %s2124, %s2126
        %v2128 = vstv %s2127
        %vm2129 = vcmp.gt.f32.partialorder %v2112, %v2128
        %v2130 = vsel %vm2129, 1, 0
        %v2131 = vcvt.s32.f32 %v2130
        %v2132 = vpack.c.bf16 %v2131, %v2131
        %v2134 = vsel %vm921, %v2132, 0
        %v2137 = vsel %vm943, %v1550, 0
        %v2140 = vsel %vm943, %v1551, 0
        %2142 = vmatprep.subr.bf16.mxu0 %v2140
        %2143 = vmatpush1.bf16.msra.mxu0 %v2137
        %2144 = vmatprep.subr.bf16.mxu0 0
        %2145 = vmatpush1.bf16.msra.mxu0 0
        %2146 = vmatprep.subr.bf16.mxu0 0
        %2147 = vmatpush1.bf16.msra.mxu0 0
        %2148 = vmatprep.subr.bf16.mxu0 0
        %2149 = vmatpush1.bf16.msra.mxu0 0
        %2150 = vmatprep.subr.bf16.mxu0 0
        %2151 = vmatpush1.bf16.msra.mxu0 0
        %2152 = vmatprep.subr.bf16.mxu0 0
        %2153 = vmatpush1.bf16.msra.mxu0 0
        %2154 = vmatprep.subr.bf16.mxu0 0
        %2155 = vmatpush1.bf16.msra.mxu0 0
        %2156 = vmatprep.subr.bf16.mxu0 0
        %2157 = vmatpush1.bf16.msra.mxu0 0
        %2158 = vmatprep.subr.bf16.mxu0 0
        %2159 = vmatpush1.bf16.msra.mxu0 0
        %2160 = vmatprep.subr.bf16.mxu0 0
        %2161 = vmatpush1.bf16.msra.mxu0 0
        %2162 = vmatprep.subr.bf16.mxu0 0
        %2163 = vmatpush1.bf16.msra.mxu0 0
        %2164 = vmatprep.subr.bf16.mxu0 0
        %2165 = vmatpush1.bf16.msra.mxu0 0
        %2166 = vmatprep.subr.bf16.mxu0 0
        %2167 = vmatpush1.bf16.msra.mxu0 0
        %2168 = vmatprep.subr.bf16.mxu0 0
        %2169 = vmatpush1.bf16.msra.mxu0 0
        %2170 = vmatprep.subr.bf16.mxu0 0
        %2171 = vmatpush1.bf16.msra.mxu0 0
        %2172 = vmatprep.subr.bf16.mxu0 0
        %2173 = vmatpush1.bf16.msra.mxu0 0
        %2174 = vmatprep.mubr.bf16.mxu0 0
        %2175 = vmatmul.mubr.bf16.gmra.mrb[0].mxu0 %v2134
        %v2176 = vpop.f32.mrb[0].mxu0
        %v2177 = vadd.f32 %v1536, %v2176
        %v2178 = vpop.f32.mrb[0].mxu0
        %v2179 = vadd.f32 %v1538, %v2178
        %v2180 = vpop.f32.mrb[0].mxu0
        %v2181 = vpop.f32.mrb[0].mxu0
        %2182 = vdwg.mxu0
        %v2183 = vpack.c.bf16 %v2177, %v2177
        %v2184 = vpack.c.bf16 %v2179, %v2179
        %s2185 = smul.addr %s1552, 4
        %s2186 = scalar_lea.vmem [#allocation10], %s2185
        %v2187 = vld [vmem:[%s2186] sm:$0xff]
        %v2188 = vld [vmem:[%s2186 + $0x8] sm:$0xff]
        %v2189 = vld [vmem:[%s2186 + $0x10] sm:$0xff]
        %v2190 = vld [vmem:[%s2186 + $0x18] sm:$0xff]
        %v2191 = vld [vmem:[%s2186 + $0x20] sm:$0xff]
        %v2192 = vld [vmem:[%s2186 + $0x28] sm:$0xff]
        %v2193 = vld [vmem:[%s2186 + $0x30] sm:$0xff]
        %v2194 = vld [vmem:[%s2186 + $0x38] sm:$0xff]
        %v2195 = vld [vmem:[%s2186 + $0x40] sm:$0xff]
        %v2196 = vld [vmem:[%s2186 + $0x48] sm:$0xff]
        %v2197 = vld [vmem:[%s2186 + $0x50] sm:$0xff]
        %v2198 = vld [vmem:[%s2186 + $0x58] sm:$0xff]
        %v2199 = vld [vmem:[%s2186 + $0x60] sm:$0xff]
        %v2200 = vld [vmem:[%s2186 + $0x68] sm:$0xff]
        %v2201 = vld [vmem:[%s2186 + $0x70] sm:$0xff]
        %v2202 = vld [vmem:[%s2186 + $0x78] sm:$0xff]
        %v2203 = vld [vmem:[%s2186 + $0x80] sm:$0xff]
        %v2204 = vld [vmem:[%s2186 + $0x88] sm:$0xff]
        %v2205 = vld [vmem:[%s2186 + $0x90] sm:$0xff]
        %v2206 = vld [vmem:[%s2186 + $0x98] sm:$0xff]
        %v2207 = vld [vmem:[%s2186 + $0xa0] sm:$0xff]
        %v2208 = vld [vmem:[%s2186 + $0xa8] sm:$0xff]
        %v2209 = vld [vmem:[%s2186 + $0xb0] sm:$0xff]
        %v2210 = vld [vmem:[%s2186 + $0xb8] sm:$0xff]
        %v2211 = vld [vmem:[%s2186 + $0xc0] sm:$0xff]
        %v2212 = vld [vmem:[%s2186 + $0xc8] sm:$0xff]
        %v2213 = vld [vmem:[%s2186 + $0xd0] sm:$0xff]
        %v2214 = vld [vmem:[%s2186 + $0xd8] sm:$0xff]
        %v2215 = vld [vmem:[%s2186 + $0xe0] sm:$0xff]
        %v2216 = vld [vmem:[%s2186 + $0xe8] sm:$0xff]
        %v2217 = vld [vmem:[%s2186 + $0xf0] sm:$0xff]
        %v2218 = vld [vmem:[%s2186 + $0xf8] sm:$0xff]
        %v2219 = vlaneseq
        %v2220 = vshrl.u32 %v2219, 7
        %v2221 = vsub.s32 2, %v2220
        %v2222 = vrot.slane %v1548, %v2221
        %v2223 = vlaneseq
        %v2224 = vshrl.u32 %v2223, 7
        %v2225 = vsub.s32 2, %v2224
        %v2226 = vrot.slane %v1549, %v2225
        %v2259 = vunpack.c.l.b16 %v2187
        %v2260 = vunpack.c.h.b16 %v2187
        %v2261 = vunpack.c.l.b16 %v2188
        %v2262 = vunpack.c.h.b16 %v2188
        %v2263 = vunpack.c.l.b16 %v2189
        %v2264 = vunpack.c.h.b16 %v2189
        %v2265 = vunpack.c.l.b16 %v2190
        %v2266 = vunpack.c.h.b16 %v2190
        %v2267 = vunpack.c.l.b16 %v2191
        %v2268 = vunpack.c.h.b16 %v2191
        %v2269 = vunpack.c.l.b16 %v2192
        %v2270 = vunpack.c.h.b16 %v2192
        %v2271 = vunpack.c.l.b16 %v2193
        %v2272 = vunpack.c.h.b16 %v2193
        %v2273 = vunpack.c.l.b16 %v2194
        %v2274 = vunpack.c.h.b16 %v2194
        %v2275 = vunpack.c.l.b16 %v2195
        %v2276 = vunpack.c.h.b16 %v2195
        %v2277 = vunpack.c.l.b16 %v2196
        %v2278 = vunpack.c.h.b16 %v2196
        %v2279 = vunpack.c.l.b16 %v2197
        %v2280 = vunpack.c.h.b16 %v2197
        %v2281 = vunpack.c.l.b16 %v2198
        %v2282 = vunpack.c.h.b16 %v2198
        %v2283 = vunpack.c.l.b16 %v2199
        %v2284 = vunpack.c.h.b16 %v2199
        %v2285 = vunpack.c.l.b16 %v2200
        %v2286 = vunpack.c.h.b16 %v2200
        %v2287 = vunpack.c.l.b16 %v2201
        %v2288 = vunpack.c.h.b16 %v2201
        %v2289 = vunpack.c.l.b16 %v2202
        %v2290 = vunpack.c.h.b16 %v2202
        %v2291 = vunpack.c.l.b16 %v2203
        %v2292 = vunpack.c.h.b16 %v2203
        %v2293 = vunpack.c.l.b16 %v2204
        %v2294 = vunpack.c.h.b16 %v2204
        %v2295 = vunpack.c.l.b16 %v2205
        %v2296 = vunpack.c.h.b16 %v2205
        %v2297 = vunpack.c.l.b16 %v2206
        %v2298 = vunpack.c.h.b16 %v2206
        %v2299 = vunpack.c.l.b16 %v2207
        %v2300 = vunpack.c.h.b16 %v2207
        %v2301 = vunpack.c.l.b16 %v2208
        %v2302 = vunpack.c.h.b16 %v2208
        %v2303 = vunpack.c.l.b16 %v2209
        %v2304 = vunpack.c.h.b16 %v2209
        %v2305 = vunpack.c.l.b16 %v2210
        %v2306 = vunpack.c.h.b16 %v2210
        %v2307 = vunpack.c.l.b16 %v2211
        %v2308 = vunpack.c.h.b16 %v2211
        %v2309 = vunpack.c.l.b16 %v2212
        %v2310 = vunpack.c.h.b16 %v2212
        %v2311 = vunpack.c.l.b16 %v2213
        %v2312 = vunpack.c.h.b16 %v2213
        %v2313 = vunpack.c.l.b16 %v2214
        %v2314 = vunpack.c.h.b16 %v2214
        %v2315 = vunpack.c.l.b16 %v2215
        %v2316 = vunpack.c.h.b16 %v2215
        %v2317 = vunpack.c.l.b16 %v2216
        %v2318 = vunpack.c.h.b16 %v2216
        %v2319 = vunpack.c.l.b16 %v2217
        %v2320 = vunpack.c.h.b16 %v2217
        %v2321 = vunpack.c.l.b16 %v2218
        %v2322 = vunpack.c.h.b16 %v2218
        %v2323 = vpack.c.b16 %v2261, %v2259
        %v2324 = vpack.c.b16 %v2262, %v2260
        %v2325 = vpack.c.b16 %v2265, %v2263
        %v2326 = vpack.c.b16 %v2266, %v2264
        %v2327 = vpack.c.b16 %v2269, %v2267
        %v2328 = vpack.c.b16 %v2270, %v2268
        %v2329 = vpack.c.b16 %v2273, %v2271
        %v2330 = vpack.c.b16 %v2274, %v2272
        %v2331 = vpack.c.b16 %v2277, %v2275
        %v2332 = vpack.c.b16 %v2278, %v2276
        %v2333 = vpack.c.b16 %v2281, %v2279
        %v2334 = vpack.c.b16 %v2282, %v2280
        %v2335 = vpack.c.b16 %v2285, %v2283
        %v2336 = vpack.c.b16 %v2286, %v2284
        %v2337 = vpack.c.b16 %v2289, %v2287
        %v2338 = vpack.c.b16 %v2290, %v2288
        %v2339 = vpack.c.b16 %v2293, %v2291
        %v2340 = vpack.c.b16 %v2294, %v2292
        %v2341 = vpack.c.b16 %v2297, %v2295
        %v2342 = vpack.c.b16 %v2298, %v2296
        %v2343 = vpack.c.b16 %v2301, %v2299
        %v2344 = vpack.c.b16 %v2302, %v2300
        %v2345 = vpack.c.b16 %v2305, %v2303
        %v2346 = vpack.c.b16 %v2306, %v2304
        %v2347 = vpack.c.b16 %v2309, %v2307
        %v2348 = vpack.c.b16 %v2310, %v2308
        %v2349 = vpack.c.b16 %v2313, %v2311
        %v2350 = vpack.c.b16 %v2314, %v2312
        %v2351 = vpack.c.b16 %v2317, %v2315
        %v2352 = vpack.c.b16 %v2318, %v2316
        %v2353 = vpack.c.b16 %v2321, %v2319
        %v2354 = vpack.c.b16 %v2322, %v2320
        %2387 = vmatprep.subr.bf16.mxu0 %v2324
        %2388 = vmatpush1.bf16.msra.mxu0 %v2323
        %2389 = vmatprep.subr.bf16.mxu0 %v2326
        %2390 = vmatpush1.bf16.msra.mxu0 %v2325
        %2391 = vmatprep.subr.bf16.mxu0 %v2328
        %2392 = vmatpush1.bf16.msra.mxu0 %v2327
        %2393 = vmatprep.subr.bf16.mxu0 %v2330
        %2394 = vmatpush1.bf16.msra.mxu0 %v2329
        %2395 = vmatprep.subr.bf16.mxu0 %v2332
        %2396 = vmatpush1.bf16.msra.mxu0 %v2331
        %2397 = vmatprep.subr.bf16.mxu0 %v2334
        %2398 = vmatpush1.bf16.msra.mxu0 %v2333
        %2399 = vmatprep.subr.bf16.mxu0 %v2336
        %2400 = vmatpush1.bf16.msra.mxu0 %v2335
        %2401 = vmatprep.subr.bf16.mxu0 %v2338
        %2402 = vmatpush1.bf16.msra.mxu0 %v2337
        %2403 = vmatprep.subr.bf16.mxu0 %v2340
        %2404 = vmatpush1.bf16.msra.mxu0 %v2339
        %2405 = vmatprep.subr.bf16.mxu0 %v2342
        %2406 = vmatpush1.bf16.msra.mxu0 %v2341
        %2407 = vmatprep.subr.bf16.mxu0 %v2344
        %2408 = vmatpush1.bf16.msra.mxu0 %v2343
        %2409 = vmatprep.subr.bf16.mxu0 %v2346
        %2410 = vmatpush1.bf16.msra.mxu0 %v2345
        %2411 = vmatprep.subr.bf16.mxu0 %v2348
        %2412 = vmatpush1.bf16.msra.mxu0 %v2347
        %2413 = vmatprep.subr.bf16.mxu0 %v2350
        %2414 = vmatpush1.bf16.msra.mxu0 %v2349
        %2415 = vmatprep.subr.bf16.mxu0 %v2352
        %2416 = vmatpush1.bf16.msra.mxu0 %v2351
        %2417 = vmatprep.subr.bf16.mxu0 %v2354
        %2418 = vmatpush1.bf16.msra.mxu0 %v2353
        %2419 = vmatprep.mubr.bf16.mxu0 %v2184
        %2420 = vmatmul.mubr.bf16.gmra.mrb[0].mxu0 %v2183
        %v2421 = vpop.f32.mrb[0].mxu0
        %v2422 = vadd.f32 %v2222, %v2421
        %v2423 = vpop.f32.mrb[0].mxu0
        %v2424 = vadd.f32 %v2226, %v2423
        %v2425 = vpop.f32.mrb[0].mxu0
        %v2426 = vpop.f32.mrb[0].mxu0
        %2427 = vdwg.mxu0
        %v2428 = vrot.slane %v2422, 4
        %v2429 = vadd.f32 %v2422, %v2428
        %v2430 = vrot.slane %v2429, 2
        %v2431 = vadd.f32 %v2429, %v2430
        %v2432 = vrot.slane %v2431, 1
        %v2433 = vadd.f32 %v2431, %v2432
        %v2434 = vrot.slane %v2424, 4
        %v2435 = vadd.f32 %v2424, %v2434
        %v2436 = vrot.slane %v2435, 2
        %v2437 = vadd.f32 %v2435, %v2436
        %v2438 = vrot.slane %v2437, 1
        %v2439 = vadd.f32 %v2437, %v2438
        %v2440 = vmul.f32 %v2433, %v1248
        %v2441 = vmul.f32 %v2439, %v1248
        %v2442 = vsub.f32 %v2422, %v2440
        %v2443 = vsub.f32 %v2424, %v2441
        %v2444 = vmul.f32 %v2442, %v2442
        %v2445 = vmul.f32 %v2443, %v2443
        %v2446 = vrot.slane %v2444, 4
        %v2447 = vadd.f32 %v2444, %v2446
        %v2448 = vrot.slane %v2447, 2
        %v2449 = vadd.f32 %v2447, %v2448
        %v2450 = vrot.slane %v2449, 1
        %v2451 = vadd.f32 %v2449, %v2450
        %v2452 = vrot.slane %v2445, 4
        %v2453 = vadd.f32 %v2445, %v2452
        %v2454 = vrot.slane %v2453, 2
        %v2455 = vadd.f32 %v2453, %v2454
        %v2456 = vrot.slane %v2455, 1
        %v2457 = vadd.f32 %v2455, %v2456
        %v2458 = vmul.f32 %v2451, %v1248
        %v2459 = vmul.f32 %v2457, %v1248
        %v2460 = vadd.f32 %v2458, 1e-05
        %v2461 = vadd.f32 %v2459, 1e-05
        %v2462 = vrsqrt.pop %v2460
        %v2463 = vrsqrt.pop %v2461
        %v2464 = vmul.f32 %v2442, %v2462
        %v2465 = vmul.f32 %v2443, %v2463
        %v2466 = vlaneseq
        %v2467 = vshrl.u32 %v2466, 7
        %v2468 = vsub.s32 3, %v2467
        %v2469 = vrot.slane %v1548, %v2468
        %v2470 = vlaneseq
        %v2471 = vshrl.u32 %v2470, 7
        %v2472 = vsub.s32 3, %v2471
        %v2473 = vrot.slane %v1549, %v2472
        %v2474 = vmul.f32 %v2464, %v2469
        %v2475 = vmul.f32 %v2465, %v2473
        %v2476 = vlaneseq
        %v2477 = vshrl.u32 %v2476, 7
        %v2478 = vsub.s32 4, %v2477
        %v2479 = vrot.slane %v1548, %v2478
        %v2480 = vlaneseq
        %v2481 = vshrl.u32 %v2480, 7
        %v2482 = vsub.s32 4, %v2481
        %v2483 = vrot.slane %v1549, %v2482
        %v2484 = vadd.f32 %v2474, %v2479
        %v2485 = vadd.f32 %v2475, %v2483
        %v2486 = vmax.f32 %v2484, 0.0
        %v2487 = vmax.f32 %v2485, 0.0
        %v2488 = vpack.c.bf16 %v2486, %v2486
        %v2489 = vpack.c.bf16 %v2487, %v2487
        %s2490 = smul.addr %s1552, 4
        %s2491 = scalar_lea.vmem [#allocation12], %s2490
        %v2492 = vld [vmem:[%s2491] sm:$0xff]
        %v2493 = vld [vmem:[%s2491 + $0x8] sm:$0xff]
        %v2494 = vld [vmem:[%s2491 + $0x10] sm:$0xff]
        %v2495 = vld [vmem:[%s2491 + $0x18] sm:$0xff]
        %v2496 = vld [vmem:[%s2491 + $0x20] sm:$0xff]
        %v2497 = vld [vmem:[%s2491 + $0x28] sm:$0xff]
        %v2498 = vld [vmem:[%s2491 + $0x30] sm:$0xff]
        %v2499 = vld [vmem:[%s2491 + $0x38] sm:$0xff]
        %v2500 = vld [vmem:[%s2491 + $0x40] sm:$0xff]
        %v2501 = vld [vmem:[%s2491 + $0x48] sm:$0xff]
        %v2502 = vld [vmem:[%s2491 + $0x50] sm:$0xff]
        %v2503 = vld [vmem:[%s2491 + $0x58] sm:$0xff]
        %v2504 = vld [vmem:[%s2491 + $0x60] sm:$0xff]
        %v2505 = vld [vmem:[%s2491 + $0x68] sm:$0xff]
        %v2506 = vld [vmem:[%s2491 + $0x70] sm:$0xff]
        %v2507 = vld [vmem:[%s2491 + $0x78] sm:$0xff]
        %v2508 = vld [vmem:[%s2491 + $0x80] sm:$0xff]
        %v2509 = vld [vmem:[%s2491 + $0x88] sm:$0xff]
        %v2510 = vld [vmem:[%s2491 + $0x90] sm:$0xff]
        %v2511 = vld [vmem:[%s2491 + $0x98] sm:$0xff]
        %v2512 = vld [vmem:[%s2491 + $0xa0] sm:$0xff]
        %v2513 = vld [vmem:[%s2491 + $0xa8] sm:$0xff]
        %v2514 = vld [vmem:[%s2491 + $0xb0] sm:$0xff]
        %v2515 = vld [vmem:[%s2491 + $0xb8] sm:$0xff]
        %v2516 = vld [vmem:[%s2491 + $0xc0] sm:$0xff]
        %v2517 = vld [vmem:[%s2491 + $0xc8] sm:$0xff]
        %v2518 = vld [vmem:[%s2491 + $0xd0] sm:$0xff]
        %v2519 = vld [vmem:[%s2491 + $0xd8] sm:$0xff]
        %v2520 = vld [vmem:[%s2491 + $0xe0] sm:$0xff]
        %v2521 = vld [vmem:[%s2491 + $0xe8] sm:$0xff]
        %v2522 = vld [vmem:[%s2491 + $0xf0] sm:$0xff]
        %v2523 = vld [vmem:[%s2491 + $0xf8] sm:$0xff]
        %v2524 = vlaneseq
        %v2525 = vshrl.u32 %v2524, 7
        %v2526 = vsub.s32 5, %v2525
        %v2527 = vrot.slane %v1548, %v2526
        %v2528 = vlaneseq
        %v2529 = vshrl.u32 %v2528, 7
        %v2530 = vsub.s32 5, %v2529
        %v2531 = vrot.slane %v1549, %v2530
        %v2564 = vunpack.c.l.b16 %v2492
        %v2565 = vunpack.c.h.b16 %v2492
        %v2566 = vunpack.c.l.b16 %v2493
        %v2567 = vunpack.c.h.b16 %v2493
        %v2568 = vunpack.c.l.b16 %v2494
        %v2569 = vunpack.c.h.b16 %v2494
        %v2570 = vunpack.c.l.b16 %v2495
        %v2571 = vunpack.c.h.b16 %v2495
        %v2572 = vunpack.c.l.b16 %v2496
        %v2573 = vunpack.c.h.b16 %v2496
        %v2574 = vunpack.c.l.b16 %v2497
        %v2575 = vunpack.c.h.b16 %v2497
        %v2576 = vunpack.c.l.b16 %v2498
        %v2577 = vunpack.c.h.b16 %v2498
        %v2578 = vunpack.c.l.b16 %v2499
        %v2579 = vunpack.c.h.b16 %v2499
        %v2580 = vunpack.c.l.b16 %v2500
        %v2581 = vunpack.c.h.b16 %v2500
        %v2582 = vunpack.c.l.b16 %v2501
        %v2583 = vunpack.c.h.b16 %v2501
        %v2584 = vunpack.c.l.b16 %v2502
        %v2585 = vunpack.c.h.b16 %v2502
        %v2586 = vunpack.c.l.b16 %v2503
        %v2587 = vunpack.c.h.b16 %v2503
        %v2588 = vunpack.c.l.b16 %v2504
        %v2589 = vunpack.c.h.b16 %v2504
        %v2590 = vunpack.c.l.b16 %v2505
        %v2591 = vunpack.c.h.b16 %v2505
        %v2592 = vunpack.c.l.b16 %v2506
        %v2593 = vunpack.c.h.b16 %v2506
        %v2594 = vunpack.c.l.b16 %v2507
        %v2595 = vunpack.c.h.b16 %v2507
        %v2596 = vunpack.c.l.b16 %v2508
        %v2597 = vunpack.c.h.b16 %v2508
        %v2598 = vunpack.c.l.b16 %v2509
        %v2599 = vunpack.c.h.b16 %v2509
        %v2600 = vunpack.c.l.b16 %v2510
        %v2601 = vunpack.c.h.b16 %v2510
        %v2602 = vunpack.c.l.b16 %v2511
        %v2603 = vunpack.c.h.b16 %v2511
        %v2604 = vunpack.c.l.b16 %v2512
        %v2605 = vunpack.c.h.b16 %v2512
        %v2606 = vunpack.c.l.b16 %v2513
        %v2607 = vunpack.c.h.b16 %v2513
        %v2608 = vunpack.c.l.b16 %v2514
        %v2609 = vunpack.c.h.b16 %v2514
        %v2610 = vunpack.c.l.b16 %v2515
        %v2611 = vunpack.c.h.b16 %v2515
        %v2612 = vunpack.c.l.b16 %v2516
        %v2613 = vunpack.c.h.b16 %v2516
        %v2614 = vunpack.c.l.b16 %v2517
        %v2615 = vunpack.c.h.b16 %v2517
        %v2616 = vunpack.c.l.b16 %v2518
        %v2617 = vunpack.c.h.b16 %v2518
        %v2618 = vunpack.c.l.b16 %v2519
        %v2619 = vunpack.c.h.b16 %v2519
        %v2620 = vunpack.c.l.b16 %v2520
        %v2621 = vunpack.c.h.b16 %v2520
        %v2622 = vunpack.c.l.b16 %v2521
        %v2623 = vunpack.c.h.b16 %v2521
        %v2624 = vunpack.c.l.b16 %v2522
        %v2625 = vunpack.c.h.b16 %v2522
        %v2626 = vunpack.c.l.b16 %v2523
        %v2627 = vunpack.c.h.b16 %v2523
        %v2628 = vpack.c.b16 %v2566, %v2564
        %v2629 = vpack.c.b16 %v2567, %v2565
        %v2630 = vpack.c.b16 %v2570, %v2568
        %v2631 = vpack.c.b16 %v2571, %v2569
        %v2632 = vpack.c.b16 %v2574, %v2572
        %v2633 = vpack.c.b16 %v2575, %v2573
        %v2634 = vpack.c.b16 %v2578, %v2576
        %v2635 = vpack.c.b16 %v2579, %v2577
        %v2636 = vpack.c.b16 %v2582, %v2580
        %v2637 = vpack.c.b16 %v2583, %v2581
        %v2638 = vpack.c.b16 %v2586, %v2584
        %v2639 = vpack.c.b16 %v2587, %v2585
        %v2640 = vpack.c.b16 %v2590, %v2588
        %v2641 = vpack.c.b16 %v2591, %v2589
        %v2642 = vpack.c.b16 %v2594, %v2592
        %v2643 = vpack.c.b16 %v2595, %v2593
        %v2644 = vpack.c.b16 %v2598, %v2596
        %v2645 = vpack.c.b16 %v2599, %v2597
        %v2646 = vpack.c.b16 %v2602, %v2600
        %v2647 = vpack.c.b16 %v2603, %v2601
        %v2648 = vpack.c.b16 %v2606, %v2604
        %v2649 = vpack.c.b16 %v2607, %v2605
        %v2650 = vpack.c.b16 %v2610, %v2608
        %v2651 = vpack.c.b16 %v2611, %v2609
        %v2652 = vpack.c.b16 %v2614, %v2612
        %v2653 = vpack.c.b16 %v2615, %v2613
        %v2654 = vpack.c.b16 %v2618, %v2616
        %v2655 = vpack.c.b16 %v2619, %v2617
        %v2656 = vpack.c.b16 %v2622, %v2620
        %v2657 = vpack.c.b16 %v2623, %v2621
        %v2658 = vpack.c.b16 %v2626, %v2624
        %v2659 = vpack.c.b16 %v2627, %v2625
        %2692 = vmatprep.subr.bf16.mxu0 %v2629
        %2693 = vmatpush1.bf16.msra.mxu0 %v2628
        %2694 = vmatprep.subr.bf16.mxu0 %v2631
        %2695 = vmatpush1.bf16.msra.mxu0 %v2630
        %2696 = vmatprep.subr.bf16.mxu0 %v2633
        %2697 = vmatpush1.bf16.msra.mxu0 %v2632
        %2698 = vmatprep.subr.bf16.mxu0 %v2635
        %2699 = vmatpush1.bf16.msra.mxu0 %v2634
        %2700 = vmatprep.subr.bf16.mxu0 %v2637
        %2701 = vmatpush1.bf16.msra.mxu0 %v2636
        %2702 = vmatprep.subr.bf16.mxu0 %v2639
        %2703 = vmatpush1.bf16.msra.mxu0 %v2638
        %2704 = vmatprep.subr.bf16.mxu0 %v2641
        %2705 = vmatpush1.bf16.msra.mxu0 %v2640
        %2706 = vmatprep.subr.bf16.mxu0 %v2643
        %2707 = vmatpush1.bf16.msra.mxu0 %v2642
        %2708 = vmatprep.subr.bf16.mxu0 %v2645
        %2709 = vmatpush1.bf16.msra.mxu0 %v2644
        %2710 = vmatprep.subr.bf16.mxu0 %v2647
        %2711 = vmatpush1.bf16.msra.mxu0 %v2646
        %2712 = vmatprep.subr.bf16.mxu0 %v2649
        %2713 = vmatpush1.bf16.msra.mxu0 %v2648
        %2714 = vmatprep.subr.bf16.mxu0 %v2651
        %2715 = vmatpush1.bf16.msra.mxu0 %v2650
        %2716 = vmatprep.subr.bf16.mxu0 %v2653
        %2717 = vmatpush1.bf16.msra.mxu0 %v2652
        %2718 = vmatprep.subr.bf16.mxu0 %v2655
        %2719 = vmatpush1.bf16.msra.mxu0 %v2654
        %2720 = vmatprep.subr.bf16.mxu0 %v2657
        %2721 = vmatpush1.bf16.msra.mxu0 %v2656
        %2722 = vmatprep.subr.bf16.mxu0 %v2659
        %2723 = vmatpush1.bf16.msra.mxu0 %v2658
        %2724 = vmatprep.mubr.bf16.mxu0 %v2489
        %2725 = vmatmul.mubr.bf16.gmra.mrb[0].mxu0 %v2488
        %v2726 = vpop.f32.mrb[0].mxu0
        %v2727 = vadd.f32 %v2527, %v2726
        %v2728 = vpop.f32.mrb[0].mxu0
        %v2729 = vadd.f32 %v2531, %v2728
        %v2730 = vpop.f32.mrb[0].mxu0
        %v2731 = vpop.f32.mrb[0].mxu0
        %2732 = vdwg.mxu0
        %v2733 = vadd.f32 %v1542, %v2727
        %v2734 = vadd.f32 %v1543, %v2729
        %s2735 = sadd.s32 %s350, 2
        %s2736 = smul.u32 %s2735, 2
        %s2737 = smul.addr %s2736, 8
        %s2738 = scalar_lea.vmem [#allocation13], %s2737
        %v2739 = vld [vmem:[%s2738] sm:$0xff]
        %v2740 = vld [vmem:[%s2738 + $0x8] sm:$0xff]
        %v2741 = vpack.c.bf16 %v2727, %v2727
        %v2742 = vpack.c.bf16 %v2729, %v2729
        %s2743 = smul.u32 %s2735, 64
        %s2744 = smul.addr %s2743, 4
        %s2745 = scalar_lea.vmem [#allocation7], %s2744
        %v2746 = vld [vmem:[%s2745] sm:$0xff]
        %v2747 = vld [vmem:[%s2745 + $0x8] sm:$0xff]
        %v2748 = vld [vmem:[%s2745 + $0x10] sm:$0xff]
        %v2749 = vld [vmem:[%s2745 + $0x18] sm:$0xff]
        %v2750 = vld [vmem:[%s2745 + $0x20] sm:$0xff]
        %v2751 = vld [vmem:[%s2745 + $0x28] sm:$0xff]
        %v2752 = vld [vmem:[%s2745 + $0x30] sm:$0xff]
        %v2753 = vld [vmem:[%s2745 + $0x38] sm:$0xff]
        %v2754 = vld [vmem:[%s2745 + $0x40] sm:$0xff]
        %v2755 = vld [vmem:[%s2745 + $0x48] sm:$0xff]
        %v2756 = vld [vmem:[%s2745 + $0x50] sm:$0xff]
        %v2757 = vld [vmem:[%s2745 + $0x58] sm:$0xff]
        %v2758 = vld [vmem:[%s2745 + $0x60] sm:$0xff]
        %v2759 = vld [vmem:[%s2745 + $0x68] sm:$0xff]
        %v2760 = vld [vmem:[%s2745 + $0x70] sm:$0xff]
        %v2761 = vld [vmem:[%s2745 + $0x78] sm:$0xff]
        %v2762 = vld [vmem:[%s2745 + $0x80] sm:$0xff]
        %v2763 = vld [vmem:[%s2745 + $0x88] sm:$0xff]
        %v2764 = vld [vmem:[%s2745 + $0x90] sm:$0xff]
        %v2765 = vld [vmem:[%s2745 + $0x98] sm:$0xff]
        %v2766 = vld [vmem:[%s2745 + $0xa0] sm:$0xff]
        %v2767 = vld [vmem:[%s2745 + $0xa8] sm:$0xff]
        %v2768 = vld [vmem:[%s2745 + $0xb0] sm:$0xff]
        %v2769 = vld [vmem:[%s2745 + $0xb8] sm:$0xff]
        %v2770 = vld [vmem:[%s2745 + $0xc0] sm:$0xff]
        %v2771 = vld [vmem:[%s2745 + $0xc8] sm:$0xff]
        %v2772 = vld [vmem:[%s2745 + $0xd0] sm:$0xff]
        %v2773 = vld [vmem:[%s2745 + $0xd8] sm:$0xff]
        %v2774 = vld [vmem:[%s2745 + $0xe0] sm:$0xff]
        %v2775 = vld [vmem:[%s2745 + $0xe8] sm:$0xff]
        %v2776 = vld [vmem:[%s2745 + $0xf0] sm:$0xff]
        %v2777 = vld [vmem:[%s2745 + $0xf8] sm:$0xff]
        %v2778 = vlaneseq
        %v2779 = vshrl.u32 %v2778, 7
        %v2780 = vsub.s32 0, %v2779
        %v2781 = vrot.slane %v2739, %v2780
        %v2782 = vlaneseq
        %v2783 = vshrl.u32 %v2782, 7
        %v2784 = vsub.s32 0, %v2783
        %v2785 = vrot.slane %v2740, %v2784
        %v2818 = vunpack.c.l.b16 %v2746
        %v2819 = vunpack.c.h.b16 %v2746
        %v2820 = vunpack.c.l.b16 %v2747
        %v2821 = vunpack.c.h.b16 %v2747
        %v2822 = vunpack.c.l.b16 %v2748
        %v2823 = vunpack.c.h.b16 %v2748
        %v2824 = vunpack.c.l.b16 %v2749
        %v2825 = vunpack.c.h.b16 %v2749
        %v2826 = vunpack.c.l.b16 %v2750
        %v2827 = vunpack.c.h.b16 %v2750
        %v2828 = vunpack.c.l.b16 %v2751
        %v2829 = vunpack.c.h.b16 %v2751
        %v2830 = vunpack.c.l.b16 %v2752
        %v2831 = vunpack.c.h.b16 %v2752
        %v2832 = vunpack.c.l.b16 %v2753
        %v2833 = vunpack.c.h.b16 %v2753
        %v2834 = vunpack.c.l.b16 %v2754
        %v2835 = vunpack.c.h.b16 %v2754
        %v2836 = vunpack.c.l.b16 %v2755
        %v2837 = vunpack.c.h.b16 %v2755
        %v2838 = vunpack.c.l.b16 %v2756
        %v2839 = vunpack.c.h.b16 %v2756
        %v2840 = vunpack.c.l.b16 %v2757
        %v2841 = vunpack.c.h.b16 %v2757
        %v2842 = vunpack.c.l.b16 %v2758
        %v2843 = vunpack.c.h.b16 %v2758
        %v2844 = vunpack.c.l.b16 %v2759
        %v2845 = vunpack.c.h.b16 %v2759
        %v2846 = vunpack.c.l.b16 %v2760
        %v2847 = vunpack.c.h.b16 %v2760
        %v2848 = vunpack.c.l.b16 %v2761
        %v2849 = vunpack.c.h.b16 %v2761
        %v2850 = vunpack.c.l.b16 %v2762
        %v2851 = vunpack.c.h.b16 %v2762
        %v2852 = vunpack.c.l.b16 %v2763
        %v2853 = vunpack.c.h.b16 %v2763
        %v2854 = vunpack.c.l.b16 %v2764
        %v2855 = vunpack.c.h.b16 %v2764
        %v2856 = vunpack.c.l.b16 %v2765
        %v2857 = vunpack.c.h.b16 %v2765
        %v2858 = vunpack.c.l.b16 %v2766
        %v2859 = vunpack.c.h.b16 %v2766
        %v2860 = vunpack.c.l.b16 %v2767
        %v2861 = vunpack.c.h.b16 %v2767
        %v2862 = vunpack.c.l.b16 %v2768
        %v2863 = vunpack.c.h.b16 %v2768
        %v2864 = vunpack.c.l.b16 %v2769
        %v2865 = vunpack.c.h.b16 %v2769
        %v2866 = vunpack.c.l.b16 %v2770
        %v2867 = vunpack.c.h.b16 %v2770
        %v2868 = vunpack.c.l.b16 %v2771
        %v2869 = vunpack.c.h.b16 %v2771
        %v2870 = vunpack.c.l.b16 %v2772
        %v2871 = vunpack.c.h.b16 %v2772
        %v2872 = vunpack.c.l.b16 %v2773
        %v2873 = vunpack.c.h.b16 %v2773
        %v2874 = vunpack.c.l.b16 %v2774
        %v2875 = vunpack.c.h.b16 %v2774
        %v2876 = vunpack.c.l.b16 %v2775
        %v2877 = vunpack.c.h.b16 %v2775
        %v2878 = vunpack.c.l.b16 %v2776
        %v2879 = vunpack.c.h.b16 %v2776
        %v2880 = vunpack.c.l.b16 %v2777
        %v2881 = vunpack.c.h.b16 %v2777
        %v2882 = vpack.c.b16 %v2820, %v2818
        %v2883 = vpack.c.b16 %v2821, %v2819
        %v2884 = vpack.c.b16 %v2824, %v2822
        %v2885 = vpack.c.b16 %v2825, %v2823
        %v2886 = vpack.c.b16 %v2828, %v2826
        %v2887 = vpack.c.b16 %v2829, %v2827
        %v2888 = vpack.c.b16 %v2832, %v2830
        %v2889 = vpack.c.b16 %v2833, %v2831
        %v2890 = vpack.c.b16 %v2836, %v2834
        %v2891 = vpack.c.b16 %v2837, %v2835
        %v2892 = vpack.c.b16 %v2840, %v2838
        %v2893 = vpack.c.b16 %v2841, %v2839
        %v2894 = vpack.c.b16 %v2844, %v2842
        %v2895 = vpack.c.b16 %v2845, %v2843
        %v2896 = vpack.c.b16 %v2848, %v2846
        %v2897 = vpack.c.b16 %v2849, %v2847
        %v2898 = vpack.c.b16 %v2852, %v2850
        %v2899 = vpack.c.b16 %v2853, %v2851
        %v2900 = vpack.c.b16 %v2856, %v2854
        %v2901 = vpack.c.b16 %v2857, %v2855
        %v2902 = vpack.c.b16 %v2860, %v2858
        %v2903 = vpack.c.b16 %v2861, %v2859
        %v2904 = vpack.c.b16 %v2864, %v2862
        %v2905 = vpack.c.b16 %v2865, %v2863
        %v2906 = vpack.c.b16 %v2868, %v2866
        %v2907 = vpack.c.b16 %v2869, %v2867
        %v2908 = vpack.c.b16 %v2872, %v2870
        %v2909 = vpack.c.b16 %v2873, %v2871
        %v2910 = vpack.c.b16 %v2876, %v2874
        %v2911 = vpack.c.b16 %v2877, %v2875
        %v2912 = vpack.c.b16 %v2880, %v2878
        %v2913 = vpack.c.b16 %v2881, %v2879
        %2946 = vmatprep.subr.bf16.mxu0 %v2883
        %2947 = vmatpush1.bf16.msra.mxu0 %v2882
        %2948 = vmatprep.subr.bf16.mxu0 %v2885
        %2949 = vmatpush1.bf16.msra.mxu0 %v2884
        %2950 = vmatprep.subr.bf16.mxu0 %v2887
        %2951 = vmatpush1.bf16.msra.mxu0 %v2886
        %2952 = vmatprep.subr.bf16.mxu0 %v2889
        %2953 = vmatpush1.bf16.msra.mxu0 %v2888
        %2954 = vmatprep.subr.bf16.mxu0 %v2891
        %2955 = vmatpush1.bf16.msra.mxu0 %v2890
        %2956 = vmatprep.subr.bf16.mxu0 %v2893
        %2957 = vmatpush1.bf16.msra.mxu0 %v2892
        %2958 = vmatprep.subr.bf16.mxu0 %v2895
        %2959 = vmatpush1.bf16.msra.mxu0 %v2894
        %2960 = vmatprep.subr.bf16.mxu0 %v2897
        %2961 = vmatpush1.bf16.msra.mxu0 %v2896
        %2962 = vmatprep.subr.bf16.mxu0 %v2899
        %2963 = vmatpush1.bf16.msra.mxu0 %v2898
        %2964 = vmatprep.subr.bf16.mxu0 %v2901
        %2965 = vmatpush1.bf16.msra.mxu0 %v2900
        %2966 = vmatprep.subr.bf16.mxu0 %v2903
        %2967 = vmatpush1.bf16.msra.mxu0 %v2902
        %2968 = vmatprep.subr.bf16.mxu0 %v2905
        %2969 = vmatpush1.bf16.msra.mxu0 %v2904
        %2970 = vmatprep.subr.bf16.mxu0 %v2907
        %2971 = vmatpush1.bf16.msra.mxu0 %v2906
        %2972 = vmatprep.subr.bf16.mxu0 %v2909
        %2973 = vmatpush1.bf16.msra.mxu0 %v2908
        %2974 = vmatprep.subr.bf16.mxu0 %v2911
        %2975 = vmatpush1.bf16.msra.mxu0 %v2910
        %2976 = vmatprep.subr.bf16.mxu0 %v2913
        %2977 = vmatpush1.bf16.msra.mxu0 %v2912
        %2978 = vmatprep.mubr.bf16.mxu0 %v2742
        %2979 = vmatmul.mubr.bf16.gmra.mrb[0].mxu0 %v2741
        %v2980 = vpop.f32.mrb[0].mxu0
        %v2981 = vadd.f32 %v2781, %v2980
        %v2982 = vpop.f32.mrb[0].mxu0
        %v2983 = vadd.f32 %v2785, %v2982
        %v2984 = vpop.f32.mrb[0].mxu0
        %v2985 = vpop.f32.mrb[0].mxu0
        %2986 = vdwg.mxu0
        %v2987 = vmax.f32 %v2981, 0.0
        %v2988 = vmax.f32 %v2983, 0.0
        %v2989 = vpack.c.bf16 %v2987, %v2987
        %v2990 = vpack.c.bf16 %v2988, %v2988
        %s2991 = smul.addr %s2743, 4
        %s2992 = scalar_lea.vmem [#allocation9], %s2991
        %v2993 = vld [vmem:[%s2992] sm:$0xff]
        %v2994 = vld [vmem:[%s2992 + $0x8] sm:$0xff]
        %v2995 = vld [vmem:[%s2992 + $0x10] sm:$0xff]
        %v2996 = vld [vmem:[%s2992 + $0x18] sm:$0xff]
        %v2997 = vld [vmem:[%s2992 + $0x20] sm:$0xff]
        %v2998 = vld [vmem:[%s2992 + $0x28] sm:$0xff]
        %v2999 = vld [vmem:[%s2992 + $0x30] sm:$0xff]
        %v3000 = vld [vmem:[%s2992 + $0x38] sm:$0xff]
        %v3001 = vld [vmem:[%s2992 + $0x40] sm:$0xff]
        %v3002 = vld [vmem:[%s2992 + $0x48] sm:$0xff]
        %v3003 = vld [vmem:[%s2992 + $0x50] sm:$0xff]
        %v3004 = vld [vmem:[%s2992 + $0x58] sm:$0xff]
        %v3005 = vld [vmem:[%s2992 + $0x60] sm:$0xff]
        %v3006 = vld [vmem:[%s2992 + $0x68] sm:$0xff]
        %v3007 = vld [vmem:[%s2992 + $0x70] sm:$0xff]
        %v3008 = vld [vmem:[%s2992 + $0x78] sm:$0xff]
        %v3009 = vld [vmem:[%s2992 + $0x80] sm:$0xff]
        %v3010 = vld [vmem:[%s2992 + $0x88] sm:$0xff]
        %v3011 = vld [vmem:[%s2992 + $0x90] sm:$0xff]
        %v3012 = vld [vmem:[%s2992 + $0x98] sm:$0xff]
        %v3013 = vld [vmem:[%s2992 + $0xa0] sm:$0xff]
        %v3014 = vld [vmem:[%s2992 + $0xa8] sm:$0xff]
        %v3015 = vld [vmem:[%s2992 + $0xb0] sm:$0xff]
        %v3016 = vld [vmem:[%s2992 + $0xb8] sm:$0xff]
        %v3017 = vld [vmem:[%s2992 + $0xc0] sm:$0xff]
        %v3018 = vld [vmem:[%s2992 + $0xc8] sm:$0xff]
        %v3019 = vld [vmem:[%s2992 + $0xd0] sm:$0xff]
        %v3020 = vld [vmem:[%s2992 + $0xd8] sm:$0xff]
        %v3021 = vld [vmem:[%s2992 + $0xe0] sm:$0xff]
        %v3022 = vld [vmem:[%s2992 + $0xe8] sm:$0xff]
        %v3023 = vld [vmem:[%s2992 + $0xf0] sm:$0xff]
        %v3024 = vld [vmem:[%s2992 + $0xf8] sm:$0xff]
        %v3025 = vlaneseq
        %v3026 = vshrl.u32 %v3025, 7
        %v3027 = vsub.s32 1, %v3026
        %v3028 = vrot.slane %v2739, %v3027
        %v3029 = vlaneseq
        %v3030 = vshrl.u32 %v3029, 7
        %v3031 = vsub.s32 1, %v3030
        %v3032 = vrot.slane %v2740, %v3031
        %v3065 = vunpack.c.l.b16 %v2993
        %v3066 = vunpack.c.h.b16 %v2993
        %v3067 = vunpack.c.l.b16 %v2994
        %v3068 = vunpack.c.h.b16 %v2994
        %v3069 = vunpack.c.l.b16 %v2995
        %v3070 = vunpack.c.h.b16 %v2995
        %v3071 = vunpack.c.l.b16 %v2996
        %v3072 = vunpack.c.h.b16 %v2996
        %v3073 = vunpack.c.l.b16 %v2997
        %v3074 = vunpack.c.h.b16 %v2997
        %v3075 = vunpack.c.l.b16 %v2998
        %v3076 = vunpack.c.h.b16 %v2998
        %v3077 = vunpack.c.l.b16 %v2999
        %v3078 = vunpack.c.h.b16 %v2999
        %v3079 = vunpack.c.l.b16 %v3000
        %v3080 = vunpack.c.h.b16 %v3000
        %v3081 = vunpack.c.l.b16 %v3001
        %v3082 = vunpack.c.h.b16 %v3001
        %v3083 = vunpack.c.l.b16 %v3002
        %v3084 = vunpack.c.h.b16 %v3002
        %v3085 = vunpack.c.l.b16 %v3003
        %v3086 = vunpack.c.h.b16 %v3003
        %v3087 = vunpack.c.l.b16 %v3004
        %v3088 = vunpack.c.h.b16 %v3004
        %v3089 = vunpack.c.l.b16 %v3005
        %v3090 = vunpack.c.h.b16 %v3005
        %v3091 = vunpack.c.l.b16 %v3006
        %v3092 = vunpack.c.h.b16 %v3006
        %v3093 = vunpack.c.l.b16 %v3007
        %v3094 = vunpack.c.h.b16 %v3007
        %v3095 = vunpack.c.l.b16 %v3008
        %v3096 = vunpack.c.h.b16 %v3008
        %v3097 = vunpack.c.l.b16 %v3009
        %v3098 = vunpack.c.h.b16 %v3009
        %v3099 = vunpack.c.l.b16 %v3010
        %v3100 = vunpack.c.h.b16 %v3010
        %v3101 = vunpack.c.l.b16 %v3011
        %v3102 = vunpack.c.h.b16 %v3011
        %v3103 = vunpack.c.l.b16 %v3012
        %v3104 = vunpack.c.h.b16 %v3012
        %v3105 = vunpack.c.l.b16 %v3013
        %v3106 = vunpack.c.h.b16 %v3013
        %v3107 = vunpack.c.l.b16 %v3014
        %v3108 = vunpack.c.h.b16 %v3014
        %v3109 = vunpack.c.l.b16 %v3015
        %v3110 = vunpack.c.h.b16 %v3015
        %v3111 = vunpack.c.l.b16 %v3016
        %v3112 = vunpack.c.h.b16 %v3016
        %v3113 = vunpack.c.l.b16 %v3017
        %v3114 = vunpack.c.h.b16 %v3017
        %v3115 = vunpack.c.l.b16 %v3018
        %v3116 = vunpack.c.h.b16 %v3018
        %v3117 = vunpack.c.l.b16 %v3019
        %v3118 = vunpack.c.h.b16 %v3019
        %v3119 = vunpack.c.l.b16 %v3020
        %v3120 = vunpack.c.h.b16 %v3020
        %v3121 = vunpack.c.l.b16 %v3021
        %v3122 = vunpack.c.h.b16 %v3021
        %v3123 = vunpack.c.l.b16 %v3022
        %v3124 = vunpack.c.h.b16 %v3022
        %v3125 = vunpack.c.l.b16 %v3023
        %v3126 = vunpack.c.h.b16 %v3023
        %v3127 = vunpack.c.l.b16 %v3024
        %v3128 = vunpack.c.h.b16 %v3024
        %v3129 = vpack.c.b16 %v3067, %v3065
        %v3130 = vpack.c.b16 %v3068, %v3066
        %v3131 = vpack.c.b16 %v3071, %v3069
        %v3132 = vpack.c.b16 %v3072, %v3070
        %v3133 = vpack.c.b16 %v3075, %v3073
        %v3134 = vpack.c.b16 %v3076, %v3074
        %v3135 = vpack.c.b16 %v3079, %v3077
        %v3136 = vpack.c.b16 %v3080, %v3078
        %v3137 = vpack.c.b16 %v3083, %v3081
        %v3138 = vpack.c.b16 %v3084, %v3082
        %v3139 = vpack.c.b16 %v3087, %v3085
        %v3140 = vpack.c.b16 %v3088, %v3086
        %v3141 = vpack.c.b16 %v3091, %v3089
        %v3142 = vpack.c.b16 %v3092, %v3090
        %v3143 = vpack.c.b16 %v3095, %v3093
        %v3144 = vpack.c.b16 %v3096, %v3094
        %v3145 = vpack.c.b16 %v3099, %v3097
        %v3146 = vpack.c.b16 %v3100, %v3098
        %v3147 = vpack.c.b16 %v3103, %v3101
        %v3148 = vpack.c.b16 %v3104, %v3102
        %v3149 = vpack.c.b16 %v3107, %v3105
        %v3150 = vpack.c.b16 %v3108, %v3106
        %v3151 = vpack.c.b16 %v3111, %v3109
        %v3152 = vpack.c.b16 %v3112, %v3110
        %v3153 = vpack.c.b16 %v3115, %v3113
        %v3154 = vpack.c.b16 %v3116, %v3114
        %v3155 = vpack.c.b16 %v3119, %v3117
        %v3156 = vpack.c.b16 %v3120, %v3118
        %v3157 = vpack.c.b16 %v3123, %v3121
        %v3158 = vpack.c.b16 %v3124, %v3122
        %v3159 = vpack.c.b16 %v3127, %v3125
        %v3160 = vpack.c.b16 %v3128, %v3126
        %3193 = vmatprep.subr.bf16.mxu0 %v3130
        %3194 = vmatpush1.bf16.msra.mxu0 %v3129
        %3195 = vmatprep.subr.bf16.mxu0 %v3132
        %3196 = vmatpush1.bf16.msra.mxu0 %v3131
        %3197 = vmatprep.subr.bf16.mxu0 %v3134
        %3198 = vmatpush1.bf16.msra.mxu0 %v3133
        %3199 = vmatprep.subr.bf16.mxu0 %v3136
        %3200 = vmatpush1.bf16.msra.mxu0 %v3135
        %3201 = vmatprep.subr.bf16.mxu0 %v3138
        %3202 = vmatpush1.bf16.msra.mxu0 %v3137
        %3203 = vmatprep.subr.bf16.mxu0 %v3140
        %3204 = vmatpush1.bf16.msra.mxu0 %v3139
        %3205 = vmatprep.subr.bf16.mxu0 %v3142
        %3206 = vmatpush1.bf16.msra.mxu0 %v3141
        %3207 = vmatprep.subr.bf16.mxu0 %v3144
        %3208 = vmatpush1.bf16.msra.mxu0 %v3143
        %3209 = vmatprep.subr.bf16.mxu0 %v3146
        %3210 = vmatpush1.bf16.msra.mxu0 %v3145
        %3211 = vmatprep.subr.bf16.mxu0 %v3148
        %3212 = vmatpush1.bf16.msra.mxu0 %v3147
        %3213 = vmatprep.subr.bf16.mxu0 %v3150
        %3214 = vmatpush1.bf16.msra.mxu0 %v3149
        %3215 = vmatprep.subr.bf16.mxu0 %v3152
        %3216 = vmatpush1.bf16.msra.mxu0 %v3151
        %3217 = vmatprep.subr.bf16.mxu0 %v3154
        %3218 = vmatpush1.bf16.msra.mxu0 %v3153
        %3219 = vmatprep.subr.bf16.mxu0 %v3156
        %3220 = vmatpush1.bf16.msra.mxu0 %v3155
        %3221 = vmatprep.subr.bf16.mxu0 %v3158
        %3222 = vmatpush1.bf16.msra.mxu0 %v3157
        %3223 = vmatprep.subr.bf16.mxu0 %v3160
        %3224 = vmatpush1.bf16.msra.mxu0 %v3159
        %3225 = vmatprep.mubr.bf16.mxu0 %v2990
        %3226 = vmatmul.mubr.bf16.gmra.mrb[0].mxu0 %v2989
        %v3227 = vpop.f32.mrb[0].mxu0
        %v3228 = vadd.f32 %v3028, %v3227
        %v3229 = vpop.f32.mrb[0].mxu0
        %v3230 = vadd.f32 %v3032, %v3229
        %v3231 = vpop.f32.mrb[0].mxu0
        %v3232 = vpop.f32.mrb[0].mxu0
        %3233 = vdwg.mxu0
        %v3234 = vmax.f32 %v3228, 0.0
        %v3235 = vmax.f32 %v3230, 0.0
        %3236 = vmatprep.subr.mxu0 %v3235
        %3237 = vmatpush1.xpose.msra.mxu0 %v3234
        %3238 = vmatprep.subr.mxu0 0.0
        %3239 = vmatpush1.xpose.msra.mxu0 0.0
        %3240 = vmatprep.subr.mxu0 0.0
        %3241 = vmatpush1.xpose.msra.mxu0 0.0
        %3242 = vmatprep.subr.mxu0 0.0
        %3243 = vmatpush1.xpose.msra.mxu0 0.0
        %3244 = vmatprep.subr.mxu0 0.0
        %3245 = vmatpush1.xpose.msra.mxu0 0.0
        %3246 = vmatprep.subr.mxu0 0.0
        %3247 = vmatpush1.xpose.msra.mxu0 0.0
        %3248 = vmatprep.subr.mxu0 0.0
        %3249 = vmatpush1.xpose.msra.mxu0 0.0
        %3250 = vmatprep.subr.mxu0 0.0
        %3251 = vmatpush1.xpose.msra.mxu0 0.0
        %3252 = vmatprep.subr.mxu0 0.0
        %3253 = vmatpush1.xpose.msra.mxu0 0.0
        %3254 = vmatprep.subr.mxu0 0.0
        %3255 = vmatpush1.xpose.msra.mxu0 0.0
        %3256 = vmatprep.subr.mxu0 0.0
        %3257 = vmatpush1.xpose.msra.mxu0 0.0
        %3258 = vmatprep.subr.mxu0 0.0
        %3259 = vmatpush1.xpose.msra.mxu0 0.0
        %3260 = vmatprep.subr.mxu0 0.0
        %3261 = vmatpush1.xpose.msra.mxu0 0.0
        %3262 = vmatprep.subr.mxu0 0.0
        %3263 = vmatpush1.xpose.msra.mxu0 0.0
        %3264 = vmatprep.subr.mxu0 0.0
        %3265 = vmatpush1.xpose.msra.mxu0 0.0
        %3266 = vmatprep.subr.mxu0 0.0
        %3267 = vmatpush1.xpose.msra.mxu0 0.0
        %3268 = vmatprep.subr.mxu0 0.0
        %3269 = vmatpush1.xpose.msra.mxu0 0.0
        %3270 = vmatprep.subr.mxu0 0.0
        %3271 = vmatpush1.xpose.msra.mxu0 0.0
        %3272 = vmatprep.subr.mxu0 0.0
        %3273 = vmatpush1.xpose.msra.mxu0 0.0
        %3274 = vmatprep.subr.mxu0 0.0
        %3275 = vmatpush1.xpose.msra.mxu0 0.0
        %3276 = vmatprep.subr.mxu0 0.0
        %3277 = vmatpush1.xpose.msra.mxu0 0.0
        %3278 = vmatprep.subr.mxu0 0.0
        %3279 = vmatpush1.xpose.msra.mxu0 0.0
        %3280 = vmatprep.subr.mxu0 0.0
        %3281 = vmatpush1.xpose.msra.mxu0 0.0
        %3282 = vmatprep.subr.mxu0 0.0
        %3283 = vmatpush1.xpose.msra.mxu0 0.0
        %3284 = vmatprep.subr.mxu0 0.0
        %3285 = vmatpush1.xpose.msra.mxu0 0.0
        %3286 = vmatprep.subr.mxu0 0.0
        %3287 = vmatpush1.xpose.msra.mxu0 0.0
        %3288 = vmatprep.subr.mxu0 0.0
        %3289 = vmatpush1.xpose.msra.mxu0 0.0
        %3290 = vmatprep.subr.mxu0 0.0
        %3291 = vmatpush1.xpose.msra.mxu0 0.0
        %3292 = vmatprep.subr.mxu0 0.0
        %3293 = vmatpush1.xpose.msra.mxu0 0.0
        %3294 = vmatprep.subr.mxu0 0.0
        %3295 = vmatpush1.xpose.msra.mxu0 0.0
        %3296 = vmatprep.subr.mxu0 0.0
        %3297 = vmatpush1.xpose.msra.mxu0 0.0
        %3298 = vmatprep.subr.mxu0 0.0
        %3299 = vmatpush1.xpose.msra.mxu0 0.0
        %3300 = vmatprep.mubr.f32.mxu0 %v3235
        %3301 = vmatmul.mubr.f32.gmra.mrb[0].mxu0 %v3234
        %v3302 = vpop.f32.mrb[0].mxu0
        %v3303 = vadd.f32 0.0, %v3302
        %v3304 = vpop.f32.mrb[0].mxu0
        %3305 = vdwg.mxu0
        %v3306 = vsel %vm921, %v3303, 0.0
        %3307 = vadd.xlane.f32.xlu0 %v3306
        %v3308 = vpop.xlane.xlu0 %3307
        %v3309 = vrot.slane %v3308, 4
        %v3310 = vadd.f32 %v3308, %v3309
        %v3311 = vrot.slane %v3310, 2
        %v3312 = vadd.f32 %v3310, %v3311
        %v3313 = vrot.slane %v3312, 1
        %v3314 = vadd.f32 %v3312, %v3313
        %s3315 = vtos %v3314
        %v3316 = vrcp.pop 64.0
        %s3317 = vtos %v3316
        %s3318 = smul.f32 %s3315, %s3317
        %v3319 = vstv %s3318
        %vm3320 = vcmp.gt.f32.partialorder %v3303, %v3319
        %v3321 = vsel %vm3320, 1, 0
        %v3322 = vcvt.s32.f32 %v3321
        %v3323 = vpack.c.bf16 %v3322, %v3322
        %v3325 = vsel %vm921, %v3323, 0
        %v3328 = vsel %vm943, %v2741, 0
        %v3331 = vsel %vm943, %v2742, 0
        %3333 = vmatprep.subr.bf16.mxu0 %v3331
        %3334 = vmatpush1.bf16.msra.mxu0 %v3328
        %3335 = vmatprep.subr.bf16.mxu0 0
        %3336 = vmatpush1.bf16.msra.mxu0 0
        %3337 = vmatprep.subr.bf16.mxu0 0
        %3338 = vmatpush1.bf16.msra.mxu0 0
        %3339 = vmatprep.subr.bf16.mxu0 0
        %3340 = vmatpush1.bf16.msra.mxu0 0
        %3341 = vmatprep.subr.bf16.mxu0 0
        %3342 = vmatpush1.bf16.msra.mxu0 0
        %3343 = vmatprep.subr.bf16.mxu0 0
        %3344 = vmatpush1.bf16.msra.mxu0 0
        %3345 = vmatprep.subr.bf16.mxu0 0
        %3346 = vmatpush1.bf16.msra.mxu0 0
        %3347 = vmatprep.subr.bf16.mxu0 0
        %3348 = vmatpush1.bf16.msra.mxu0 0
        %3349 = vmatprep.subr.bf16.mxu0 0
        %3350 = vmatpush1.bf16.msra.mxu0 0
        %3351 = vmatprep.subr.bf16.mxu0 0
        %3352 = vmatpush1.bf16.msra.mxu0 0
        %3353 = vmatprep.subr.bf16.mxu0 0
        %3354 = vmatpush1.bf16.msra.mxu0 0
        %3355 = vmatprep.subr.bf16.mxu0 0
        %3356 = vmatpush1.bf16.msra.mxu0 0
        %3357 = vmatprep.subr.bf16.mxu0 0
        %3358 = vmatpush1.bf16.msra.mxu0 0
        %3359 = vmatprep.subr.bf16.mxu0 0
        %3360 = vmatpush1.bf16.msra.mxu0 0
        %3361 = vmatprep.subr.bf16.mxu0 0
        %3362 = vmatpush1.bf16.msra.mxu0 0
        %3363 = vmatprep.subr.bf16.mxu0 0
        %3364 = vmatpush1.bf16.msra.mxu0 0
        %3365 = vmatprep.mubr.bf16.mxu0 0
        %3366 = vmatmul.mubr.bf16.gmra.mrb[0].mxu0 %v3325
        %v3367 = vpop.f32.mrb[0].mxu0
        %v3368 = vadd.f32 %v2727, %v3367
        %v3369 = vpop.f32.mrb[0].mxu0
        %v3370 = vadd.f32 %v2729, %v3369
        %v3371 = vpop.f32.mrb[0].mxu0
        %v3372 = vpop.f32.mrb[0].mxu0
        %3373 = vdwg.mxu0
        %v3374 = vpack.c.bf16 %v3368, %v3368
        %v3375 = vpack.c.bf16 %v3370, %v3370
        %s3376 = smul.addr %s2743, 4
        %s3377 = scalar_lea.vmem [#allocation10], %s3376
        %v3378 = vld [vmem:[%s3377] sm:$0xff]
        %v3379 = vld [vmem:[%s3377 + $0x8] sm:$0xff]
        %v3380 = vld [vmem:[%s3377 + $0x10] sm:$0xff]
        %v3381 = vld [vmem:[%s3377 + $0x18] sm:$0xff]
        %v3382 = vld [vmem:[%s3377 + $0x20] sm:$0xff]
        %v3383 = vld [vmem:[%s3377 + $0x28] sm:$0xff]
        %v3384 = vld [vmem:[%s3377 + $0x30] sm:$0xff]
        %v3385 = vld [vmem:[%s3377 + $0x38] sm:$0xff]
        %v3386 = vld [vmem:[%s3377 + $0x40] sm:$0xff]
        %v3387 = vld [vmem:[%s3377 + $0x48] sm:$0xff]
        %v3388 = vld [vmem:[%s3377 + $0x50] sm:$0xff]
        %v3389 = vld [vmem:[%s3377 + $0x58] sm:$0xff]
        %v3390 = vld [vmem:[%s3377 + $0x60] sm:$0xff]
        %v3391 = vld [vmem:[%s3377 + $0x68] sm:$0xff]
        %v3392 = vld [vmem:[%s3377 + $0x70] sm:$0xff]
        %v3393 = vld [vmem:[%s3377 + $0x78] sm:$0xff]
        %v3394 = vld [vmem:[%s3377 + $0x80] sm:$0xff]
        %v3395 = vld [vmem:[%s3377 + $0x88] sm:$0xff]
        %v3396 = vld [vmem:[%s3377 + $0x90] sm:$0xff]
        %v3397 = vld [vmem:[%s3377 + $0x98] sm:$0xff]
        %v3398 = vld [vmem:[%s3377 + $0xa0] sm:$0xff]
        %v3399 = vld [vmem:[%s3377 + $0xa8] sm:$0xff]
        %v3400 = vld [vmem:[%s3377 + $0xb0] sm:$0xff]
        %v3401 = vld [vmem:[%s3377 + $0xb8] sm:$0xff]
        %v3402 = vld [vmem:[%s3377 + $0xc0] sm:$0xff]
        %v3403 = vld [vmem:[%s3377 + $0xc8] sm:$0xff]
        %v3404 = vld [vmem:[%s3377 + $0xd0] sm:$0xff]
        %v3405 = vld [vmem:[%s3377 + $0xd8] sm:$0xff]
        %v3406 = vld [vmem:[%s3377 + $0xe0] sm:$0xff]
        %v3407 = vld [vmem:[%s3377 + $0xe8] sm:$0xff]
        %v3408 = vld [vmem:[%s3377 + $0xf0] sm:$0xff]
        %v3409 = vld [vmem:[%s3377 + $0xf8] sm:$0xff]
        %v3410 = vlaneseq
        %v3411 = vshrl.u32 %v3410, 7
        %v3412 = vsub.s32 2, %v3411
        %v3413 = vrot.slane %v2739, %v3412
        %v3414 = vlaneseq
        %v3415 = vshrl.u32 %v3414, 7
        %v3416 = vsub.s32 2, %v3415
        %v3417 = vrot.slane %v2740, %v3416
        %v3450 = vunpack.c.l.b16 %v3378
        %v3451 = vunpack.c.h.b16 %v3378
        %v3452 = vunpack.c.l.b16 %v3379
        %v3453 = vunpack.c.h.b16 %v3379
        %v3454 = vunpack.c.l.b16 %v3380
        %v3455 = vunpack.c.h.b16 %v3380
        %v3456 = vunpack.c.l.b16 %v3381
        %v3457 = vunpack.c.h.b16 %v3381
        %v3458 = vunpack.c.l.b16 %v3382
        %v3459 = vunpack.c.h.b16 %v3382
        %v3460 = vunpack.c.l.b16 %v3383
        %v3461 = vunpack.c.h.b16 %v3383
        %v3462 = vunpack.c.l.b16 %v3384
        %v3463 = vunpack.c.h.b16 %v3384
        %v3464 = vunpack.c.l.b16 %v3385
        %v3465 = vunpack.c.h.b16 %v3385
        %v3466 = vunpack.c.l.b16 %v3386
        %v3467 = vunpack.c.h.b16 %v3386
        %v3468 = vunpack.c.l.b16 %v3387
        %v3469 = vunpack.c.h.b16 %v3387
        %v3470 = vunpack.c.l.b16 %v3388
        %v3471 = vunpack.c.h.b16 %v3388
        %v3472 = vunpack.c.l.b16 %v3389
        %v3473 = vunpack.c.h.b16 %v3389
        %v3474 = vunpack.c.l.b16 %v3390
        %v3475 = vunpack.c.h.b16 %v3390
        %v3476 = vunpack.c.l.b16 %v3391
        %v3477 = vunpack.c.h.b16 %v3391
        %v3478 = vunpack.c.l.b16 %v3392
        %v3479 = vunpack.c.h.b16 %v3392
        %v3480 = vunpack.c.l.b16 %v3393
        %v3481 = vunpack.c.h.b16 %v3393
        %v3482 = vunpack.c.l.b16 %v3394
        %v3483 = vunpack.c.h.b16 %v3394
        %v3484 = vunpack.c.l.b16 %v3395
        %v3485 = vunpack.c.h.b16 %v3395
        %v3486 = vunpack.c.l.b16 %v3396
        %v3487 = vunpack.c.h.b16 %v3396
        %v3488 = vunpack.c.l.b16 %v3397
        %v3489 = vunpack.c.h.b16 %v3397
        %v3490 = vunpack.c.l.b16 %v3398
        %v3491 = vunpack.c.h.b16 %v3398
        %v3492 = vunpack.c.l.b16 %v3399
        %v3493 = vunpack.c.h.b16 %v3399
        %v3494 = vunpack.c.l.b16 %v3400
        %v3495 = vunpack.c.h.b16 %v3400
        %v3496 = vunpack.c.l.b16 %v3401
        %v3497 = vunpack.c.h.b16 %v3401
        %v3498 = vunpack.c.l.b16 %v3402
        %v3499 = vunpack.c.h.b16 %v3402
        %v3500 = vunpack.c.l.b16 %v3403
        %v3501 = vunpack.c.h.b16 %v3403
        %v3502 = vunpack.c.l.b16 %v3404
        %v3503 = vunpack.c.h.b16 %v3404
        %v3504 = vunpack.c.l.b16 %v3405
        %v3505 = vunpack.c.h.b16 %v3405
        %v3506 = vunpack.c.l.b16 %v3406
        %v3507 = vunpack.c.h.b16 %v3406
        %v3508 = vunpack.c.l.b16 %v3407
        %v3509 = vunpack.c.h.b16 %v3407
        %v3510 = vunpack.c.l.b16 %v3408
        %v3511 = vunpack.c.h.b16 %v3408
        %v3512 = vunpack.c.l.b16 %v3409
        %v3513 = vunpack.c.h.b16 %v3409
        %v3514 = vpack.c.b16 %v3452, %v3450
        %v3515 = vpack.c.b16 %v3453, %v3451
        %v3516 = vpack.c.b16 %v3456, %v3454
        %v3517 = vpack.c.b16 %v3457, %v3455
        %v3518 = vpack.c.b16 %v3460, %v3458
        %v3519 = vpack.c.b16 %v3461, %v3459
        %v3520 = vpack.c.b16 %v3464, %v3462
        %v3521 = vpack.c.b16 %v3465, %v3463
        %v3522 = vpack.c.b16 %v3468, %v3466
        %v3523 = vpack.c.b16 %v3469, %v3467
        %v3524 = vpack.c.b16 %v3472, %v3470
        %v3525 = vpack.c.b16 %v3473, %v3471
        %v3526 = vpack.c.b16 %v3476, %v3474
        %v3527 = vpack.c.b16 %v3477, %v3475
        %v3528 = vpack.c.b16 %v3480, %v3478
        %v3529 = vpack.c.b16 %v3481, %v3479
        %v3530 = vpack.c.b16 %v3484, %v3482
        %v3531 = vpack.c.b16 %v3485, %v3483
        %v3532 = vpack.c.b16 %v3488, %v3486
        %v3533 = vpack.c.b16 %v3489, %v3487
        %v3534 = vpack.c.b16 %v3492, %v3490
        %v3535 = vpack.c.b16 %v3493, %v3491
        %v3536 = vpack.c.b16 %v3496, %v3494
        %v3537 = vpack.c.b16 %v3497, %v3495
        %v3538 = vpack.c.b16 %v3500, %v3498
        %v3539 = vpack.c.b16 %v3501, %v3499
        %v3540 = vpack.c.b16 %v3504, %v3502
        %v3541 = vpack.c.b16 %v3505, %v3503
        %v3542 = vpack.c.b16 %v3508, %v3506
        %v3543 = vpack.c.b16 %v3509, %v3507
        %v3544 = vpack.c.b16 %v3512, %v3510
        %v3545 = vpack.c.b16 %v3513, %v3511
        %3578 = vmatprep.subr.bf16.mxu0 %v3515
        %3579 = vmatpush1.bf16.msra.mxu0 %v3514
        %3580 = vmatprep.subr.bf16.mxu0 %v3517
        %3581 = vmatpush1.bf16.msra.mxu0 %v3516
        %3582 = vmatprep.subr.bf16.mxu0 %v3519
        %3583 = vmatpush1.bf16.msra.mxu0 %v3518
        %3584 = vmatprep.subr.bf16.mxu0 %v3521
        %3585 = vmatpush1.bf16.msra.mxu0 %v3520
        %3586 = vmatprep.subr.bf16.mxu0 %v3523
        %3587 = vmatpush1.bf16.msra.mxu0 %v3522
        %3588 = vmatprep.subr.bf16.mxu0 %v3525
        %3589 = vmatpush1.bf16.msra.mxu0 %v3524
        %3590 = vmatprep.subr.bf16.mxu0 %v3527
        %3591 = vmatpush1.bf16.msra.mxu0 %v3526
        %3592 = vmatprep.subr.bf16.mxu0 %v3529
        %3593 = vmatpush1.bf16.msra.mxu0 %v3528
        %3594 = vmatprep.subr.bf16.mxu0 %v3531
        %3595 = vmatpush1.bf16.msra.mxu0 %v3530
        %3596 = vmatprep.subr.bf16.mxu0 %v3533
        %3597 = vmatpush1.bf16.msra.mxu0 %v3532
        %3598 = vmatprep.subr.bf16.mxu0 %v3535
        %3599 = vmatpush1.bf16.msra.mxu0 %v3534
        %3600 = vmatprep.subr.bf16.mxu0 %v3537
        %3601 = vmatpush1.bf16.msra.mxu0 %v3536
        %3602 = vmatprep.subr.bf16.mxu0 %v3539
        %3603 = vmatpush1.bf16.msra.mxu0 %v3538
        %3604 = vmatprep.subr.bf16.mxu0 %v3541
        %3605 = vmatpush1.bf16.msra.mxu0 %v3540
        %3606 = vmatprep.subr.bf16.mxu0 %v3543
        %3607 = vmatpush1.bf16.msra.mxu0 %v3542
        %3608 = vmatprep.subr.bf16.mxu0 %v3545
        %3609 = vmatpush1.bf16.msra.mxu0 %v3544
        %3610 = vmatprep.mubr.bf16.mxu0 %v3375
        %3611 = vmatmul.mubr.bf16.gmra.mrb[0].mxu0 %v3374
        %v3612 = vpop.f32.mrb[0].mxu0
        %v3613 = vadd.f32 %v3413, %v3612
        %v3614 = vpop.f32.mrb[0].mxu0
        %v3615 = vadd.f32 %v3417, %v3614
        %v3616 = vpop.f32.mrb[0].mxu0
        %v3617 = vpop.f32.mrb[0].mxu0
        %3618 = vdwg.mxu0
        %v3619 = vrot.slane %v3613, 4
        %v3620 = vadd.f32 %v3613, %v3619
        %v3621 = vrot.slane %v3620, 2
        %v3622 = vadd.f32 %v3620, %v3621
        %v3623 = vrot.slane %v3622, 1
        %v3624 = vadd.f32 %v3622, %v3623
        %v3625 = vrot.slane %v3615, 4
        %v3626 = vadd.f32 %v3615, %v3625
        %v3627 = vrot.slane %v3626, 2
        %v3628 = vadd.f32 %v3626, %v3627
        %v3629 = vrot.slane %v3628, 1
        %v3630 = vadd.f32 %v3628, %v3629
        %v3631 = vmul.f32 %v3624, %v1248
        %v3632 = vmul.f32 %v3630, %v1248
        %v3633 = vsub.f32 %v3613, %v3631
        %v3634 = vsub.f32 %v3615, %v3632
        %v3635 = vmul.f32 %v3633, %v3633
        %v3636 = vmul.f32 %v3634, %v3634
        %v3637 = vrot.slane %v3635, 4
        %v3638 = vadd.f32 %v3635, %v3637
        %v3639 = vrot.slane %v3638, 2
        %v3640 = vadd.f32 %v3638, %v3639
        %v3641 = vrot.slane %v3640, 1
        %v3642 = vadd.f32 %v3640, %v3641
        %v3643 = vrot.slane %v3636, 4
        %v3644 = vadd.f32 %v3636, %v3643
        %v3645 = vrot.slane %v3644, 2
        %v3646 = vadd.f32 %v3644, %v3645
        %v3647 = vrot.slane %v3646, 1
        %v3648 = vadd.f32 %v3646, %v3647
        %v3649 = vmul.f32 %v3642, %v1248
        %v3650 = vmul.f32 %v3648, %v1248
        %v3651 = vadd.f32 %v3649, 1e-05
        %v3652 = vadd.f32 %v3650, 1e-05
        %v3653 = vrsqrt.pop %v3651
        %v3654 = vrsqrt.pop %v3652
        %v3655 = vmul.f32 %v3633, %v3653
        %v3656 = vmul.f32 %v3634, %v3654
        %v3657 = vlaneseq
        %v3658 = vshrl.u32 %v3657, 7
        %v3659 = vsub.s32 3, %v3658
        %v3660 = vrot.slane %v2739, %v3659
        %v3661 = vlaneseq
        %v3662 = vshrl.u32 %v3661, 7
        %v3663 = vsub.s32 3, %v3662
        %v3664 = vrot.slane %v2740, %v3663
        %v3665 = vmul.f32 %v3655, %v3660
        %v3666 = vmul.f32 %v3656, %v3664
        %v3667 = vlaneseq
        %v3668 = vshrl.u32 %v3667, 7
        %v3669 = vsub.s32 4, %v3668
        %v3670 = vrot.slane %v2739, %v3669
        %v3671 = vlaneseq
        %v3672 = vshrl.u32 %v3671, 7
        %v3673 = vsub.s32 4, %v3672
        %v3674 = vrot.slane %v2740, %v3673
        %v3675 = vadd.f32 %v3665, %v3670
        %v3676 = vadd.f32 %v3666, %v3674
        %v3677 = vmax.f32 %v3675, 0.0
        %v3678 = vmax.f32 %v3676, 0.0
        %v3679 = vpack.c.bf16 %v3677, %v3677
        %v3680 = vpack.c.bf16 %v3678, %v3678
        %s3681 = smul.addr %s2743, 4
        %s3682 = scalar_lea.vmem [#allocation12], %s3681
        %v3683 = vld [vmem:[%s3682] sm:$0xff]
        %v3684 = vld [vmem:[%s3682 + $0x8] sm:$0xff]
        %v3685 = vld [vmem:[%s3682 + $0x10] sm:$0xff]
        %v3686 = vld [vmem:[%s3682 + $0x18] sm:$0xff]
        %v3687 = vld [vmem:[%s3682 + $0x20] sm:$0xff]
        %v3688 = vld [vmem:[%s3682 + $0x28] sm:$0xff]
        %v3689 = vld [vmem:[%s3682 + $0x30] sm:$0xff]
        %v3690 = vld [vmem:[%s3682 + $0x38] sm:$0xff]
        %v3691 = vld [vmem:[%s3682 + $0x40] sm:$0xff]
        %v3692 = vld [vmem:[%s3682 + $0x48] sm:$0xff]
        %v3693 = vld [vmem:[%s3682 + $0x50] sm:$0xff]
        %v3694 = vld [vmem:[%s3682 + $0x58] sm:$0xff]
        %v3695 = vld [vmem:[%s3682 + $0x60] sm:$0xff]
        %v3696 = vld [vmem:[%s3682 + $0x68] sm:$0xff]
        %v3697 = vld [vmem:[%s3682 + $0x70] sm:$0xff]
        %v3698 = vld [vmem:[%s3682 + $0x78] sm:$0xff]
        %v3699 = vld [vmem:[%s3682 + $0x80] sm:$0xff]
        %v3700 = vld [vmem:[%s3682 + $0x88] sm:$0xff]
        %v3701 = vld [vmem:[%s3682 + $0x90] sm:$0xff]
        %v3702 = vld [vmem:[%s3682 + $0x98] sm:$0xff]
        %v3703 = vld [vmem:[%s3682 + $0xa0] sm:$0xff]
        %v3704 = vld [vmem:[%s3682 + $0xa8] sm:$0xff]
        %v3705 = vld [vmem:[%s3682 + $0xb0] sm:$0xff]
        %v3706 = vld [vmem:[%s3682 + $0xb8] sm:$0xff]
        %v3707 = vld [vmem:[%s3682 + $0xc0] sm:$0xff]
        %v3708 = vld [vmem:[%s3682 + $0xc8] sm:$0xff]
        %v3709 = vld [vmem:[%s3682 + $0xd0] sm:$0xff]
        %v3710 = vld [vmem:[%s3682 + $0xd8] sm:$0xff]
        %v3711 = vld [vmem:[%s3682 + $0xe0] sm:$0xff]
        %v3712 = vld [vmem:[%s3682 + $0xe8] sm:$0xff]
        %v3713 = vld [vmem:[%s3682 + $0xf0] sm:$0xff]
        %v3714 = vld [vmem:[%s3682 + $0xf8] sm:$0xff]
        %v3715 = vlaneseq
        %v3716 = vshrl.u32 %v3715, 7
        %v3717 = vsub.s32 5, %v3716
        %v3718 = vrot.slane %v2739, %v3717
        %v3719 = vlaneseq
        %v3720 = vshrl.u32 %v3719, 7
        %v3721 = vsub.s32 5, %v3720
        %v3722 = vrot.slane %v2740, %v3721
        %v3755 = vunpack.c.l.b16 %v3683
        %v3756 = vunpack.c.h.b16 %v3683
        %v3757 = vunpack.c.l.b16 %v3684
        %v3758 = vunpack.c.h.b16 %v3684
        %v3759 = vunpack.c.l.b16 %v3685
        %v3760 = vunpack.c.h.b16 %v3685
        %v3761 = vunpack.c.l.b16 %v3686
        %v3762 = vunpack.c.h.b16 %v3686
        %v3763 = vunpack.c.l.b16 %v3687
        %v3764 = vunpack.c.h.b16 %v3687
        %v3765 = vunpack.c.l.b16 %v3688
        %v3766 = vunpack.c.h.b16 %v3688
        %v3767 = vunpack.c.l.b16 %v3689
        %v3768 = vunpack.c.h.b16 %v3689
        %v3769 = vunpack.c.l.b16 %v3690
        %v3770 = vunpack.c.h.b16 %v3690
        %v3771 = vunpack.c.l.b16 %v3691
        %v3772 = vunpack.c.h.b16 %v3691
        %v3773 = vunpack.c.l.b16 %v3692
        %v3774 = vunpack.c.h.b16 %v3692
        %v3775 = vunpack.c.l.b16 %v3693
        %v3776 = vunpack.c.h.b16 %v3693
        %v3777 = vunpack.c.l.b16 %v3694
        %v3778 = vunpack.c.h.b16 %v3694
        %v3779 = vunpack.c.l.b16 %v3695
        %v3780 = vunpack.c.h.b16 %v3695
        %v3781 = vunpack.c.l.b16 %v3696
        %v3782 = vunpack.c.h.b16 %v3696
        %v3783 = vunpack.c.l.b16 %v3697
        %v3784 = vunpack.c.h.b16 %v3697
        %v3785 = vunpack.c.l.b16 %v3698
        %v3786 = vunpack.c.h.b16 %v3698
        %v3787 = vunpack.c.l.b16 %v3699
        %v3788 = vunpack.c.h.b16 %v3699
        %v3789 = vunpack.c.l.b16 %v3700
        %v3790 = vunpack.c.h.b16 %v3700
        %v3791 = vunpack.c.l.b16 %v3701
        %v3792 = vunpack.c.h.b16 %v3701
        %v3793 = vunpack.c.l.b16 %v3702
        %v3794 = vunpack.c.h.b16 %v3702
        %v3795 = vunpack.c.l.b16 %v3703
        %v3796 = vunpack.c.h.b16 %v3703
        %v3797 = vunpack.c.l.b16 %v3704
        %v3798 = vunpack.c.h.b16 %v3704
        %v3799 = vunpack.c.l.b16 %v3705
        %v3800 = vunpack.c.h.b16 %v3705
        %v3801 = vunpack.c.l.b16 %v3706
        %v3802 = vunpack.c.h.b16 %v3706
        %v3803 = vunpack.c.l.b16 %v3707
        %v3804 = vunpack.c.h.b16 %v3707
        %v3805 = vunpack.c.l.b16 %v3708
        %v3806 = vunpack.c.h.b16 %v3708
        %v3807 = vunpack.c.l.b16 %v3709
        %v3808 = vunpack.c.h.b16 %v3709
        %v3809 = vunpack.c.l.b16 %v3710
        %v3810 = vunpack.c.h.b16 %v3710
        %v3811 = vunpack.c.l.b16 %v3711
        %v3812 = vunpack.c.h.b16 %v3711
        %v3813 = vunpack.c.l.b16 %v3712
        %v3814 = vunpack.c.h.b16 %v3712
        %v3815 = vunpack.c.l.b16 %v3713
        %v3816 = vunpack.c.h.b16 %v3713
        %v3817 = vunpack.c.l.b16 %v3714
        %v3818 = vunpack.c.h.b16 %v3714
        %v3819 = vpack.c.b16 %v3757, %v3755
        %v3820 = vpack.c.b16 %v3758, %v3756
        %v3821 = vpack.c.b16 %v3761, %v3759
        %v3822 = vpack.c.b16 %v3762, %v3760
        %v3823 = vpack.c.b16 %v3765, %v3763
        %v3824 = vpack.c.b16 %v3766, %v3764
        %v3825 = vpack.c.b16 %v3769, %v3767
        %v3826 = vpack.c.b16 %v3770, %v3768
        %v3827 = vpack.c.b16 %v3773, %v3771
        %v3828 = vpack.c.b16 %v3774, %v3772
        %v3829 = vpack.c.b16 %v3777, %v3775
        %v3830 = vpack.c.b16 %v3778, %v3776
        %v3831 = vpack.c.b16 %v3781, %v3779
        %v3832 = vpack.c.b16 %v3782, %v3780
        %v3833 = vpack.c.b16 %v3785, %v3783
        %v3834 = vpack.c.b16 %v3786, %v3784
        %v3835 = vpack.c.b16 %v3789, %v3787
        %v3836 = vpack.c.b16 %v3790, %v3788
        %v3837 = vpack.c.b16 %v3793, %v3791
        %v3838 = vpack.c.b16 %v3794, %v3792
        %v3839 = vpack.c.b16 %v3797, %v3795
        %v3840 = vpack.c.b16 %v3798, %v3796
        %v3841 = vpack.c.b16 %v3801, %v3799
        %v3842 = vpack.c.b16 %v3802, %v3800
        %v3843 = vpack.c.b16 %v3805, %v3803
        %v3844 = vpack.c.b16 %v3806, %v3804
        %v3845 = vpack.c.b16 %v3809, %v3807
        %v3846 = vpack.c.b16 %v3810, %v3808
        %v3847 = vpack.c.b16 %v3813, %v3811
        %v3848 = vpack.c.b16 %v3814, %v3812
        %v3849 = vpack.c.b16 %v3817, %v3815
        %v3850 = vpack.c.b16 %v3818, %v3816
        %3883 = vmatprep.subr.bf16.mxu0 %v3820
        %3884 = vmatpush1.bf16.msra.mxu0 %v3819
        %3885 = vmatprep.subr.bf16.mxu0 %v3822
        %3886 = vmatpush1.bf16.msra.mxu0 %v3821
        %3887 = vmatprep.subr.bf16.mxu0 %v3824
        %3888 = vmatpush1.bf16.msra.mxu0 %v3823
        %3889 = vmatprep.subr.bf16.mxu0 %v3826
        %3890 = vmatpush1.bf16.msra.mxu0 %v3825
        %3891 = vmatprep.subr.bf16.mxu0 %v3828
        %3892 = vmatpush1.bf16.msra.mxu0 %v3827
        %3893 = vmatprep.subr.bf16.mxu0 %v3830
        %3894 = vmatpush1.bf16.msra.mxu0 %v3829
        %3895 = vmatprep.subr.bf16.mxu0 %v3832
        %3896 = vmatpush1.bf16.msra.mxu0 %v3831
        %3897 = vmatprep.subr.bf16.mxu0 %v3834
        %3898 = vmatpush1.bf16.msra.mxu0 %v3833
        %3899 = vmatprep.subr.bf16.mxu0 %v3836
        %3900 = vmatpush1.bf16.msra.mxu0 %v3835
        %3901 = vmatprep.subr.bf16.mxu0 %v3838
        %3902 = vmatpush1.bf16.msra.mxu0 %v3837
        %3903 = vmatprep.subr.bf16.mxu0 %v3840
        %3904 = vmatpush1.bf16.msra.mxu0 %v3839
        %3905 = vmatprep.subr.bf16.mxu0 %v3842
        %3906 = vmatpush1.bf16.msra.mxu0 %v3841
        %3907 = vmatprep.subr.bf16.mxu0 %v3844
        %3908 = vmatpush1.bf16.msra.mxu0 %v3843
        %3909 = vmatprep.subr.bf16.mxu0 %v3846
        %3910 = vmatpush1.bf16.msra.mxu0 %v3845
        %3911 = vmatprep.subr.bf16.mxu0 %v3848
        %3912 = vmatpush1.bf16.msra.mxu0 %v3847
        %3913 = vmatprep.subr.bf16.mxu0 %v3850
        %3914 = vmatpush1.bf16.msra.mxu0 %v3849
        %3915 = vmatprep.mubr.bf16.mxu0 %v3680
        %3916 = vmatmul.mubr.bf16.gmra.mrb[0].mxu0 %v3679
        %v3917 = vpop.f32.mrb[0].mxu0
        %v3918 = vadd.f32 %v3718, %v3917
        %v3919 = vpop.f32.mrb[0].mxu0
        %v3920 = vadd.f32 %v3722, %v3919
        %v3921 = vpop.f32.mrb[0].mxu0
        %v3922 = vpop.f32.mrb[0].mxu0
        %3923 = vdwg.mxu0
        %v3924 = vadd.f32 %v2733, %v3918
        %v3925 = vadd.f32 %v2734, %v3920
        %v3926 = vmul.f32 %v3924, 0.33333334
        %v3927 = vmul.f32 %v3925, 0.33333334
        %3928 = vst [vmem:[%s345] sm:$0xff] %v3926
        %3929 = vst [vmem:[%s345 + $0x8] sm:$0xff] %v3927
        %s3930 = sand.u32 %s170, 1
        %s3931 = scalar_lea.sflag [#allocation6], %s3930
        %s3932 = sand.u32 %s170, 1
        %s3933 = smul.addr %s3932, 16
        %s3934 = scalar_lea.vmem [#allocation15], %s3933
        // Predicated region
        $region69: #{tpu_custom_call.1} parent=43 // pred_check
          %p3935 = pneg %p180
        $region70: #{tpu_custom_call.1} parent=43 // pred_check_branch
          %3937 = sbr.rel (%p3935) target = $region72
        $region71: #{tpu_custom_call.1} parent=43 // pred_region
          %s3939 = ssub.s32 256, 256
          %3940 = vsyncadd %s3931, %s3939
          %s3941 = smul.addr %s31, 2
          %s3942 = smul.addr %s3941, 128
          %s3943 = scalar_lea.hbm %s7, %s3942
          %s3945 = sshll.u32 %s3934, 4
          %s3946 = int_to_ptr.vmem [resolvable:$true] %s3945
          %3948 = dma.vmem_to_hbm [thread:$0]  %s3946, 256, %s3943, %s3931
        $region72: #{tpu_custom_call.1} parent=43 // pred_fallthru
          _
      $region44: #{tpu_custom_call.1} parent=5 // pred_fallthru
        _
      %p3949 = scmp.le.s32.totalorder 2, %s26
      // Predicated region
      $region73: #{tpu_custom_call.1} parent=5 // pred_check
        %p3950 = pneg %p3949
      $region74: #{tpu_custom_call.1} parent=5 // pred_check_branch
        %3952 = sbr.rel (%p3950) target = $region76
      $region75: #{tpu_custom_call.1} parent=5 // pred_region
        %s3953 = ssub.s32 %s26, 2
        // Predicated region
        $region77: #{tpu_custom_call.1} parent=75 // pred_check
          %p3954 = pneg %p186
        $region78: #{tpu_custom_call.1} parent=75 // pred_check_branch
          %3956 = sbr.rel (%p3954) target = $region80
        $region79: #{tpu_custom_call.1} parent=75 // pred_region
          %s3957 = sand.u32 %s171, 1
          %s3958 = scalar_lea.sflag [#allocation6], %s3957
          %s3959 = sand.u32 %s171, 1
          %s3960 = smul.addr %s3959, 16
          %s3961 = scalar_lea.vmem [#allocation15], %s3960
          %3962 = dma.done %s3958, 256
        $region80: #{tpu_custom_call.1} parent=75 // pred_fallthru
          _
      $region76: #{tpu_custom_call.1} parent=5 // pred_fallthru
        _
    $region6: #{tpu_custom_call.1} parent=1 // loop_footer
      %s30 = sadd.s32 1, %s26
    $region7: #{tpu_custom_call.1} parent=1 // loop_footer_branch
      %25 = sbr.rel target = $region3
    $region8: #{tpu_custom_call.1} parent=1 // loop_exit
      _
    %3963 = vsyncpa [#allocation5], 1
    %s3964 = scalar_lea.sflag [#allocation5], 1
    %3965 = vsyncpa %s3964, 1
    %3966 = vsyncpa [#allocation8], 1
    %3967 = vsyncpa [#allocation11], 1
    %3968 = vsyncpa [#allocation14], 1
    %3969 = vsyncpa [#allocation6], 1
    %s3970 = scalar_lea.sflag [#allocation6], 1
    %3971 = vsyncpa %s3970, 1

</llo_original>
